<compile_context>
chip_gen: v7x
topology: tpu7x:2x2x1
jax: 0.10.0
libtpu: 0.0.40
codegen_flags: <defaults>
</compile_context>

<pallas_src>
import jax
import jax.numpy as jnp
from jax.experimental import pallas as pl
from jax.experimental.pallas import tpu as pltpu

# ---------------------------------------------------------------------------
# Architecture constants (representative TP_module / Generator widths)
# ---------------------------------------------------------------------------
C_IN = 3          # image channels
C_HID = 16        # hidden conv width
C_FEAT = 16       # texture-prediction feature channels
N_CLASSES = 8     # texture-probability classes

# conv layer order: tp_c1, tp_c2, fused tp head (feat+prob), g_c1, g_c2
LAYER_CIN = (C_IN, C_HID, C_HID, C_FEAT + C_IN, C_HID)
LAYER_COUT = (C_HID, C_HID, C_FEAT + N_CLASSES, C_HID, C_IN)
N_LAYERS = len(LAYER_CIN)
W_PAD = 24        # padded [cout, cin] weight-slab edge (>= max cout / max cin)


# ---------------------------------------------------------------------------
# Fused whole-model kernel
# ---------------------------------------------------------------------------
def _fused_forward(interp, up, w_packed, b_packed, *, H, W):
    """interp / up: [N, C_IN, H*W] f32 (flattened NCHW).
    Returns (sr [N, C_IN, H*W] f32, probs [N, N_CLASSES, H*W] f32)."""
    N, c_in, HW = interp.shape
    assert HW == H * W and c_in == C_IN
    c_out = LAYER_COUT[-1]
    c_max = max(LAYER_CIN)                          # widest staged activation (19)
    off = ((W + 1 + 127) // 128) * 128              # lane-aligned halo >= W+1 (=128)
    padded = 2 * off + HW                           # flat scratch lane extent (=512)

    def kernel(interp_ref, up_ref, w_ref, b_ref, sr_ref, probs_ref, pad_ref):
        # Column-border masks (row borders are handled by the zero lane-halo).
        ww = jax.lax.broadcasted_iota(jnp.int32, (1, HW), 1) % W
        mask_l = ww >= 1           # tap column dx=0 is invalid where w == 0
        mask_r = ww <= W - 2       # tap column dx=2 is invalid where w == W-1

        def stage(x, row0=0):
            """Store an activation into the scratch interior (single bf16 cast)."""
            pad_ref[row0:row0 + x.shape[0], off:off + HW] = x.astype(jnp.bfloat16)

        def conv3x3(layer, relu):
            """3x3 conv (padding=1) over scratch rows [0:cin] -> f32 [cout, HW]."""
            cin, cout = LAYER_CIN[layer], LAYER_COUT[layer]
            acc = None
            for dy in range(3):
                for dx in range(3):
                    s = off + (dy - 1) * W + (dx - 1)
                    tap = pad_ref[0:cin, s:s + HW]            # bf16 [cin, HW]
                    if dx == 0:
                        tap = jnp.where(mask_l, tap, jnp.zeros_like(tap))
                    elif dx == 2:
                        tap = jnp.where(mask_r, tap, jnp.zeros_like(tap))
                    wt = w_ref[layer * 9 + dy * 3 + dx, 0:cout, 0:cin]
                    d = jnp.dot(wt, tap, preferred_element_type=jnp.float32)
                    acc = d if acc is None else acc + d
            acc = acc + b_ref[0:cout, layer:layer + 1]        # f32 epilogue
            return jnp.maximum(acc, 0.0) if relu else acc

        # Zero the scratch once per image: the lane halo == Conv2d zero padding.
        # (Rows above the current layer's cin may hold stale data but are never read.)
        pad_ref[...] = jnp.zeros_like(pad_ref)

        # ------------------- TP_module(interpolated_input_img) -------------------
        stage(interp_ref[0])
        stage(conv3x3(0, relu=True))
        stage(conv3x3(1, relu=True))
        head = conv3x3(2, relu=False)          # fused feat (0:16) + prob (16:24) head

        logits = head[C_FEAT:C_FEAT + N_CLASSES, :]
        m = jnp.max(logits, axis=0, keepdims=True)
        e = jnp.exp(logits - m)
        probs_ref[0] = e / jnp.sum(e, axis=0, keepdims=True)   # exact normalization

        # ------------------- Generator(upsampled LR, tp_features) ----------------
        # Generator input staged as rows [0:16]=features, [16:19]=upsampled LR
        # (g_c1 weight columns were permuted to this order in prepare_params),
        # so no in-kernel channel concat is needed.
        stage(head[0:C_FEAT, :])
        stage(up_ref[0], row0=C_FEAT)
        stage(conv3x3(3, relu=True))
        sr_ref[0] = conv3x3(4, relu=False)

    return pl.pallas_call(
        kernel,
        out_shape=(jax.ShapeDtypeStruct((N, c_out, HW), jnp.float32),
                   jax.ShapeDtypeStruct((N, N_CLASSES, HW), jnp.float32)),
        grid=(N,),
        in_specs=[
            pl.BlockSpec((1, c_in, HW), lambda n: (n, 0, 0)),
            pl.BlockSpec((1, c_in, HW), lambda n: (n, 0, 0)),
            pl.BlockSpec(w_packed.shape, lambda n: (0, 0, 0)),   # resident weights
            pl.BlockSpec(b_packed.shape, lambda n: (0, 0)),      # resident biases
        ],
        out_specs=(pl.BlockSpec((1, c_out, HW), lambda n: (n, 0, 0)),
                   pl.BlockSpec((1, N_CLASSES, HW), lambda n: (n, 0, 0))),
        scratch_shapes=[pltpu.VMEM((c_max, padded), jnp.bfloat16)],
        compiler_params=pltpu.CompilerParams(
            dimension_semantics=("parallel",)),    # batch across v7x's two TCs
    )(interp, up, w_packed, b_packed)


# ---------------------------------------------------------------------------
# Parameters
# ---------------------------------------------------------------------------
def init_params(key):
    def conv_init(k, cin, cout):
        kw_, kb = jax.random.split(k)
        scale = 1.0 / jnp.sqrt(9.0 * cin)
        w = jax.random.normal(kw_, (3, 3, cin, cout), jnp.float32) * scale
        b = jax.random.normal(kb, (cout,), jnp.float32) * 0.01
        return w, b

    keys = jax.random.split(key, 6)
    p = {}
    p["tp_c1_w"], p["tp_c1_b"] = conv_init(keys[0], C_IN, C_HID)
    p["tp_c2_w"], p["tp_c2_b"] = conv_init(keys[1], C_HID, C_HID)
    p["tp_feat_w"], p["tp_feat_b"] = conv_init(keys[2], C_HID, C_FEAT)
    p["tp_prob_w"], p["tp_prob_b"] = conv_init(keys[3], C_HID, N_CLASSES)
    p["g_c1_w"], p["g_c1_b"] = conv_init(keys[4], C_IN + C_FEAT, C_HID)
    p["g_c2_w"], p["g_c2_b"] = conv_init(keys[5], C_HID, C_IN)
    return p


def prepare_params(p):
    """One-time prep (outside jit): pack all conv weights into a single
    [N_LAYERS*9, 24, 24] bf16 buffer of per-tap [cout, cin] slabs and all biases
    into a single [24, 8] f32 buffer (column l = layer l's bias)."""
    # Generator conv-1 sees input rows [feat, up] in-kernel; permute its input
    # channels (original order is [up, feat]) so no concat is needed in the kernel.
    g1_w = jnp.concatenate(
        [p["g_c1_w"][:, :, C_IN:, :], p["g_c1_w"][:, :, :C_IN, :]], axis=2)
    layers = [
        (p["tp_c1_w"], p["tp_c1_b"]),
        (p["tp_c2_w"], p["tp_c2_b"]),
        (jnp.concatenate([p["tp_feat_w"], p["tp_prob_w"]], axis=-1),
         jnp.concatenate([p["tp_feat_b"], p["tp_prob_b"]], axis=-1)),
        (g1_w, p["g_c1_b"]),
        (p["g_c2_w"], p["g_c2_b"]),
    ]
    w_packed = jnp.zeros((N_LAYERS * 9, W_PAD, W_PAD), jnp.float32)
    b_packed = jnp.zeros((W_PAD, 8), jnp.float32)
    for l, (w, b) in enumerate(layers):
        kh, kw, cin, cout = w.shape
        assert (kh, kw) == (3, 3) and cin == LAYER_CIN[l] and cout == LAYER_COUT[l]
        taps = jnp.transpose(w, (0, 1, 3, 2)).reshape(9, cout, cin)  # [tap, cout, cin]
        w_packed = w_packed.at[l * 9:(l + 1) * 9, :cout, :cin].set(taps)
        b_packed = b_packed.at[:cout, l].set(b)
    return {"w": w_packed.astype(jnp.bfloat16), "b": b_packed}


# ---------------------------------------------------------------------------
# model_sr forward: (input_img, interpolated_input_img) -> (sr_output, probs)
# ---------------------------------------------------------------------------
@jax.jit
def model_sr_forward(prepared_params, input_img, interpolated_input_img):
    N, C, H, W = interpolated_input_img.shape
    interp = interpolated_input_img.reshape(N, C, H * W)     # free NCHW reshape
    lr = input_img
    # TODO(synk): nearest-x2 upsample of the LR input stays in the wrapper (one XLA
    # broadcast+reshape); an in-kernel lane-interleave repeat has no clean lowering.
    up = jnp.broadcast_to(lr[:, :, :, None, :, None],
                          (N, C, H // 2, 2, W // 2, 2)).reshape(N, C, H * W)
    sr, probs = _fused_forward(interp, up, prepared_params["w"], prepared_params["b"],
                               H=H, W=W)
    return sr.reshape(N, C, H, W), probs.reshape(N, N_CLASSES, H, W)


# ---------------------------------------------------------------------------
# Pure-JAX reference of the same architecture (for validation)
# ---------------------------------------------------------------------------
def _reference_forward(params, input_img, interpolated_input_img):
    def conv(x, w, b):
        y = jax.lax.conv_general_dilated(
            x, w, window_strides=(1, 1), padding="SAME",
            dimension_numbers=("NHWC", "HWIO", "NHWC"))
        return y + b

    x = jnp.transpose(interpolated_input_img, (0, 2, 3, 1))
    h = jax.nn.relu(conv(x, params["tp_c1_w"], params["tp_c1_b"]))
    h = jax.nn.relu(conv(h, params["tp_c2_w"], params["tp_c2_b"]))
    feat = conv(h, params["tp_feat_w"], params["tp_feat_b"])
    probs = jax.nn.softmax(conv(h, params["tp_prob_w"], params["tp_prob_b"]), axis=-1)
    lr = jnp.transpose(input_img, (0, 2, 3, 1))
    up = jnp.repeat(jnp.repeat(lr, 2, axis=1), 2, axis=2)
    g = jax.nn.relu(conv(jnp.concatenate([up, feat], axis=-1),
                         params["g_c1_w"], params["g_c1_b"]))
    sr = conv(g, params["g_c2_w"], params["g_c2_b"])
    return (jnp.transpose(sr, (0, 3, 1, 2)), jnp.transpose(probs, (0, 3, 1, 2)))


if __name__ == "__main__":
    key = jax.random.PRNGKey(0)
    k_params, k_img = jax.random.split(key)

    N, C, LR, HR = 2, 3, 8, 16
    params = init_params(k_params)
    prepared = prepare_params(params)

    input_img = jax.random.normal(k_img, (N, C, LR, LR), jnp.float32)           # [2,3,8,8]
    # bicubic in the original pipeline — nearest-x2 stand-in for the example input
    interpolated_input_img = jnp.repeat(jnp.repeat(input_img, 2, axis=2), 2, axis=3)  # [2,3,16,16]

    sr_output, probs = model_sr_forward(prepared, input_img, interpolated_input_img)
    jax.block_until_ready((sr_output, probs))

    assert sr_output.shape == (N, C, HR, HR)
    assert probs.shape == (N, N_CLASSES, HR, HR)

    # validate against the pure-JAX/XLA reference (bf16 matmul operands -> loose tol)
    ref_sr, ref_probs = _reference_forward(params, input_img, interpolated_input_img)
    assert float(jnp.max(jnp.abs(sr_output - ref_sr))) < 0.1
    assert float(jnp.max(jnp.abs(probs - ref_probs))) < 0.05
    assert float(jnp.max(jnp.abs(jnp.sum(probs, axis=1) - 1.0))) < 1e-3

    print("KERNEL_OK")
</pallas_src>

<mosaic_0001>
module attributes {stable_mosaic.version = 11 : i64} {
  func.func @kernel(%arg0: i32, %arg1: memref<1x3x256xf32, #tpu.memory_space<vmem>>, %arg2: memref<1x3x256xf32, #tpu.memory_space<vmem>>, %arg3: memref<45x24x24xbf16, #tpu.memory_space<vmem>>, %arg4: memref<24x8xf32, #tpu.memory_space<vmem>>, %arg5: memref<1x3x256xf32, #tpu.memory_space<vmem>>, %arg6: memref<1x8x256xf32, #tpu.memory_space<vmem>>, %arg7: memref<19x512xbf16, #tpu.memory_space<vmem>>) attributes {dimension_semantics = [#tpu.dimension_semantics<parallel>], iteration_bounds = array<i64: 2>, scalar_prefetch = 0 : i64, scratch_operands = 1 : i64, tpu.core_type = #tpu.core_type<tc>, window_params = [{transform_indices = @transform_0, window_bounds = array<i64: 1, 3, 256>}, {transform_indices = @transform_1, window_bounds = array<i64: 1, 3, 256>}, {pipeline_mode = #tpu.pipeline_mode<synchronous>, transform_indices = @transform_2, window_bounds = array<i64: 45, 24, 24>}, {pipeline_mode = #tpu.pipeline_mode<synchronous>, transform_indices = @transform_3, window_bounds = array<i64: 24, 8>}, {transform_indices = @transform_4, window_bounds = array<i64: 1, 3, 256>}, {transform_indices = @transform_5, window_bounds = array<i64: 1, 8, 256>}]} {
    %0 = tpu.iota {dimensions = array<i32: 1>} : vector<1x256xi32>
    %c16_i32 = arith.constant 16 : i32
    %c0_i32 = arith.constant 0 : i32
    %1 = arith.cmpi eq, %c16_i32, %c0_i32 : i32
    %c1_i32 = arith.constant 1 : i32
    %2 = arith.select %1, %c1_i32, %c16_i32 : i32
    %3 = vector.broadcast %2 : i32 to vector<1x256xi32>
    %4 = arith.remsi %0, %3 : vector<1x256xi32>
    %c0_i32_0 = arith.constant 0 : i32
    %5 = vector.broadcast %c0_i32_0 : i32 to vector<1x256xi32>
    %6 = arith.cmpi ne, %4, %5 : vector<1x256xi32>
    %c0_i32_1 = arith.constant 0 : i32
    %7 = vector.broadcast %c0_i32_1 : i32 to vector<1x256xi32>
    %8 = arith.cmpi slt, %4, %7 : vector<1x256xi32>
    %c0_i32_2 = arith.constant 0 : i32
    %9 = arith.cmpi slt, %2, %c0_i32_2 : i32
    %10 = vector.broadcast %9 : i1 to vector<1x256xi1>
    %11 = vector.broadcast %10 : vector<1x256xi1> to vector<1x256xi1>
    %12 = arith.xori %8, %11 : vector<1x256xi1>
    %13 = arith.andi %12, %6 : vector<1x256xi1>
    %14 = vector.broadcast %2 : i32 to vector<1x256xi32>
    %15 = arith.addi %4, %14 : vector<1x256xi32>
    %16 = arith.select %13, %15, %4 : vector<1x256xi1>, vector<1x256xi32>
    %c1_i32_3 = arith.constant 1 : i32
    %17 = vector.broadcast %c1_i32_3 : i32 to vector<1x256xi32>
    %18 = arith.cmpi sge, %16, %17 : vector<1x256xi32>
    %c14_i32 = arith.constant 14 : i32
    %19 = vector.broadcast %c14_i32 : i32 to vector<1x256xi32>
    %20 = arith.cmpi sle, %16, %19 : vector<1x256xi32>
    %cst = arith.constant 0.000000e+00 : bf16
    %21 = vector.broadcast %cst : bf16 to vector<19x512xbf16>
    %c0 = arith.constant 0 : index
    %c0_4 = arith.constant 0 : index
    %22 = vector.load %arg7[%c0, %c0_4] : memref<19x512xbf16, #tpu.memory_space<vmem>>, vector<19x512xbf16>
    tpu.vector_store %arg7[%c0, %c0_4], %21 {strides = array<i32>} : memref<19x512xbf16, #tpu.memory_space<vmem>>, vector<19x512xbf16>,
    %c0_5 = arith.constant 0 : index
    %c0_6 = arith.constant 0 : index
    %c0_7 = arith.constant 0 : index
    %23 = vector.load %arg1[%c0_5, %c0_6, %c0_7] : memref<1x3x256xf32, #tpu.memory_space<vmem>>, vector<1x3x256xf32>
    %24 = vector.shape_cast %23 : vector<1x3x256xf32> to vector<3x256xf32>
    %25 = arith.truncf %24 : vector<3x256xf32> to vector<3x256xbf16>
    %c0_8 = arith.constant 0 : index
    %c128 = arith.constant 128 : index
    %26 = vector.load %arg7[%c0_8, %c128] : memref<19x512xbf16, #tpu.memory_space<vmem>>, vector<3x256xbf16>
    tpu.vector_store %arg7[%c0_8, %c128], %25 {strides = array<i32>} : memref<19x512xbf16, #tpu.memory_space<vmem>>, vector<3x256xbf16>,
    %c0_9 = arith.constant 0 : index
    %c111 = arith.constant 111 : index
    %27 = vector.load %arg7[%c0_9, %c111] : memref<19x512xbf16, #tpu.memory_space<vmem>>, vector<3x256xbf16>
    %cst_10 = arith.constant 0.000000e+00 : bf16
    %28 = vector.broadcast %cst_10 : bf16 to vector<3x256xbf16>
    %29 = vector.shape_cast %18 : vector<1x256xi1> to vector<1x256xi1>
    %30 = vector.broadcast %29 : vector<1x256xi1> to vector<3x256xi1>
    %31 = arith.select %30, %27, %28 : vector<3x256xi1>, vector<3x256xbf16>
    %c0_11 = arith.constant 0 : index
    %c0_12 = arith.constant 0 : index
    %c0_13 = arith.constant 0 : index
    %32 = vector.load %arg3[%c0_11, %c0_12, %c0_13] : memref<45x24x24xbf16, #tpu.memory_space<vmem>>, vector<1x16x3xbf16>
    %33 = vector.shape_cast %32 : vector<1x16x3xbf16> to vector<16x3xbf16>
    %cst_14 = arith.constant dense<0.000000e+00> : vector<16x256xf32>
    %34 = tpu.matmul %33, %31, %cst_14 {dimension_numbers = #tpu.dot_dimension_numbers<[1], [0], [0], [1], [0, 0, 1, 1], [], []>} : vector<16x3xbf16>, vector<3x256xbf16>, vector<16x256xf32> -> vector<16x256xf32>
    %c0_15 = arith.constant 0 : index
    %c112 = arith.constant 112 : index
    %35 = vector.load %arg7[%c0_15, %c112] : memref<19x512xbf16, #tpu.memory_space<vmem>>, vector<3x256xbf16>
    %c1 = arith.constant 1 : index
    %c0_16 = arith.constant 0 : index
    %c0_17 = arith.constant 0 : index
    %36 = vector.load %arg3[%c1, %c0_16, %c0_17] : memref<45x24x24xbf16, #tpu.memory_space<vmem>>, vector<1x16x3xbf16>
    %37 = vector.shape_cast %36 : vector<1x16x3xbf16> to vector<16x3xbf16>
    %cst_18 = arith.constant dense<0.000000e+00> : vector<16x256xf32>
    %38 = tpu.matmul %37, %35, %cst_18 {dimension_numbers = #tpu.dot_dimension_numbers<[1], [0], [0], [1], [0, 0, 1, 1], [], []>} : vector<16x3xbf16>, vector<3x256xbf16>, vector<16x256xf32> -> vector<16x256xf32>
    %39 = arith.addf %34, %38 : vector<16x256xf32>
    %c0_19 = arith.constant 0 : index
    %c113 = arith.constant 113 : index
    %40 = vector.load %arg7[%c0_19, %c113] : memref<19x512xbf16, #tpu.memory_space<vmem>>, vector<3x256xbf16>
    %cst_20 = arith.constant 0.000000e+00 : bf16
    %41 = vector.broadcast %cst_20 : bf16 to vector<3x256xbf16>
    %42 = vector.shape_cast %20 : vector<1x256xi1> to vector<1x256xi1>
    %43 = vector.broadcast %42 : vector<1x256xi1> to vector<3x256xi1>
    %44 = arith.select %43, %40, %41 : vector<3x256xi1>, vector<3x256xbf16>
    %c2 = arith.constant 2 : index
    %c0_21 = arith.constant 0 : index
    %c0_22 = arith.constant 0 : index
    %45 = vector.load %arg3[%c2, %c0_21, %c0_22] : memref<45x24x24xbf16, #tpu.memory_space<vmem>>, vector<1x16x3xbf16>
    %46 = vector.shape_cast %45 : vector<1x16x3xbf16> to vector<16x3xbf16>
    %cst_23 = arith.constant dense<0.000000e+00> : vector<16x256xf32>
    %47 = tpu.matmul %46, %44, %cst_23 {dimension_numbers = #tpu.dot_dimension_numbers<[1], [0], [0], [1], [0, 0, 1, 1], [], []>} : vector<16x3xbf16>, vector<3x256xbf16>, vector<16x256xf32> -> vector<16x256xf32>
    %48 = arith.addf %39, %47 : vector<16x256xf32>
    %c0_24 = arith.constant 0 : index
    %c127 = arith.constant 127 : index
    %49 = vector.load %arg7[%c0_24, %c127] : memref<19x512xbf16, #tpu.memory_space<vmem>>, vector<3x256xbf16>
    %cst_25 = arith.constant 0.000000e+00 : bf16
    %50 = vector.broadcast %cst_25 : bf16 to vector<3x256xbf16>
    %51 = vector.shape_cast %18 : vector<1x256xi1> to vector<1x256xi1>
    %52 = vector.broadcast %51 : vector<1x256xi1> to vector<3x256xi1>
    %53 = arith.select %52, %49, %50 : vector<3x256xi1>, vector<3x256xbf16>
    %c3 = arith.constant 3 : index
    %c0_26 = arith.constant 0 : index
    %c0_27 = arith.constant 0 : index
    %54 = vector.load %arg3[%c3, %c0_26, %c0_27] : memref<45x24x24xbf16, #tpu.memory_space<vmem>>, vector<1x16x3xbf16>
    %55 = vector.shape_cast %54 : vector<1x16x3xbf16> to vector<16x3xbf16>
    %cst_28 = arith.constant dense<0.000000e+00> : vector<16x256xf32>
    %56 = tpu.matmul %55, %53, %cst_28 {dimension_numbers = #tpu.dot_dimension_numbers<[1], [0], [0], [1], [0, 0, 1, 1], [], []>} : vector<16x3xbf16>, vector<3x256xbf16>, vector<16x256xf32> -> vector<16x256xf32>
    %57 = arith.addf %48, %56 : vector<16x256xf32>
    %c0_29 = arith.constant 0 : index
    %c128_30 = arith.constant 128 : index
    %58 = vector.load %arg7[%c0_29, %c128_30] : memref<19x512xbf16, #tpu.memory_space<vmem>>, vector<3x256xbf16>
    %c4 = arith.constant 4 : index
    %c0_31 = arith.constant 0 : index
    %c0_32 = arith.constant 0 : index
    %59 = vector.load %arg3[%c4, %c0_31, %c0_32] : memref<45x24x24xbf16, #tpu.memory_space<vmem>>, vector<1x16x3xbf16>
    %60 = vector.shape_cast %59 : vector<1x16x3xbf16> to vector<16x3xbf16>
    %cst_33 = arith.constant dense<0.000000e+00> : vector<16x256xf32>
    %61 = tpu.matmul %60, %58, %cst_33 {dimension_numbers = #tpu.dot_dimension_numbers<[1], [0], [0], [1], [0, 0, 1, 1], [], []>} : vector<16x3xbf16>, vector<3x256xbf16>, vector<16x256xf32> -> vector<16x256xf32>
    %62 = arith.addf %57, %61 : vector<16x256xf32>
    %c0_34 = arith.constant 0 : index
    %c129 = arith.constant 129 : index
    %63 = vector.load %arg7[%c0_34, %c129] : memref<19x512xbf16, #tpu.memory_space<vmem>>, vector<3x256xbf16>
    %cst_35 = arith.constant 0.000000e+00 : bf16
    %64 = vector.broadcast %cst_35 : bf16 to vector<3x256xbf16>
    %65 = vector.shape_cast %20 : vector<1x256xi1> to vector<1x256xi1>
    %66 = vector.broadcast %65 : vector<1x256xi1> to vector<3x256xi1>
    %67 = arith.select %66, %63, %64 : vector<3x256xi1>, vector<3x256xbf16>
    %c5 = arith.constant 5 : index
    %c0_36 = arith.constant 0 : index
    %c0_37 = arith.constant 0 : index
    %68 = vector.load %arg3[%c5, %c0_36, %c0_37] : memref<45x24x24xbf16, #tpu.memory_space<vmem>>, vector<1x16x3xbf16>
    %69 = vector.shape_cast %68 : vector<1x16x3xbf16> to vector<16x3xbf16>
    %cst_38 = arith.constant dense<0.000000e+00> : vector<16x256xf32>
    %70 = tpu.matmul %69, %67, %cst_38 {dimension_numbers = #tpu.dot_dimension_numbers<[1], [0], [0], [1], [0, 0, 1, 1], [], []>} : vector<16x3xbf16>, vector<3x256xbf16>, vector<16x256xf32> -> vector<16x256xf32>
    %71 = arith.addf %62, %70 : vector<16x256xf32>
    %c0_39 = arith.constant 0 : index
    %c143 = arith.constant 143 : index
    %72 = vector.load %arg7[%c0_39, %c143] : memref<19x512xbf16, #tpu.memory_space<vmem>>, vector<3x256xbf16>
    %cst_40 = arith.constant 0.000000e+00 : bf16
    %73 = vector.broadcast %cst_40 : bf16 to vector<3x256xbf16>
    %74 = vector.shape_cast %18 : vector<1x256xi1> to vector<1x256xi1>
    %75 = vector.broadcast %74 : vector<1x256xi1> to vector<3x256xi1>
    %76 = arith.select %75, %72, %73 : vector<3x256xi1>, vector<3x256xbf16>
    %c6 = arith.constant 6 : index
    %c0_41 = arith.constant 0 : index
    %c0_42 = arith.constant 0 : index
    %77 = vector.load %arg3[%c6, %c0_41, %c0_42] : memref<45x24x24xbf16, #tpu.memory_space<vmem>>, vector<1x16x3xbf16>
    %78 = vector.shape_cast %77 : vector<1x16x3xbf16> to vector<16x3xbf16>
    %cst_43 = arith.constant dense<0.000000e+00> : vector<16x256xf32>
    %79 = tpu.matmul %78, %76, %cst_43 {dimension_numbers = #tpu.dot_dimension_numbers<[1], [0], [0], [1], [0, 0, 1, 1], [], []>} : vector<16x3xbf16>, vector<3x256xbf16>, vector<16x256xf32> -> vector<16x256xf32>
    %80 = arith.addf %71, %79 : vector<16x256xf32>
    %c0_44 = arith.constant 0 : index
    %c144 = arith.constant 144 : index
    %81 = vector.load %arg7[%c0_44, %c144] : memref<19x512xbf16, #tpu.memory_space<vmem>>, vector<3x256xbf16>
    %c7 = arith.constant 7 : index
    %c0_45 = arith.constant 0 : index
    %c0_46 = arith.constant 0 : index
    %82 = vector.load %arg3[%c7, %c0_45, %c0_46] : memref<45x24x24xbf16, #tpu.memory_space<vmem>>, vector<1x16x3xbf16>
    %83 = vector.shape_cast %82 : vector<1x16x3xbf16> to vector<16x3xbf16>
    %cst_47 = arith.constant dense<0.000000e+00> : vector<16x256xf32>
    %84 = tpu.matmul %83, %81, %cst_47 {dimension_numbers = #tpu.dot_dimension_numbers<[1], [0], [0], [1], [0, 0, 1, 1], [], []>} : vector<16x3xbf16>, vector<3x256xbf16>, vector<16x256xf32> -> vector<16x256xf32>
    %85 = arith.addf %80, %84 : vector<16x256xf32>
    %c0_48 = arith.constant 0 : index
    %c145 = arith.constant 145 : index
    %86 = vector.load %arg7[%c0_48, %c145] : memref<19x512xbf16, #tpu.memory_space<vmem>>, vector<3x256xbf16>
    %cst_49 = arith.constant 0.000000e+00 : bf16
    %87 = vector.broadcast %cst_49 : bf16 to vector<3x256xbf16>
    %88 = vector.shape_cast %20 : vector<1x256xi1> to vector<1x256xi1>
    %89 = vector.broadcast %88 : vector<1x256xi1> to vector<3x256xi1>
    %90 = arith.select %89, %86, %87 : vector<3x256xi1>, vector<3x256xbf16>
    %c8 = arith.constant 8 : index
    %c0_50 = arith.constant 0 : index
    %c0_51 = arith.constant 0 : index
    %91 = vector.load %arg3[%c8, %c0_50, %c0_51] : memref<45x24x24xbf16, #tpu.memory_space<vmem>>, vector<1x16x3xbf16>
    %92 = vector.shape_cast %91 : vector<1x16x3xbf16> to vector<16x3xbf16>
    %cst_52 = arith.constant dense<0.000000e+00> : vector<16x256xf32>
    %93 = tpu.matmul %92, %90, %cst_52 {dimension_numbers = #tpu.dot_dimension_numbers<[1], [0], [0], [1], [0, 0, 1, 1], [], []>} : vector<16x3xbf16>, vector<3x256xbf16>, vector<16x256xf32> -> vector<16x256xf32>
    %94 = arith.addf %85, %93 : vector<16x256xf32>
    %c0_53 = arith.constant 0 : index
    %c0_54 = arith.constant 0 : index
    %95 = vector.load %arg4[%c0_53, %c0_54] : memref<24x8xf32, #tpu.memory_space<vmem>>, vector<16x1xf32>
    %96 = vector.broadcast %95 : vector<16x1xf32> to vector<16x256xf32>
    %97 = arith.addf %94, %96 : vector<16x256xf32>
    %cst_55 = arith.constant 0.000000e+00 : f32
    %98 = vector.broadcast %cst_55 : f32 to vector<16x256xf32>
    %99 = arith.maximumf %97, %98 : vector<16x256xf32>
    %100 = arith.truncf %99 : vector<16x256xf32> to vector<16x256xbf16>
    %c0_56 = arith.constant 0 : index
    %c128_57 = arith.constant 128 : index
    %101 = vector.load %arg7[%c0_56, %c128_57] : memref<19x512xbf16, #tpu.memory_space<vmem>>, vector<16x256xbf16>
    tpu.vector_store %arg7[%c0_56, %c128_57], %100 {strides = array<i32>} : memref<19x512xbf16, #tpu.memory_space<vmem>>, vector<16x256xbf16>,
    %c0_58 = arith.constant 0 : index
    %c111_59 = arith.constant 111 : index
    %102 = vector.load %arg7[%c0_58, %c111_59] : memref<19x512xbf16, #tpu.memory_space<vmem>>, vector<16x256xbf16>
    %cst_60 = arith.constant 0.000000e+00 : bf16
    %103 = vector.broadcast %cst_60 : bf16 to vector<16x256xbf16>
    %104 = vector.shape_cast %18 : vector<1x256xi1> to vector<1x256xi1>
    %105 = vector.broadcast %104 : vector<1x256xi1> to vector<16x256xi1>
    %106 = arith.select %105, %102, %103 : vector<16x256xi1>, vector<16x256xbf16>
    %c9 = arith.constant 9 : index
    %c0_61 = arith.constant 0 : index
    %c0_62 = arith.constant 0 : index
    %107 = vector.load %arg3[%c9, %c0_61, %c0_62] : memref<45x24x24xbf16, #tpu.memory_space<vmem>>, vector<1x16x16xbf16>
    %108 = vector.shape_cast %107 : vector<1x16x16xbf16> to vector<16x16xbf16>
    %cst_63 = arith.constant dense<0.000000e+00> : vector<16x256xf32>
    %109 = tpu.matmul %108, %106, %cst_63 {dimension_numbers = #tpu.dot_dimension_numbers<[1], [0], [0], [1], [0, 0, 1, 1], [], []>} : vector<16x16xbf16>, vector<16x256xbf16>, vector<16x256xf32> -> vector<16x256xf32>
    %c0_64 = arith.constant 0 : index
    %c112_65 = arith.constant 112 : index
    %110 = vector.load %arg7[%c0_64, %c112_65] : memref<19x512xbf16, #tpu.memory_space<vmem>>, vector<16x256xbf16>
    %c10 = arith.constant 10 : index
    %c0_66 = arith.constant 0 : index
    %c0_67 = arith.constant 0 : index
    %111 = vector.load %arg3[%c10, %c0_66, %c0_67] : memref<45x24x24xbf16, #tpu.memory_space<vmem>>, vector<1x16x16xbf16>
    %112 = vector.shape_cast %111 : vector<1x16x16xbf16> to vector<16x16xbf16>
    %cst_68 = arith.constant dense<0.000000e+00> : vector<16x256xf32>
    %113 = tpu.matmul %112, %110, %cst_68 {dimension_numbers = #tpu.dot_dimension_numbers<[1], [0], [0], [1], [0, 0, 1, 1], [], []>} : vector<16x16xbf16>, vector<16x256xbf16>, vector<16x256xf32> -> vector<16x256xf32>
    %114 = arith.addf %109, %113 : vector<16x256xf32>
    %c0_69 = arith.constant 0 : index
    %c113_70 = arith.constant 113 : index
    %115 = vector.load %arg7[%c0_69, %c113_70] : memref<19x512xbf16, #tpu.memory_space<vmem>>, vector<16x256xbf16>
    %cst_71 = arith.constant 0.000000e+00 : bf16
    %116 = vector.broadcast %cst_71 : bf16 to vector<16x256xbf16>
    %117 = vector.shape_cast %20 : vector<1x256xi1> to vector<1x256xi1>
    %118 = vector.broadcast %117 : vector<1x256xi1> to vector<16x256xi1>
    %119 = arith.select %118, %115, %116 : vector<16x256xi1>, vector<16x256xbf16>
    %c11 = arith.constant 11 : index
    %c0_72 = arith.constant 0 : index
    %c0_73 = arith.constant 0 : index
    %120 = vector.load %arg3[%c11, %c0_72, %c0_73] : memref<45x24x24xbf16, #tpu.memory_space<vmem>>, vector<1x16x16xbf16>
    %121 = vector.shape_cast %120 : vector<1x16x16xbf16> to vector<16x16xbf16>
    %cst_74 = arith.constant dense<0.000000e+00> : vector<16x256xf32>
    %122 = tpu.matmul %121, %119, %cst_74 {dimension_numbers = #tpu.dot_dimension_numbers<[1], [0], [0], [1], [0, 0, 1, 1], [], []>} : vector<16x16xbf16>, vector<16x256xbf16>, vector<16x256xf32> -> vector<16x256xf32>
    %123 = arith.addf %114, %122 : vector<16x256xf32>
    %c0_75 = arith.constant 0 : index
    %c127_76 = arith.constant 127 : index
    %124 = vector.load %arg7[%c0_75, %c127_76] : memref<19x512xbf16, #tpu.memory_space<vmem>>, vector<16x256xbf16>
    %cst_77 = arith.constant 0.000000e+00 : bf16
    %125 = vector.broadcast %cst_77 : bf16 to vector<16x256xbf16>
    %126 = vector.shape_cast %18 : vector<1x256xi1> to vector<1x256xi1>
    %127 = vector.broadcast %126 : vector<1x256xi1> to vector<16x256xi1>
    %128 = arith.select %127, %124, %125 : vector<16x256xi1>, vector<16x256xbf16>
    %c12 = arith.constant 12 : index
    %c0_78 = arith.constant 0 : index
    %c0_79 = arith.constant 0 : index
    %129 = vector.load %arg3[%c12, %c0_78, %c0_79] : memref<45x24x24xbf16, #tpu.memory_space<vmem>>, vector<1x16x16xbf16>
    %130 = vector.shape_cast %129 : vector<1x16x16xbf16> to vector<16x16xbf16>
    %cst_80 = arith.constant dense<0.000000e+00> : vector<16x256xf32>
    %131 = tpu.matmul %130, %128, %cst_80 {dimension_numbers = #tpu.dot_dimension_numbers<[1], [0], [0], [1], [0, 0, 1, 1], [], []>} : vector<16x16xbf16>, vector<16x256xbf16>, vector<16x256xf32> -> vector<16x256xf32>
    %132 = arith.addf %123, %131 : vector<16x256xf32>
    %c0_81 = arith.constant 0 : index
    %c128_82 = arith.constant 128 : index
    %133 = vector.load %arg7[%c0_81, %c128_82] : memref<19x512xbf16, #tpu.memory_space<vmem>>, vector<16x256xbf16>
    %c13 = arith.constant 13 : index
    %c0_83 = arith.constant 0 : index
    %c0_84 = arith.constant 0 : index
    %134 = vector.load %arg3[%c13, %c0_83, %c0_84] : memref<45x24x24xbf16, #tpu.memory_space<vmem>>, vector<1x16x16xbf16>
    %135 = vector.shape_cast %134 : vector<1x16x16xbf16> to vector<16x16xbf16>
    %cst_85 = arith.constant dense<0.000000e+00> : vector<16x256xf32>
    %136 = tpu.matmul %135, %133, %cst_85 {dimension_numbers = #tpu.dot_dimension_numbers<[1], [0], [0], [1], [0, 0, 1, 1], [], []>} : vector<16x16xbf16>, vector<16x256xbf16>, vector<16x256xf32> -> vector<16x256xf32>
    %137 = arith.addf %132, %136 : vector<16x256xf32>
    %c0_86 = arith.constant 0 : index
    %c129_87 = arith.constant 129 : index
    %138 = vector.load %arg7[%c0_86, %c129_87] : memref<19x512xbf16, #tpu.memory_space<vmem>>, vector<16x256xbf16>
    %cst_88 = arith.constant 0.000000e+00 : bf16
    %139 = vector.broadcast %cst_88 : bf16 to vector<16x256xbf16>
    %140 = vector.shape_cast %20 : vector<1x256xi1> to vector<1x256xi1>
    %141 = vector.broadcast %140 : vector<1x256xi1> to vector<16x256xi1>
    %142 = arith.select %141, %138, %139 : vector<16x256xi1>, vector<16x256xbf16>
    %c14 = arith.constant 14 : index
    %c0_89 = arith.constant 0 : index
    %c0_90 = arith.constant 0 : index
    %143 = vector.load %arg3[%c14, %c0_89, %c0_90] : memref<45x24x24xbf16, #tpu.memory_space<vmem>>, vector<1x16x16xbf16>
    %144 = vector.shape_cast %143 : vector<1x16x16xbf16> to vector<16x16xbf16>
    %cst_91 = arith.constant dense<0.000000e+00> : vector<16x256xf32>
    %145 = tpu.matmul %144, %142, %cst_91 {dimension_numbers = #tpu.dot_dimension_numbers<[1], [0], [0], [1], [0, 0, 1, 1], [], []>} : vector<16x16xbf16>, vector<16x256xbf16>, vector<16x256xf32> -> vector<16x256xf32>
    %146 = arith.addf %137, %145 : vector<16x256xf32>
    %c0_92 = arith.constant 0 : index
    %c143_93 = arith.constant 143 : index
    %147 = vector.load %arg7[%c0_92, %c143_93] : memref<19x512xbf16, #tpu.memory_space<vmem>>, vector<16x256xbf16>
    %cst_94 = arith.constant 0.000000e+00 : bf16
    %148 = vector.broadcast %cst_94 : bf16 to vector<16x256xbf16>
    %149 = vector.shape_cast %18 : vector<1x256xi1> to vector<1x256xi1>
    %150 = vector.broadcast %149 : vector<1x256xi1> to vector<16x256xi1>
    %151 = arith.select %150, %147, %148 : vector<16x256xi1>, vector<16x256xbf16>
    %c15 = arith.constant 15 : index
    %c0_95 = arith.constant 0 : index
    %c0_96 = arith.constant 0 : index
    %152 = vector.load %arg3[%c15, %c0_95, %c0_96] : memref<45x24x24xbf16, #tpu.memory_space<vmem>>, vector<1x16x16xbf16>
    %153 = vector.shape_cast %152 : vector<1x16x16xbf16> to vector<16x16xbf16>
    %cst_97 = arith.constant dense<0.000000e+00> : vector<16x256xf32>
    %154 = tpu.matmul %153, %151, %cst_97 {dimension_numbers = #tpu.dot_dimension_numbers<[1], [0], [0], [1], [0, 0, 1, 1], [], []>} : vector<16x16xbf16>, vector<16x256xbf16>, vector<16x256xf32> -> vector<16x256xf32>
    %155 = arith.addf %146, %154 : vector<16x256xf32>
    %c0_98 = arith.constant 0 : index
    %c144_99 = arith.constant 144 : index
    %156 = vector.load %arg7[%c0_98, %c144_99] : memref<19x512xbf16, #tpu.memory_space<vmem>>, vector<16x256xbf16>
    %c16 = arith.constant 16 : index
    %c0_100 = arith.constant 0 : index
    %c0_101 = arith.constant 0 : index
    %157 = vector.load %arg3[%c16, %c0_100, %c0_101] : memref<45x24x24xbf16, #tpu.memory_space<vmem>>, vector<1x16x16xbf16>
    %158 = vector.shape_cast %157 : vector<1x16x16xbf16> to vector<16x16xbf16>
    %cst_102 = arith.constant dense<0.000000e+00> : vector<16x256xf32>
    %159 = tpu.matmul %158, %156, %cst_102 {dimension_numbers = #tpu.dot_dimension_numbers<[1], [0], [0], [1], [0, 0, 1, 1], [], []>} : vector<16x16xbf16>, vector<16x256xbf16>, vector<16x256xf32> -> vector<16x256xf32>
    %160 = arith.addf %155, %159 : vector<16x256xf32>
    %c0_103 = arith.constant 0 : index
    %c145_104 = arith.constant 145 : index
    %161 = vector.load %arg7[%c0_103, %c145_104] : memref<19x512xbf16, #tpu.memory_space<vmem>>, vector<16x256xbf16>
    %cst_105 = arith.constant 0.000000e+00 : bf16
    %162 = vector.broadcast %cst_105 : bf16 to vector<16x256xbf16>
    %163 = vector.shape_cast %20 : vector<1x256xi1> to vector<1x256xi1>
    %164 = vector.broadcast %163 : vector<1x256xi1> to vector<16x256xi1>
    %165 = arith.select %164, %161, %162 : vector<16x256xi1>, vector<16x256xbf16>
    %c17 = arith.constant 17 : index
    %c0_106 = arith.constant 0 : index
    %c0_107 = arith.constant 0 : index
    %166 = vector.load %arg3[%c17, %c0_106, %c0_107] : memref<45x24x24xbf16, #tpu.memory_space<vmem>>, vector<1x16x16xbf16>
    %167 = vector.shape_cast %166 : vector<1x16x16xbf16> to vector<16x16xbf16>
    %cst_108 = arith.constant dense<0.000000e+00> : vector<16x256xf32>
    %168 = tpu.matmul %167, %165, %cst_108 {dimension_numbers = #tpu.dot_dimension_numbers<[1], [0], [0], [1], [0, 0, 1, 1], [], []>} : vector<16x16xbf16>, vector<16x256xbf16>, vector<16x256xf32> -> vector<16x256xf32>
    %169 = arith.addf %160, %168 : vector<16x256xf32>
    %c0_109 = arith.constant 0 : index
    %c1_110 = arith.constant 1 : index
    %170 = vector.load %arg4[%c0_109, %c1_110] : memref<24x8xf32, #tpu.memory_space<vmem>>, vector<16x1xf32>
    %171 = vector.broadcast %170 : vector<16x1xf32> to vector<16x256xf32>
    %172 = arith.addf %169, %171 : vector<16x256xf32>
    %cst_111 = arith.constant 0.000000e+00 : f32
    %173 = vector.broadcast %cst_111 : f32 to vector<16x256xf32>
    %174 = arith.maximumf %172, %173 : vector<16x256xf32>
    %175 = arith.truncf %174 : vector<16x256xf32> to vector<16x256xbf16>
    %c0_112 = arith.constant 0 : index
    %c128_113 = arith.constant 128 : index
    %176 = vector.load %arg7[%c0_112, %c128_113] : memref<19x512xbf16, #tpu.memory_space<vmem>>, vector<16x256xbf16>
    tpu.vector_store %arg7[%c0_112, %c128_113], %175 {strides = array<i32>} : memref<19x512xbf16, #tpu.memory_space<vmem>>, vector<16x256xbf16>,
    %c0_114 = arith.constant 0 : index
    %c111_115 = arith.constant 111 : index
    %177 = vector.load %arg7[%c0_114, %c111_115] : memref<19x512xbf16, #tpu.memory_space<vmem>>, vector<16x256xbf16>
    %cst_116 = arith.constant 0.000000e+00 : bf16
    %178 = vector.broadcast %cst_116 : bf16 to vector<16x256xbf16>
    %179 = vector.shape_cast %18 : vector<1x256xi1> to vector<1x256xi1>
    %180 = vector.broadcast %179 : vector<1x256xi1> to vector<16x256xi1>
    %181 = arith.select %180, %177, %178 : vector<16x256xi1>, vector<16x256xbf16>
    %c18 = arith.constant 18 : index
    %c0_117 = arith.constant 0 : index
    %c0_118 = arith.constant 0 : index
    %182 = vector.load %arg3[%c18, %c0_117, %c0_118] : memref<45x24x24xbf16, #tpu.memory_space<vmem>>, vector<1x24x16xbf16>
    %183 = vector.shape_cast %182 : vector<1x24x16xbf16> to vector<24x16xbf16>
    %cst_119 = arith.constant dense<0.000000e+00> : vector<24x256xf32>
    %184 = tpu.matmul %183, %181, %cst_119 {dimension_numbers = #tpu.dot_dimension_numbers<[1], [0], [0], [1], [0, 0, 1, 1], [], []>} : vector<24x16xbf16>, vector<16x256xbf16>, vector<24x256xf32> -> vector<24x256xf32>
    %c0_120 = arith.constant 0 : index
    %c112_121 = arith.constant 112 : index
    %185 = vector.load %arg7[%c0_120, %c112_121] : memref<19x512xbf16, #tpu.memory_space<vmem>>, vector<16x256xbf16>
    %c19 = arith.constant 19 : index
    %c0_122 = arith.constant 0 : index
    %c0_123 = arith.constant 0 : index
    %186 = vector.load %arg3[%c19, %c0_122, %c0_123] : memref<45x24x24xbf16, #tpu.memory_space<vmem>>, vector<1x24x16xbf16>
    %187 = vector.shape_cast %186 : vector<1x24x16xbf16> to vector<24x16xbf16>
    %cst_124 = arith.constant dense<0.000000e+00> : vector<24x256xf32>
    %188 = tpu.matmul %187, %185, %cst_124 {dimension_numbers = #tpu.dot_dimension_numbers<[1], [0], [0], [1], [0, 0, 1, 1], [], []>} : vector<24x16xbf16>, vector<16x256xbf16>, vector<24x256xf32> -> vector<24x256xf32>
    %189 = arith.addf %184, %188 : vector<24x256xf32>
    %c0_125 = arith.constant 0 : index
    %c113_126 = arith.constant 113 : index
    %190 = vector.load %arg7[%c0_125, %c113_126] : memref<19x512xbf16, #tpu.memory_space<vmem>>, vector<16x256xbf16>
    %cst_127 = arith.constant 0.000000e+00 : bf16
    %191 = vector.broadcast %cst_127 : bf16 to vector<16x256xbf16>
    %192 = vector.shape_cast %20 : vector<1x256xi1> to vector<1x256xi1>
    %193 = vector.broadcast %192 : vector<1x256xi1> to vector<16x256xi1>
    %194 = arith.select %193, %190, %191 : vector<16x256xi1>, vector<16x256xbf16>
    %c20 = arith.constant 20 : index
    %c0_128 = arith.constant 0 : index
    %c0_129 = arith.constant 0 : index
    %195 = vector.load %arg3[%c20, %c0_128, %c0_129] : memref<45x24x24xbf16, #tpu.memory_space<vmem>>, vector<1x24x16xbf16>
    %196 = vector.shape_cast %195 : vector<1x24x16xbf16> to vector<24x16xbf16>
    %cst_130 = arith.constant dense<0.000000e+00> : vector<24x256xf32>
    %197 = tpu.matmul %196, %194, %cst_130 {dimension_numbers = #tpu.dot_dimension_numbers<[1], [0], [0], [1], [0, 0, 1, 1], [], []>} : vector<24x16xbf16>, vector<16x256xbf16>, vector<24x256xf32> -> vector<24x256xf32>
    %198 = arith.addf %189, %197 : vector<24x256xf32>
    %c0_131 = arith.constant 0 : index
    %c127_132 = arith.constant 127 : index
    %199 = vector.load %arg7[%c0_131, %c127_132] : memref<19x512xbf16, #tpu.memory_space<vmem>>, vector<16x256xbf16>
    %cst_133 = arith.constant 0.000000e+00 : bf16
    %200 = vector.broadcast %cst_133 : bf16 to vector<16x256xbf16>
    %201 = vector.shape_cast %18 : vector<1x256xi1> to vector<1x256xi1>
    %202 = vector.broadcast %201 : vector<1x256xi1> to vector<16x256xi1>
    %203 = arith.select %202, %199, %200 : vector<16x256xi1>, vector<16x256xbf16>
    %c21 = arith.constant 21 : index
    %c0_134 = arith.constant 0 : index
    %c0_135 = arith.constant 0 : index
    %204 = vector.load %arg3[%c21, %c0_134, %c0_135] : memref<45x24x24xbf16, #tpu.memory_space<vmem>>, vector<1x24x16xbf16>
    %205 = vector.shape_cast %204 : vector<1x24x16xbf16> to vector<24x16xbf16>
    %cst_136 = arith.constant dense<0.000000e+00> : vector<24x256xf32>
    %206 = tpu.matmul %205, %203, %cst_136 {dimension_numbers = #tpu.dot_dimension_numbers<[1], [0], [0], [1], [0, 0, 1, 1], [], []>} : vector<24x16xbf16>, vector<16x256xbf16>, vector<24x256xf32> -> vector<24x256xf32>
    %207 = arith.addf %198, %206 : vector<24x256xf32>
    %c0_137 = arith.constant 0 : index
    %c128_138 = arith.constant 128 : index
    %208 = vector.load %arg7[%c0_137, %c128_138] : memref<19x512xbf16, #tpu.memory_space<vmem>>, vector<16x256xbf16>
    %c22 = arith.constant 22 : index
    %c0_139 = arith.constant 0 : index
    %c0_140 = arith.constant 0 : index
    %209 = vector.load %arg3[%c22, %c0_139, %c0_140] : memref<45x24x24xbf16, #tpu.memory_space<vmem>>, vector<1x24x16xbf16>
    %210 = vector.shape_cast %209 : vector<1x24x16xbf16> to vector<24x16xbf16>
    %cst_141 = arith.constant dense<0.000000e+00> : vector<24x256xf32>
    %211 = tpu.matmul %210, %208, %cst_141 {dimension_numbers = #tpu.dot_dimension_numbers<[1], [0], [0], [1], [0, 0, 1, 1], [], []>} : vector<24x16xbf16>, vector<16x256xbf16>, vector<24x256xf32> -> vector<24x256xf32>
    %212 = arith.addf %207, %211 : vector<24x256xf32>
    %c0_142 = arith.constant 0 : index
    %c129_143 = arith.constant 129 : index
    %213 = vector.load %arg7[%c0_142, %c129_143] : memref<19x512xbf16, #tpu.memory_space<vmem>>, vector<16x256xbf16>
    %cst_144 = arith.constant 0.000000e+00 : bf16
    %214 = vector.broadcast %cst_144 : bf16 to vector<16x256xbf16>
    %215 = vector.shape_cast %20 : vector<1x256xi1> to vector<1x256xi1>
    %216 = vector.broadcast %215 : vector<1x256xi1> to vector<16x256xi1>
    %217 = arith.select %216, %213, %214 : vector<16x256xi1>, vector<16x256xbf16>
    %c23 = arith.constant 23 : index
    %c0_145 = arith.constant 0 : index
    %c0_146 = arith.constant 0 : index
    %218 = vector.load %arg3[%c23, %c0_145, %c0_146] : memref<45x24x24xbf16, #tpu.memory_space<vmem>>, vector<1x24x16xbf16>
    %219 = vector.shape_cast %218 : vector<1x24x16xbf16> to vector<24x16xbf16>
    %cst_147 = arith.constant dense<0.000000e+00> : vector<24x256xf32>
    %220 = tpu.matmul %219, %217, %cst_147 {dimension_numbers = #tpu.dot_dimension_numbers<[1], [0], [0], [1], [0, 0, 1, 1], [], []>} : vector<24x16xbf16>, vector<16x256xbf16>, vector<24x256xf32> -> vector<24x256xf32>
    %221 = arith.addf %212, %220 : vector<24x256xf32>
    %c0_148 = arith.constant 0 : index
    %c143_149 = arith.constant 143 : index
    %222 = vector.load %arg7[%c0_148, %c143_149] : memref<19x512xbf16, #tpu.memory_space<vmem>>, vector<16x256xbf16>
    %cst_150 = arith.constant 0.000000e+00 : bf16
    %223 = vector.broadcast %cst_150 : bf16 to vector<16x256xbf16>
    %224 = vector.shape_cast %18 : vector<1x256xi1> to vector<1x256xi1>
    %225 = vector.broadcast %224 : vector<1x256xi1> to vector<16x256xi1>
    %226 = arith.select %225, %222, %223 : vector<16x256xi1>, vector<16x256xbf16>
    %c24 = arith.constant 24 : index
    %c0_151 = arith.constant 0 : index
    %c0_152 = arith.constant 0 : index
    %227 = vector.load %arg3[%c24, %c0_151, %c0_152] : memref<45x24x24xbf16, #tpu.memory_space<vmem>>, vector<1x24x16xbf16>
    %228 = vector.shape_cast %227 : vector<1x24x16xbf16> to vector<24x16xbf16>
    %cst_153 = arith.constant dense<0.000000e+00> : vector<24x256xf32>
    %229 = tpu.matmul %228, %226, %cst_153 {dimension_numbers = #tpu.dot_dimension_numbers<[1], [0], [0], [1], [0, 0, 1, 1], [], []>} : vector<24x16xbf16>, vector<16x256xbf16>, vector<24x256xf32> -> vector<24x256xf32>
    %230 = arith.addf %221, %229 : vector<24x256xf32>
    %c0_154 = arith.constant 0 : index
    %c144_155 = arith.constant 144 : index
    %231 = vector.load %arg7[%c0_154, %c144_155] : memref<19x512xbf16, #tpu.memory_space<vmem>>, vector<16x256xbf16>
    %c25 = arith.constant 25 : index
    %c0_156 = arith.constant 0 : index
    %c0_157 = arith.constant 0 : index
    %232 = vector.load %arg3[%c25, %c0_156, %c0_157] : memref<45x24x24xbf16, #tpu.memory_space<vmem>>, vector<1x24x16xbf16>
    %233 = vector.shape_cast %232 : vector<1x24x16xbf16> to vector<24x16xbf16>
    %cst_158 = arith.constant dense<0.000000e+00> : vector<24x256xf32>
    %234 = tpu.matmul %233, %231, %cst_158 {dimension_numbers = #tpu.dot_dimension_numbers<[1], [0], [0], [1], [0, 0, 1, 1], [], []>} : vector<24x16xbf16>, vector<16x256xbf16>, vector<24x256xf32> -> vector<24x256xf32>
    %235 = arith.addf %230, %234 : vector<24x256xf32>
    %c0_159 = arith.constant 0 : index
    %c145_160 = arith.constant 145 : index
    %236 = vector.load %arg7[%c0_159, %c145_160] : memref<19x512xbf16, #tpu.memory_space<vmem>>, vector<16x256xbf16>
    %cst_161 = arith.constant 0.000000e+00 : bf16
    %237 = vector.broadcast %cst_161 : bf16 to vector<16x256xbf16>
    %238 = vector.shape_cast %20 : vector<1x256xi1> to vector<1x256xi1>
    %239 = vector.broadcast %238 : vector<1x256xi1> to vector<16x256xi1>
    %240 = arith.select %239, %236, %237 : vector<16x256xi1>, vector<16x256xbf16>
    %c26 = arith.constant 26 : index
    %c0_162 = arith.constant 0 : index
    %c0_163 = arith.constant 0 : index
    %241 = vector.load %arg3[%c26, %c0_162, %c0_163] : memref<45x24x24xbf16, #tpu.memory_space<vmem>>, vector<1x24x16xbf16>
    %242 = vector.shape_cast %241 : vector<1x24x16xbf16> to vector<24x16xbf16>
    %cst_164 = arith.constant dense<0.000000e+00> : vector<24x256xf32>
    %243 = tpu.matmul %242, %240, %cst_164 {dimension_numbers = #tpu.dot_dimension_numbers<[1], [0], [0], [1], [0, 0, 1, 1], [], []>} : vector<24x16xbf16>, vector<16x256xbf16>, vector<24x256xf32> -> vector<24x256xf32>
    %244 = arith.addf %235, %243 : vector<24x256xf32>
    %c0_165 = arith.constant 0 : index
    %c2_166 = arith.constant 2 : index
    %245 = vector.load %arg4[%c0_165, %c2_166] : memref<24x8xf32, #tpu.memory_space<vmem>>, vector<24x1xf32>
    %246 = vector.broadcast %245 : vector<24x1xf32> to vector<24x256xf32>
    %247 = arith.addf %244, %246 : vector<24x256xf32>
    %248 = vector.extract_strided_slice %247 {offsets = [16, 0], sizes = [8, 256], strides = [1, 1]} : vector<24x256xf32> to vector<8x256xf32>
    %cst_167 = arith.constant dense<0xFF800000> : vector<256xf32>
    %249 = vector.multi_reduction <maximumf>, %248, %cst_167 [0] : vector<8x256xf32> to vector<256xf32>
    %250 = vector.shape_cast %249 : vector<256xf32> to vector<1x256xf32>
    %251 = vector.broadcast %250 : vector<1x256xf32> to vector<8x256xf32>
    %252 = arith.subf %248, %251 : vector<8x256xf32>
    %253 = math.exp %252 : vector<8x256xf32>
    %cst_168 = arith.constant dense<0.000000e+00> : vector<256xf32>
    %254 = vector.multi_reduction <add>, %253, %cst_168 [0] : vector<8x256xf32> to vector<256xf32>
    %255 = vector.shape_cast %254 : vector<256xf32> to vector<1x256xf32>
    %256 = vector.broadcast %255 : vector<1x256xf32> to vector<8x256xf32>
    %257 = arith.divf %253, %256 : vector<8x256xf32>
    %c0_169 = arith.constant 0 : index
    %c0_170 = arith.constant 0 : index
    %c0_171 = arith.constant 0 : index
    %258 = vector.load %arg6[%c0_169, %c0_170, %c0_171] : memref<1x8x256xf32, #tpu.memory_space<vmem>>, vector<1x8x256xf32>
    %259 = vector.shape_cast %258 : vector<1x8x256xf32> to vector<8x256xf32>
    %260 = vector.shape_cast %257 : vector<8x256xf32> to vector<1x8x256xf32>
    tpu.vector_store %arg6[%c0_169, %c0_170, %c0_171], %260 {strides = array<i32>} : memref<1x8x256xf32, #tpu.memory_space<vmem>>, vector<1x8x256xf32>,
    %261 = vector.extract_strided_slice %247 {offsets = [0, 0], sizes = [16, 256], strides = [1, 1]} : vector<24x256xf32> to vector<16x256xf32>
    %262 = arith.truncf %261 : vector<16x256xf32> to vector<16x256xbf16>
    %c0_172 = arith.constant 0 : index
    %c128_173 = arith.constant 128 : index
    %263 = vector.load %arg7[%c0_172, %c128_173] : memref<19x512xbf16, #tpu.memory_space<vmem>>, vector<16x256xbf16>
    tpu.vector_store %arg7[%c0_172, %c128_173], %262 {strides = array<i32>} : memref<19x512xbf16, #tpu.memory_space<vmem>>, vector<16x256xbf16>,
    %c0_174 = arith.constant 0 : index
    %c0_175 = arith.constant 0 : index
    %c0_176 = arith.constant 0 : index
    %264 = vector.load %arg2[%c0_174, %c0_175, %c0_176] : memref<1x3x256xf32, #tpu.memory_space<vmem>>, vector<1x3x256xf32>
    %265 = vector.shape_cast %264 : vector<1x3x256xf32> to vector<3x256xf32>
    %266 = arith.truncf %265 : vector<3x256xf32> to vector<3x256xbf16>
    %c16_177 = arith.constant 16 : index
    %c128_178 = arith.constant 128 : index
    %267 = vector.load %arg7[%c16_177, %c128_178] : memref<19x512xbf16, #tpu.memory_space<vmem>>, vector<3x256xbf16>
    tpu.vector_store %arg7[%c16_177, %c128_178], %266 {strides = array<i32>} : memref<19x512xbf16, #tpu.memory_space<vmem>>, vector<3x256xbf16>,
    %c0_179 = arith.constant 0 : index
    %c111_180 = arith.constant 111 : index
    %268 = vector.load %arg7[%c0_179, %c111_180] : memref<19x512xbf16, #tpu.memory_space<vmem>>, vector<19x256xbf16>
    %cst_181 = arith.constant 0.000000e+00 : bf16
    %269 = vector.broadcast %cst_181 : bf16 to vector<19x256xbf16>
    %270 = vector.shape_cast %18 : vector<1x256xi1> to vector<1x256xi1>
    %271 = vector.broadcast %270 : vector<1x256xi1> to vector<19x256xi1>
    %272 = arith.select %271, %268, %269 : vector<19x256xi1>, vector<19x256xbf16>
    %c27 = arith.constant 27 : index
    %c0_182 = arith.constant 0 : index
    %c0_183 = arith.constant 0 : index
    %273 = vector.load %arg3[%c27, %c0_182, %c0_183] : memref<45x24x24xbf16, #tpu.memory_space<vmem>>, vector<1x16x19xbf16>
    %274 = vector.shape_cast %273 : vector<1x16x19xbf16> to vector<16x19xbf16>
    %cst_184 = arith.constant dense<0.000000e+00> : vector<16x256xf32>
    %275 = tpu.matmul %274, %272, %cst_184 {dimension_numbers = #tpu.dot_dimension_numbers<[1], [0], [0], [1], [0, 0, 1, 1], [], []>} : vector<16x19xbf16>, vector<19x256xbf16>, vector<16x256xf32> -> vector<16x256xf32>
    %c0_185 = arith.constant 0 : index
    %c112_186 = arith.constant 112 : index
    %276 = vector.load %arg7[%c0_185, %c112_186] : memref<19x512xbf16, #tpu.memory_space<vmem>>, vector<19x256xbf16>
    %c28 = arith.constant 28 : index
    %c0_187 = arith.constant 0 : index
    %c0_188 = arith.constant 0 : index
    %277 = vector.load %arg3[%c28, %c0_187, %c0_188] : memref<45x24x24xbf16, #tpu.memory_space<vmem>>, vector<1x16x19xbf16>
    %278 = vector.shape_cast %277 : vector<1x16x19xbf16> to vector<16x19xbf16>
    %cst_189 = arith.constant dense<0.000000e+00> : vector<16x256xf32>
    %279 = tpu.matmul %278, %276, %cst_189 {dimension_numbers = #tpu.dot_dimension_numbers<[1], [0], [0], [1], [0, 0, 1, 1], [], []>} : vector<16x19xbf16>, vector<19x256xbf16>, vector<16x256xf32> -> vector<16x256xf32>
    %280 = arith.addf %275, %279 : vector<16x256xf32>
    %c0_190 = arith.constant 0 : index
    %c113_191 = arith.constant 113 : index
    %281 = vector.load %arg7[%c0_190, %c113_191] : memref<19x512xbf16, #tpu.memory_space<vmem>>, vector<19x256xbf16>
    %cst_192 = arith.constant 0.000000e+00 : bf16
    %282 = vector.broadcast %cst_192 : bf16 to vector<19x256xbf16>
    %283 = vector.shape_cast %20 : vector<1x256xi1> to vector<1x256xi1>
    %284 = vector.broadcast %283 : vector<1x256xi1> to vector<19x256xi1>
    %285 = arith.select %284, %281, %282 : vector<19x256xi1>, vector<19x256xbf16>
    %c29 = arith.constant 29 : index
    %c0_193 = arith.constant 0 : index
    %c0_194 = arith.constant 0 : index
    %286 = vector.load %arg3[%c29, %c0_193, %c0_194] : memref<45x24x24xbf16, #tpu.memory_space<vmem>>, vector<1x16x19xbf16>
    %287 = vector.shape_cast %286 : vector<1x16x19xbf16> to vector<16x19xbf16>
    %cst_195 = arith.constant dense<0.000000e+00> : vector<16x256xf32>
    %288 = tpu.matmul %287, %285, %cst_195 {dimension_numbers = #tpu.dot_dimension_numbers<[1], [0], [0], [1], [0, 0, 1, 1], [], []>} : vector<16x19xbf16>, vector<19x256xbf16>, vector<16x256xf32> -> vector<16x256xf32>
    %289 = arith.addf %280, %288 : vector<16x256xf32>
    %c0_196 = arith.constant 0 : index
    %c127_197 = arith.constant 127 : index
    %290 = vector.load %arg7[%c0_196, %c127_197] : memref<19x512xbf16, #tpu.memory_space<vmem>>, vector<19x256xbf16>
    %cst_198 = arith.constant 0.000000e+00 : bf16
    %291 = vector.broadcast %cst_198 : bf16 to vector<19x256xbf16>
    %292 = vector.shape_cast %18 : vector<1x256xi1> to vector<1x256xi1>
    %293 = vector.broadcast %292 : vector<1x256xi1> to vector<19x256xi1>
    %294 = arith.select %293, %290, %291 : vector<19x256xi1>, vector<19x256xbf16>
    %c30 = arith.constant 30 : index
    %c0_199 = arith.constant 0 : index
    %c0_200 = arith.constant 0 : index
    %295 = vector.load %arg3[%c30, %c0_199, %c0_200] : memref<45x24x24xbf16, #tpu.memory_space<vmem>>, vector<1x16x19xbf16>
    %296 = vector.shape_cast %295 : vector<1x16x19xbf16> to vector<16x19xbf16>
    %cst_201 = arith.constant dense<0.000000e+00> : vector<16x256xf32>
    %297 = tpu.matmul %296, %294, %cst_201 {dimension_numbers = #tpu.dot_dimension_numbers<[1], [0], [0], [1], [0, 0, 1, 1], [], []>} : vector<16x19xbf16>, vector<19x256xbf16>, vector<16x256xf32> -> vector<16x256xf32>
    %298 = arith.addf %289, %297 : vector<16x256xf32>
    %c0_202 = arith.constant 0 : index
    %c128_203 = arith.constant 128 : index
    %299 = vector.load %arg7[%c0_202, %c128_203] : memref<19x512xbf16, #tpu.memory_space<vmem>>, vector<19x256xbf16>
    %c31 = arith.constant 31 : index
    %c0_204 = arith.constant 0 : index
    %c0_205 = arith.constant 0 : index
    %300 = vector.load %arg3[%c31, %c0_204, %c0_205] : memref<45x24x24xbf16, #tpu.memory_space<vmem>>, vector<1x16x19xbf16>
    %301 = vector.shape_cast %300 : vector<1x16x19xbf16> to vector<16x19xbf16>
    %cst_206 = arith.constant dense<0.000000e+00> : vector<16x256xf32>
    %302 = tpu.matmul %301, %299, %cst_206 {dimension_numbers = #tpu.dot_dimension_numbers<[1], [0], [0], [1], [0, 0, 1, 1], [], []>} : vector<16x19xbf16>, vector<19x256xbf16>, vector<16x256xf32> -> vector<16x256xf32>
    %303 = arith.addf %298, %302 : vector<16x256xf32>
    %c0_207 = arith.constant 0 : index
    %c129_208 = arith.constant 129 : index
    %304 = vector.load %arg7[%c0_207, %c129_208] : memref<19x512xbf16, #tpu.memory_space<vmem>>, vector<19x256xbf16>
    %cst_209 = arith.constant 0.000000e+00 : bf16
    %305 = vector.broadcast %cst_209 : bf16 to vector<19x256xbf16>
    %306 = vector.shape_cast %20 : vector<1x256xi1> to vector<1x256xi1>
    %307 = vector.broadcast %306 : vector<1x256xi1> to vector<19x256xi1>
    %308 = arith.select %307, %304, %305 : vector<19x256xi1>, vector<19x256xbf16>
    %c32 = arith.constant 32 : index
    %c0_210 = arith.constant 0 : index
    %c0_211 = arith.constant 0 : index
    %309 = vector.load %arg3[%c32, %c0_210, %c0_211] : memref<45x24x24xbf16, #tpu.memory_space<vmem>>, vector<1x16x19xbf16>
    %310 = vector.shape_cast %309 : vector<1x16x19xbf16> to vector<16x19xbf16>
    %cst_212 = arith.constant dense<0.000000e+00> : vector<16x256xf32>
    %311 = tpu.matmul %310, %308, %cst_212 {dimension_numbers = #tpu.dot_dimension_numbers<[1], [0], [0], [1], [0, 0, 1, 1], [], []>} : vector<16x19xbf16>, vector<19x256xbf16>, vector<16x256xf32> -> vector<16x256xf32>
    %312 = arith.addf %303, %311 : vector<16x256xf32>
    %c0_213 = arith.constant 0 : index
    %c143_214 = arith.constant 143 : index
    %313 = vector.load %arg7[%c0_213, %c143_214] : memref<19x512xbf16, #tpu.memory_space<vmem>>, vector<19x256xbf16>
    %cst_215 = arith.constant 0.000000e+00 : bf16
    %314 = vector.broadcast %cst_215 : bf16 to vector<19x256xbf16>
    %315 = vector.shape_cast %18 : vector<1x256xi1> to vector<1x256xi1>
    %316 = vector.broadcast %315 : vector<1x256xi1> to vector<19x256xi1>
    %317 = arith.select %316, %313, %314 : vector<19x256xi1>, vector<19x256xbf16>
    %c33 = arith.constant 33 : index
    %c0_216 = arith.constant 0 : index
    %c0_217 = arith.constant 0 : index
    %318 = vector.load %arg3[%c33, %c0_216, %c0_217] : memref<45x24x24xbf16, #tpu.memory_space<vmem>>, vector<1x16x19xbf16>
    %319 = vector.shape_cast %318 : vector<1x16x19xbf16> to vector<16x19xbf16>
    %cst_218 = arith.constant dense<0.000000e+00> : vector<16x256xf32>
    %320 = tpu.matmul %319, %317, %cst_218 {dimension_numbers = #tpu.dot_dimension_numbers<[1], [0], [0], [1], [0, 0, 1, 1], [], []>} : vector<16x19xbf16>, vector<19x256xbf16>, vector<16x256xf32> -> vector<16x256xf32>
    %321 = arith.addf %312, %320 : vector<16x256xf32>
    %c0_219 = arith.constant 0 : index
    %c144_220 = arith.constant 144 : index
    %322 = vector.load %arg7[%c0_219, %c144_220] : memref<19x512xbf16, #tpu.memory_space<vmem>>, vector<19x256xbf16>
    %c34 = arith.constant 34 : index
    %c0_221 = arith.constant 0 : index
    %c0_222 = arith.constant 0 : index
    %323 = vector.load %arg3[%c34, %c0_221, %c0_222] : memref<45x24x24xbf16, #tpu.memory_space<vmem>>, vector<1x16x19xbf16>
    %324 = vector.shape_cast %323 : vector<1x16x19xbf16> to vector<16x19xbf16>
    %cst_223 = arith.constant dense<0.000000e+00> : vector<16x256xf32>
    %325 = tpu.matmul %324, %322, %cst_223 {dimension_numbers = #tpu.dot_dimension_numbers<[1], [0], [0], [1], [0, 0, 1, 1], [], []>} : vector<16x19xbf16>, vector<19x256xbf16>, vector<16x256xf32> -> vector<16x256xf32>
    %326 = arith.addf %321, %325 : vector<16x256xf32>
    %c0_224 = arith.constant 0 : index
    %c145_225 = arith.constant 145 : index
    %327 = vector.load %arg7[%c0_224, %c145_225] : memref<19x512xbf16, #tpu.memory_space<vmem>>, vector<19x256xbf16>
    %cst_226 = arith.constant 0.000000e+00 : bf16
    %328 = vector.broadcast %cst_226 : bf16 to vector<19x256xbf16>
    %329 = vector.shape_cast %20 : vector<1x256xi1> to vector<1x256xi1>
    %330 = vector.broadcast %329 : vector<1x256xi1> to vector<19x256xi1>
    %331 = arith.select %330, %327, %328 : vector<19x256xi1>, vector<19x256xbf16>
    %c35 = arith.constant 35 : index
    %c0_227 = arith.constant 0 : index
    %c0_228 = arith.constant 0 : index
    %332 = vector.load %arg3[%c35, %c0_227, %c0_228] : memref<45x24x24xbf16, #tpu.memory_space<vmem>>, vector<1x16x19xbf16>
    %333 = vector.shape_cast %332 : vector<1x16x19xbf16> to vector<16x19xbf16>
    %cst_229 = arith.constant dense<0.000000e+00> : vector<16x256xf32>
    %334 = tpu.matmul %333, %331, %cst_229 {dimension_numbers = #tpu.dot_dimension_numbers<[1], [0], [0], [1], [0, 0, 1, 1], [], []>} : vector<16x19xbf16>, vector<19x256xbf16>, vector<16x256xf32> -> vector<16x256xf32>
    %335 = arith.addf %326, %334 : vector<16x256xf32>
    %c0_230 = arith.constant 0 : index
    %c3_231 = arith.constant 3 : index
    %336 = vector.load %arg4[%c0_230, %c3_231] : memref<24x8xf32, #tpu.memory_space<vmem>>, vector<16x1xf32>
    %337 = vector.broadcast %336 : vector<16x1xf32> to vector<16x256xf32>
    %338 = arith.addf %335, %337 : vector<16x256xf32>
    %cst_232 = arith.constant 0.000000e+00 : f32
    %339 = vector.broadcast %cst_232 : f32 to vector<16x256xf32>
    %340 = arith.maximumf %338, %339 : vector<16x256xf32>
    %341 = arith.truncf %340 : vector<16x256xf32> to vector<16x256xbf16>
    %c0_233 = arith.constant 0 : index
    %c128_234 = arith.constant 128 : index
    %342 = vector.load %arg7[%c0_233, %c128_234] : memref<19x512xbf16, #tpu.memory_space<vmem>>, vector<16x256xbf16>
    tpu.vector_store %arg7[%c0_233, %c128_234], %341 {strides = array<i32>} : memref<19x512xbf16, #tpu.memory_space<vmem>>, vector<16x256xbf16>,
    %c0_235 = arith.constant 0 : index
    %c111_236 = arith.constant 111 : index
    %343 = vector.load %arg7[%c0_235, %c111_236] : memref<19x512xbf16, #tpu.memory_space<vmem>>, vector<16x256xbf16>
    %cst_237 = arith.constant 0.000000e+00 : bf16
    %344 = vector.broadcast %cst_237 : bf16 to vector<16x256xbf16>
    %345 = vector.shape_cast %18 : vector<1x256xi1> to vector<1x256xi1>
    %346 = vector.broadcast %345 : vector<1x256xi1> to vector<16x256xi1>
    %347 = arith.select %346, %343, %344 : vector<16x256xi1>, vector<16x256xbf16>
    %c36 = arith.constant 36 : index
    %c0_238 = arith.constant 0 : index
    %c0_239 = arith.constant 0 : index
    %348 = vector.load %arg3[%c36, %c0_238, %c0_239] : memref<45x24x24xbf16, #tpu.memory_space<vmem>>, vector<1x3x16xbf16>
    %349 = vector.shape_cast %348 : vector<1x3x16xbf16> to vector<3x16xbf16>
    %cst_240 = arith.constant dense<0.000000e+00> : vector<3x256xf32>
    %350 = tpu.matmul %349, %347, %cst_240 {dimension_numbers = #tpu.dot_dimension_numbers<[1], [0], [0], [1], [0, 0, 1, 1], [], []>} : vector<3x16xbf16>, vector<16x256xbf16>, vector<3x256xf32> -> vector<3x256xf32>
    %c0_241 = arith.constant 0 : index
    %c112_242 = arith.constant 112 : index
    %351 = vector.load %arg7[%c0_241, %c112_242] : memref<19x512xbf16, #tpu.memory_space<vmem>>, vector<16x256xbf16>
    %c37 = arith.constant 37 : index
    %c0_243 = arith.constant 0 : index
    %c0_244 = arith.constant 0 : index
    %352 = vector.load %arg3[%c37, %c0_243, %c0_244] : memref<45x24x24xbf16, #tpu.memory_space<vmem>>, vector<1x3x16xbf16>
    %353 = vector.shape_cast %352 : vector<1x3x16xbf16> to vector<3x16xbf16>
    %cst_245 = arith.constant dense<0.000000e+00> : vector<3x256xf32>
    %354 = tpu.matmul %353, %351, %cst_245 {dimension_numbers = #tpu.dot_dimension_numbers<[1], [0], [0], [1], [0, 0, 1, 1], [], []>} : vector<3x16xbf16>, vector<16x256xbf16>, vector<3x256xf32> -> vector<3x256xf32>
    %355 = arith.addf %350, %354 : vector<3x256xf32>
    %c0_246 = arith.constant 0 : index
    %c113_247 = arith.constant 113 : index
    %356 = vector.load %arg7[%c0_246, %c113_247] : memref<19x512xbf16, #tpu.memory_space<vmem>>, vector<16x256xbf16>
    %cst_248 = arith.constant 0.000000e+00 : bf16
    %357 = vector.broadcast %cst_248 : bf16 to vector<16x256xbf16>
    %358 = vector.shape_cast %20 : vector<1x256xi1> to vector<1x256xi1>
    %359 = vector.broadcast %358 : vector<1x256xi1> to vector<16x256xi1>
    %360 = arith.select %359, %356, %357 : vector<16x256xi1>, vector<16x256xbf16>
    %c38 = arith.constant 38 : index
    %c0_249 = arith.constant 0 : index
    %c0_250 = arith.constant 0 : index
    %361 = vector.load %arg3[%c38, %c0_249, %c0_250] : memref<45x24x24xbf16, #tpu.memory_space<vmem>>, vector<1x3x16xbf16>
    %362 = vector.shape_cast %361 : vector<1x3x16xbf16> to vector<3x16xbf16>
    %cst_251 = arith.constant dense<0.000000e+00> : vector<3x256xf32>
    %363 = tpu.matmul %362, %360, %cst_251 {dimension_numbers = #tpu.dot_dimension_numbers<[1], [0], [0], [1], [0, 0, 1, 1], [], []>} : vector<3x16xbf16>, vector<16x256xbf16>, vector<3x256xf32> -> vector<3x256xf32>
    %364 = arith.addf %355, %363 : vector<3x256xf32>
    %c0_252 = arith.constant 0 : index
    %c127_253 = arith.constant 127 : index
    %365 = vector.load %arg7[%c0_252, %c127_253] : memref<19x512xbf16, #tpu.memory_space<vmem>>, vector<16x256xbf16>
    %cst_254 = arith.constant 0.000000e+00 : bf16
    %366 = vector.broadcast %cst_254 : bf16 to vector<16x256xbf16>
    %367 = vector.shape_cast %18 : vector<1x256xi1> to vector<1x256xi1>
    %368 = vector.broadcast %367 : vector<1x256xi1> to vector<16x256xi1>
    %369 = arith.select %368, %365, %366 : vector<16x256xi1>, vector<16x256xbf16>
    %c39 = arith.constant 39 : index
    %c0_255 = arith.constant 0 : index
    %c0_256 = arith.constant 0 : index
    %370 = vector.load %arg3[%c39, %c0_255, %c0_256] : memref<45x24x24xbf16, #tpu.memory_space<vmem>>, vector<1x3x16xbf16>
    %371 = vector.shape_cast %370 : vector<1x3x16xbf16> to vector<3x16xbf16>
    %cst_257 = arith.constant dense<0.000000e+00> : vector<3x256xf32>
    %372 = tpu.matmul %371, %369, %cst_257 {dimension_numbers = #tpu.dot_dimension_numbers<[1], [0], [0], [1], [0, 0, 1, 1], [], []>} : vector<3x16xbf16>, vector<16x256xbf16>, vector<3x256xf32> -> vector<3x256xf32>
    %373 = arith.addf %364, %372 : vector<3x256xf32>
    %c0_258 = arith.constant 0 : index
    %c128_259 = arith.constant 128 : index
    %374 = vector.load %arg7[%c0_258, %c128_259] : memref<19x512xbf16, #tpu.memory_space<vmem>>, vector<16x256xbf16>
    %c40 = arith.constant 40 : index
    %c0_260 = arith.constant 0 : index
    %c0_261 = arith.constant 0 : index
    %375 = vector.load %arg3[%c40, %c0_260, %c0_261] : memref<45x24x24xbf16, #tpu.memory_space<vmem>>, vector<1x3x16xbf16>
    %376 = vector.shape_cast %375 : vector<1x3x16xbf16> to vector<3x16xbf16>
    %cst_262 = arith.constant dense<0.000000e+00> : vector<3x256xf32>
    %377 = tpu.matmul %376, %374, %cst_262 {dimension_numbers = #tpu.dot_dimension_numbers<[1], [0], [0], [1], [0, 0, 1, 1], [], []>} : vector<3x16xbf16>, vector<16x256xbf16>, vector<3x256xf32> -> vector<3x256xf32>
    %378 = arith.addf %373, %377 : vector<3x256xf32>
    %c0_263 = arith.constant 0 : index
    %c129_264 = arith.constant 129 : index
    %379 = vector.load %arg7[%c0_263, %c129_264] : memref<19x512xbf16, #tpu.memory_space<vmem>>, vector<16x256xbf16>
    %cst_265 = arith.constant 0.000000e+00 : bf16
    %380 = vector.broadcast %cst_265 : bf16 to vector<16x256xbf16>
    %381 = vector.shape_cast %20 : vector<1x256xi1> to vector<1x256xi1>
    %382 = vector.broadcast %381 : vector<1x256xi1> to vector<16x256xi1>
    %383 = arith.select %382, %379, %380 : vector<16x256xi1>, vector<16x256xbf16>
    %c41 = arith.constant 41 : index
    %c0_266 = arith.constant 0 : index
    %c0_267 = arith.constant 0 : index
    %384 = vector.load %arg3[%c41, %c0_266, %c0_267] : memref<45x24x24xbf16, #tpu.memory_space<vmem>>, vector<1x3x16xbf16>
    %385 = vector.shape_cast %384 : vector<1x3x16xbf16> to vector<3x16xbf16>
    %cst_268 = arith.constant dense<0.000000e+00> : vector<3x256xf32>
    %386 = tpu.matmul %385, %383, %cst_268 {dimension_numbers = #tpu.dot_dimension_numbers<[1], [0], [0], [1], [0, 0, 1, 1], [], []>} : vector<3x16xbf16>, vector<16x256xbf16>, vector<3x256xf32> -> vector<3x256xf32>
    %387 = arith.addf %378, %386 : vector<3x256xf32>
    %c0_269 = arith.constant 0 : index
    %c143_270 = arith.constant 143 : index
    %388 = vector.load %arg7[%c0_269, %c143_270] : memref<19x512xbf16, #tpu.memory_space<vmem>>, vector<16x256xbf16>
    %cst_271 = arith.constant 0.000000e+00 : bf16
    %389 = vector.broadcast %cst_271 : bf16 to vector<16x256xbf16>
    %390 = vector.shape_cast %18 : vector<1x256xi1> to vector<1x256xi1>
    %391 = vector.broadcast %390 : vector<1x256xi1> to vector<16x256xi1>
    %392 = arith.select %391, %388, %389 : vector<16x256xi1>, vector<16x256xbf16>
    %c42 = arith.constant 42 : index
    %c0_272 = arith.constant 0 : index
    %c0_273 = arith.constant 0 : index
    %393 = vector.load %arg3[%c42, %c0_272, %c0_273] : memref<45x24x24xbf16, #tpu.memory_space<vmem>>, vector<1x3x16xbf16>
    %394 = vector.shape_cast %393 : vector<1x3x16xbf16> to vector<3x16xbf16>
    %cst_274 = arith.constant dense<0.000000e+00> : vector<3x256xf32>
    %395 = tpu.matmul %394, %392, %cst_274 {dimension_numbers = #tpu.dot_dimension_numbers<[1], [0], [0], [1], [0, 0, 1, 1], [], []>} : vector<3x16xbf16>, vector<16x256xbf16>, vector<3x256xf32> -> vector<3x256xf32>
    %396 = arith.addf %387, %395 : vector<3x256xf32>
    %c0_275 = arith.constant 0 : index
    %c144_276 = arith.constant 144 : index
    %397 = vector.load %arg7[%c0_275, %c144_276] : memref<19x512xbf16, #tpu.memory_space<vmem>>, vector<16x256xbf16>
    %c43 = arith.constant 43 : index
    %c0_277 = arith.constant 0 : index
    %c0_278 = arith.constant 0 : index
    %398 = vector.load %arg3[%c43, %c0_277, %c0_278] : memref<45x24x24xbf16, #tpu.memory_space<vmem>>, vector<1x3x16xbf16>
    %399 = vector.shape_cast %398 : vector<1x3x16xbf16> to vector<3x16xbf16>
    %cst_279 = arith.constant dense<0.000000e+00> : vector<3x256xf32>
    %400 = tpu.matmul %399, %397, %cst_279 {dimension_numbers = #tpu.dot_dimension_numbers<[1], [0], [0], [1], [0, 0, 1, 1], [], []>} : vector<3x16xbf16>, vector<16x256xbf16>, vector<3x256xf32> -> vector<3x256xf32>
    %401 = arith.addf %396, %400 : vector<3x256xf32>
    %c0_280 = arith.constant 0 : index
    %c145_281 = arith.constant 145 : index
    %402 = vector.load %arg7[%c0_280, %c145_281] : memref<19x512xbf16, #tpu.memory_space<vmem>>, vector<16x256xbf16>
    %cst_282 = arith.constant 0.000000e+00 : bf16
    %403 = vector.broadcast %cst_282 : bf16 to vector<16x256xbf16>
    %404 = vector.shape_cast %20 : vector<1x256xi1> to vector<1x256xi1>
    %405 = vector.broadcast %404 : vector<1x256xi1> to vector<16x256xi1>
    %406 = arith.select %405, %402, %403 : vector<16x256xi1>, vector<16x256xbf16>
    %c44 = arith.constant 44 : index
    %c0_283 = arith.constant 0 : index
    %c0_284 = arith.constant 0 : index
    %407 = vector.load %arg3[%c44, %c0_283, %c0_284] : memref<45x24x24xbf16, #tpu.memory_space<vmem>>, vector<1x3x16xbf16>
    %408 = vector.shape_cast %407 : vector<1x3x16xbf16> to vector<3x16xbf16>
    %cst_285 = arith.constant dense<0.000000e+00> : vector<3x256xf32>
    %409 = tpu.matmul %408, %406, %cst_285 {dimension_numbers = #tpu.dot_dimension_numbers<[1], [0], [0], [1], [0, 0, 1, 1], [], []>} : vector<3x16xbf16>, vector<16x256xbf16>, vector<3x256xf32> -> vector<3x256xf32>
    %410 = arith.addf %401, %409 : vector<3x256xf32>
    %c0_286 = arith.constant 0 : index
    %c4_287 = arith.constant 4 : index
    %411 = vector.load %arg4[%c0_286, %c4_287] : memref<24x8xf32, #tpu.memory_space<vmem>>, vector<3x1xf32>
    %412 = vector.broadcast %411 : vector<3x1xf32> to vector<3x256xf32>
    %413 = arith.addf %410, %412 : vector<3x256xf32>
    %c0_288 = arith.constant 0 : index
    %c0_289 = arith.constant 0 : index
    %c0_290 = arith.constant 0 : index
    %414 = vector.load %arg5[%c0_288, %c0_289, %c0_290] : memref<1x3x256xf32, #tpu.memory_space<vmem>>, vector<1x3x256xf32>
    %415 = vector.shape_cast %414 : vector<1x3x256xf32> to vector<3x256xf32>
    %416 = vector.shape_cast %413 : vector<3x256xf32> to vector<1x3x256xf32>
    tpu.vector_store %arg5[%c0_288, %c0_289, %c0_290], %416 {strides = array<i32>} : memref<1x3x256xf32, #tpu.memory_space<vmem>>, vector<1x3x256xf32>,
    return
  }
  func.func @transform_0(%arg0: i32) -> (i32, i32, i32) {
    %c0_i32 = arith.constant 0 : i32
    %c0_i32_0 = arith.constant 0 : i32
    %c0_i32_1 = arith.constant 0 : i32
    return %arg0, %c0_i32, %c0_i32_0 : i32, i32, i32
  }
  func.func @transform_1(%arg0: i32) -> (i32, i32, i32) {
    %c0_i32 = arith.constant 0 : i32
    %c0_i32_0 = arith.constant 0 : i32
    %c0_i32_1 = arith.constant 0 : i32
    return %arg0, %c0_i32, %c0_i32_0 : i32, i32, i32
  }
  func.func @transform_2(%arg0: i32) -> (i32, i32, i32) {
    %c0_i32 = arith.constant 0 : i32
    %c0_i32_0 = arith.constant 0 : i32
    %c0_i32_1 = arith.constant 0 : i32
    %c0_i32_2 = arith.constant 0 : i32
    return %c0_i32, %c0_i32_0, %c0_i32_1 : i32, i32, i32
  }
  func.func @transform_3(%arg0: i32) -> (i32, i32) {
    %c0_i32 = arith.constant 0 : i32
    %c0_i32_0 = arith.constant 0 : i32
    %c0_i32_1 = arith.constant 0 : i32
    return %c0_i32, %c0_i32_0 : i32, i32
  }
  func.func @transform_4(%arg0: i32) -> (i32, i32, i32) {
    %c0_i32 = arith.constant 0 : i32
    %c0_i32_0 = arith.constant 0 : i32
    %c0_i32_1 = arith.constant 0 : i32
    return %arg0, %c0_i32, %c0_i32_0 : i32, i32, i32
  }
  func.func @transform_5(%arg0: i32) -> (i32, i32, i32) {
    %c0_i32 = arith.constant 0 : i32
    %c0_i32_0 = arith.constant 0 : i32
    %c0_i32_1 = arith.constant 0 : i32
    return %arg0, %c0_i32, %c0_i32_0 : i32, i32, i32
  }
}

</mosaic_0001>

<llo_original>
// kernel: model_sr_forward.1
$region0: #{model_sr_forward.1}
  #allocation0 [shape = 'u32[]', space=smem, size = 0x4, offset = 0x4, fixed_abs, tag = 'smem constant byte address 0x4 - core index']
  #allocation1 [shape = 'u32[144,128]{1,0:T(1,128)}', space=vmem, size = 0x12000, scoped, tag = 'internal scratch']
  #allocation2 [shape = 'bf16[19,512]{1,0:T(8,128)(2,1)}', space=vmem, size = 0x6000, scoped, tag = 'scratch operand']
  %s0 = inlined_call_operand.vmem [shape: f32[2,3,256], index: 0, kind: input, shape index: {}]
  %s1 = inlined_call_operand.vmem [shape: f32[2,3,256], index: 1, kind: input, shape index: {}]
  %s2 = inlined_call_operand.vmem [shape: bf16[45,24,24], index: 2, kind: input, shape index: {}]
  %s3 = inlined_call_operand.vmem [shape: f32[24,8], index: 3, kind: input, shape index: {}]
  %s4 = inlined_call_operand.vmem [shape: f32[2,3,256], index: 4, kind: output, shape index: {0}]
  %s5 = inlined_call_operand.vmem [shape: f32[2,8,256], index: 5, kind: output, shape index: {1}]
  %6 = xla_tuple %s4, %s5
  %s7 = sld [smem:[#allocation0]]
  $region57: #{model_sr_forward.1} parent=0
    _
  %s9 = ssub.s32 1, %s7
  %s10 = scalar_select 0, %s9, %s7
  loop: start=0, step=1, limit=4
  $region2: #{model_sr_forward.1} parent=0 // loop_pre_header
    _
  $region3: #{model_sr_forward.1} parent=0 // loop_header
    %s12 = sphi 0, %s16
    %p13 = scmp.ge.s32.totalorder %s12, 4
    %s22 = sphi 0, %s24
    %s25 = sphi 0, %s22
    %s26 = sphi 0, %s25
    %s42 = sphi 0, %s26
    %s48 = sphi 0, %s50
    %s51 = sphi 0, %s48
    %s52 = sphi 0, %s51
    %s68 = sphi 0, %s52
    %s72 = sphi 0, %s72
    %s74 = sphi 0, %s72
    %s75 = sphi 0, %s74
    %s89 = sphi 0, %s75
    %s93 = sphi 0, %s93
    %s95 = sphi 0, %s93
    %s96 = sphi 0, %s95
    %s110 = sphi 0, %s96
    %s116 = sphi 0, %s118
    %s119 = sphi 0, %s116
    %s120 = sphi 0, %s119
    %s136 = sphi 0, %s120
    %s142 = sphi 0, %s144
    %s145 = sphi 0, %s142
    %s146 = sphi 0, %s145
    %s162 = sphi 0, %s146
  $region4: #{model_sr_forward.1} parent=0 // loop_header_branch
    %15 = sbr.rel (%p13) target = $region8
  $region5: #{model_sr_forward.1} parent=0 // loop_body
    %s17 = ssub.s32 %s12, 1
    %s18 = ssub.s32 %s12, 2
    %s19 = sadd.s32 %s12, 1
    %s20 = ssub.s32 %s12, %s19
    %p21 = scmp.eq.s32.totalorder %s20, 0
    %s23 = sadd.s32 %s22, 1
    %s24 = scalar_select %p21, %s22, %s23
    %p27 = pneg %p21
    %p28 = scmp.eq.s32.totalorder %s12, 1
    %p29 = por %p27, %p28
    %p30 = scmp.ne.s32.totalorder %s22, %s25
    %p31 = scmp.eq.s32.totalorder %s12, 0
    %p32 = por %p30, %p31
    %p33 = scmp.ne.s32.totalorder %s22, %s25
    %p34 = scmp.eq.s32.totalorder %s17, 1
    %p35 = por %p33, %p34
    %p36 = scmp.ne.s32.totalorder %s25, %s26
    %p37 = scmp.eq.s32.totalorder %s17, 0
    %p38 = por %p36, %p37
    %p39 = scmp.ne.s32.totalorder %s25, %s26
    %p40 = scmp.eq.s32.totalorder %s18, 1
    %p41 = por %p39, %p40
    %p43 = scmp.ne.s32.totalorder %s26, %s42
    %p44 = scmp.eq.s32.totalorder %s18, 0
    %p45 = por %p43, %p44
    %s46 = ssub.s32 %s12, %s19
    %p47 = scmp.eq.s32.totalorder %s46, 0
    %s49 = sadd.s32 %s48, 1
    %s50 = scalar_select %p47, %s48, %s49
    %p53 = pneg %p47
    %p54 = scmp.eq.s32.totalorder %s12, 1
    %p55 = por %p53, %p54
    %p56 = scmp.ne.s32.totalorder %s48, %s51
    %p57 = scmp.eq.s32.totalorder %s12, 0
    %p58 = por %p56, %p57
    %p59 = scmp.ne.s32.totalorder %s48, %s51
    %p60 = scmp.eq.s32.totalorder %s17, 1
    %p61 = por %p59, %p60
    %p62 = scmp.ne.s32.totalorder %s51, %s52
    %p63 = scmp.eq.s32.totalorder %s17, 0
    %p64 = por %p62, %p63
    %p65 = scmp.ne.s32.totalorder %s51, %s52
    %p66 = scmp.eq.s32.totalorder %s18, 1
    %p67 = por %p65, %p66
    %p69 = scmp.ne.s32.totalorder %s52, %s68
    %p70 = scmp.eq.s32.totalorder %s18, 0
    %p71 = por %p69, %p70
    %s73 = sadd.s32 %s72, 1
    %p76 = scmp.eq.s32.totalorder %s12, 1
    %p77 = scmp.ne.s32.totalorder %s72, %s74
    %p78 = scmp.eq.s32.totalorder %s12, 0
    %p79 = por %p77, %p78
    %p80 = scmp.ne.s32.totalorder %s72, %s74
    %p81 = scmp.eq.s32.totalorder %s17, 1
    %p82 = por %p80, %p81
    %p83 = scmp.ne.s32.totalorder %s74, %s75
    %p84 = scmp.eq.s32.totalorder %s17, 0
    %p85 = por %p83, %p84
    %p86 = scmp.ne.s32.totalorder %s74, %s75
    %p87 = scmp.eq.s32.totalorder %s18, 1
    %p88 = por %p86, %p87
    %p90 = scmp.ne.s32.totalorder %s75, %s89
    %p91 = scmp.eq.s32.totalorder %s18, 0
    %p92 = por %p90, %p91
    %s94 = sadd.s32 %s93, 1
    %p97 = scmp.eq.s32.totalorder %s12, 1
    %p98 = scmp.ne.s32.totalorder %s93, %s95
    %p99 = scmp.eq.s32.totalorder %s12, 0
    %p100 = por %p98, %p99
    %p101 = scmp.ne.s32.totalorder %s93, %s95
    %p102 = scmp.eq.s32.totalorder %s17, 1
    %p103 = por %p101, %p102
    %p104 = scmp.ne.s32.totalorder %s95, %s96
    %p105 = scmp.eq.s32.totalorder %s17, 0
    %p106 = por %p104, %p105
    %p107 = scmp.ne.s32.totalorder %s95, %s96
    %p108 = scmp.eq.s32.totalorder %s18, 1
    %p109 = por %p107, %p108
    %p111 = scmp.ne.s32.totalorder %s96, %s110
    %p112 = scmp.eq.s32.totalorder %s18, 0
    %p113 = por %p111, %p112
    %s114 = ssub.s32 %s12, %s19
    %p115 = scmp.eq.s32.totalorder %s114, 0
    %s117 = sadd.s32 %s116, 1
    %s118 = scalar_select %p115, %s116, %s117
    %p121 = pneg %p115
    %p122 = scmp.eq.s32.totalorder %s12, 1
    %p123 = por %p121, %p122
    %p124 = scmp.ne.s32.totalorder %s116, %s119
    %p125 = scmp.eq.s32.totalorder %s12, 0
    %p126 = por %p124, %p125
    %p127 = scmp.ne.s32.totalorder %s116, %s119
    %p128 = scmp.eq.s32.totalorder %s17, 1
    %p129 = por %p127, %p128
    %p130 = scmp.ne.s32.totalorder %s119, %s120
    %p131 = scmp.eq.s32.totalorder %s17, 0
    %p132 = por %p130, %p131
    %p133 = scmp.ne.s32.totalorder %s119, %s120
    %p134 = scmp.eq.s32.totalorder %s18, 1
    %p135 = por %p133, %p134
    %p137 = scmp.ne.s32.totalorder %s120, %s136
    %p138 = scmp.eq.s32.totalorder %s18, 0
    %p139 = por %p137, %p138
    %s140 = ssub.s32 %s12, %s19
    %p141 = scmp.eq.s32.totalorder %s140, 0
    %s143 = sadd.s32 %s142, 1
    %s144 = scalar_select %p141, %s142, %s143
    %p147 = pneg %p141
    %p148 = scmp.eq.s32.totalorder %s12, 1
    %p149 = por %p147, %p148
    %p150 = scmp.ne.s32.totalorder %s142, %s145
    %p151 = scmp.eq.s32.totalorder %s12, 0
    %p152 = por %p150, %p151
    %p153 = scmp.ne.s32.totalorder %s142, %s145
    %p154 = scmp.eq.s32.totalorder %s17, 1
    %p155 = por %p153, %p154
    %p156 = scmp.ne.s32.totalorder %s145, %s146
    %p157 = scmp.eq.s32.totalorder %s17, 0
    %p158 = por %p156, %p157
    %p159 = scmp.ne.s32.totalorder %s145, %s146
    %p160 = scmp.eq.s32.totalorder %s18, 1
    %p161 = por %p159, %p160
    %p163 = scmp.ne.s32.totalorder %s146, %s162
    %p164 = scmp.eq.s32.totalorder %s18, 0
    %p165 = por %p163, %p164
    %p166 = scmp.le.s32.totalorder 1, %s12
    %p167 = scmp.lt.s32.totalorder %s12, 3
    %p168 = pnand %p166, %p167
    %p169 = pneg %p168
    // Predicated region
    $region9: #{model_sr_forward.1} parent=5 // pred_check
      _
    $region10: #{model_sr_forward.1} parent=5 // pred_check_branch
      %171 = sbr.rel (%p168) target = $region12
    $region11: #{model_sr_forward.1} parent=5 // pred_region
      %s172 = ssub.s32 %s12, 1
      // Predicated region
      $region13: #{model_sr_forward.1} parent=11 // pred_check
        %p173 = pneg %p85
      $region14: #{model_sr_forward.1} parent=11 // pred_check_branch
        %175 = sbr.rel (%p173) target = $region16
      $region15: #{model_sr_forward.1} parent=11 // pred_region
        _
      $region16: #{model_sr_forward.1} parent=11 // pred_fallthru
        _
      // Predicated region
      $region17: #{model_sr_forward.1} parent=11 // pred_check
        %p176 = pneg %p106
      $region18: #{model_sr_forward.1} parent=11 // pred_check_branch
        %178 = sbr.rel (%p176) target = $region20
      $region19: #{model_sr_forward.1} parent=11 // pred_region
        _
      $region20: #{model_sr_forward.1} parent=11 // pred_fallthru
        _
    $region12: #{model_sr_forward.1} parent=5 // pred_fallthru
      _
    %p179 = scmp.lt.s32.totalorder %s12, 2
    // Predicated region
    $region21: #{model_sr_forward.1} parent=5 // pred_check
      %p180 = pneg %p179
    $region22: #{model_sr_forward.1} parent=5 // pred_check_branch
      %182 = sbr.rel (%p180) target = $region24
    $region23: #{model_sr_forward.1} parent=5 // pred_region
      // Predicated region
      $region25: #{model_sr_forward.1} parent=23 // pred_check
        %p183 = pneg %p32
      $region26: #{model_sr_forward.1} parent=23 // pred_check_branch
        %185 = sbr.rel (%p183) target = $region28
      $region27: #{model_sr_forward.1} parent=23 // pred_region
        %p186 = scmp.lt.s32.totalorder %s12, 1
        %s187 = scalar_select %p186, %s12, 1
        %s188 = smul.addr %s187, 2
        %s189 = smul.addr %s188, 4
        %s190 = scalar_lea.vmem %s0, %s189
      $region28: #{model_sr_forward.1} parent=23 // pred_fallthru
        _
      // Predicated region
      $region29: #{model_sr_forward.1} parent=23 // pred_check
        %p191 = pneg %p58
      $region30: #{model_sr_forward.1} parent=23 // pred_check_branch
        %193 = sbr.rel (%p191) target = $region32
      $region31: #{model_sr_forward.1} parent=23 // pred_region
        %p194 = scmp.lt.s32.totalorder %s12, 1
        %s195 = scalar_select %p194, %s12, 1
        %s196 = smul.addr %s195, 2
        %s197 = smul.addr %s196, 4
        %s198 = scalar_lea.vmem %s1, %s197
      $region32: #{model_sr_forward.1} parent=23 // pred_fallthru
        _
    $region24: #{model_sr_forward.1} parent=5 // pred_fallthru
      _
    %p199 = scmp.le.s32.totalorder 1, %s12
    %p200 = scmp.lt.s32.totalorder %s12, 3
    %p201 = pnand %p199, %p200
    %p202 = pneg %p201
    // Predicated region
    $region33: #{model_sr_forward.1} parent=5 // pred_check
      _
    $region34: #{model_sr_forward.1} parent=5 // pred_check_branch
      %204 = sbr.rel (%p201) target = $region36
    $region35: #{model_sr_forward.1} parent=5 // pred_region
      %s205 = ssub.s32 %s12, 1
      %p206 = scmp.lt.s32.totalorder %s17, 1
      %s207 = scalar_select %p206, %s17, 1
      %s208 = smul.addr %s207, 2
      %s209 = smul.addr %s208, 4
      %s210 = scalar_lea.vmem %s0, %s209
      %p211 = pneg %p38
      %p212 = pneg %p35
      %p213 = scmp.lt.s32.totalorder %s17, 1
      %s214 = scalar_select %p213, %s17, 1
      %s215 = smul.addr %s214, 2
      %s216 = smul.addr %s215, 4
      %s217 = scalar_lea.vmem %s1, %s216
      %p218 = pneg %p64
      %p219 = pneg %p61
      %p220 = pneg %p85
      %p221 = pneg %p82
      %p222 = pneg %p106
      %p223 = pneg %p103
      %p224 = pneg %p132
      %p225 = pneg %p129
      %p226 = scmp.lt.s32.totalorder %s17, 1
      %s227 = scalar_select %p226, %s17, 1
      %s228 = smul.addr %s227, 2
      %s229 = smul.addr %s228, 4
      %s230 = scalar_lea.vmem %s4, %s229
      %p231 = pneg %p158
      %p232 = pneg %p155
      %p233 = scmp.lt.s32.totalorder %s17, 1
      %s234 = scalar_select %p233, %s17, 1
      %s235 = smul.addr %s234, 2
      %s236 = smul.addr %s235, 8
      %s237 = scalar_lea.vmem %s5, %s236
      %p238 = scmp.lt.s32.totalorder %s17, 1
      %s239 = scalar_select %p238, %s17, 1
      %s240 = smul.addr %s239, 2
      %s241 = smul.addr %s240, 4
      %s242 = scalar_lea.vmem %s0, %s241
      %p243 = scmp.lt.s32.totalorder %s17, 1
      %s244 = scalar_select %p243, %s17, 1
      %s245 = smul.addr %s244, 2
      %s246 = smul.addr %s245, 4
      %s247 = scalar_lea.vmem %s1, %s246
      %p248 = scmp.lt.s32.totalorder %s17, 1
      %s249 = scalar_select %p248, %s17, 1
      %s250 = smul.addr %s249, 2
      %s251 = smul.addr %s250, 4
      %s252 = scalar_lea.vmem %s4, %s251
      %p253 = scmp.lt.s32.totalorder %s17, 1
      %s254 = scalar_select %p253, %s17, 1
      %s255 = smul.addr %s254, 2
      %s256 = smul.addr %s255, 8
      %s257 = scalar_lea.vmem %s5, %s256
      %v261 = vlaneseq
      %v262 = vand.u32 %v261, 127
      %v263 = vadd.s32 %v262, 128
      %vm264 = vcmp.lt.s32.totalorder %v262, 0
      %v265 = vsub.s32 0, %v262
      %v266 = vsel %vm264, %v265, %v262
      %v267 = vshrl.u32 %v266, 4
      %v268 = vand.u32 %v266, 15
      %v269 = vsub.s32 0, %v268
      %v270 = vsel %vm264, %v269, %v268
      %vm271 = vcmp.lt.s32.totalorder %v263, 0
      %v272 = vsub.s32 0, %v263
      %v273 = vsel %vm271, %v272, %v263
      %v274 = vshrl.u32 %v273, 4
      %v275 = vand.u32 %v273, 15
      %v276 = vsub.s32 0, %v275
      %v277 = vsel %vm271, %v276, %v275
      %vm278 = vcmp.ne.s32.totalorder %v270, 0
      %vm279 = vcmp.ne.s32.totalorder %v277, 0
      %vm280 = vcmp.lt.s32.totalorder %v270, 0
      %vm281 = vcmp.lt.s32.totalorder %v277, 0
      %vm282 = vmand %vm280, %vm278
      %vm283 = vmand %vm281, %vm279
      %v284 = vadd.s32 %v270, 16
      %v285 = vadd.s32 %v277, 16
      %v286 = vsel %vm282, %v284, %v270
      %v287 = vsel %vm283, %v285, %v277
      %vm288 = vcmp.ge.s32.totalorder %v286, 1
      %vm289 = vcmp.ge.s32.totalorder %v287, 1
      %vm290 = vcmp.le.s32.totalorder %v286, 14
      %vm291 = vcmp.le.s32.totalorder %v287, 14
      %292 = vst [vmem:[#allocation2] sm:$0xff] 0
      %293 = vst [vmem:[#allocation2 + $0x8] sm:$0xff] 0
      %294 = vst [vmem:[#allocation2 + $0x10] sm:$0xff] 0
      %295 = vst [vmem:[#allocation2 + $0x18] sm:$0xff] 0
      %vm296 = vcmask 1041408
      %vm297 = vsmask.f32 1280
      %vm298 = vmand %vm296, %vm297
      %vm299 = vcmask 1045508
      %vm300 = vsmask.f32 5376
      %vm301 = vmand %vm299, %vm300
      %vm302 = vmor %vm301, %vm298
      %v303 = vld [vmem:[#allocation2 + $0x20] sm:$0x33]
      %v304 = vsel %vm302, 0, %v303
      %305 = vst [vmem:[#allocation2 + $0x20] sm:$0x33] %v304
      %v306 = vld [vmem:[#allocation2 + $0x28] sm:$0x33]
      %v307 = vsel %vm302, 0, %v306
      %308 = vst [vmem:[#allocation2 + $0x28] sm:$0x33] %v307
      %v309 = vld [vmem:[%s242] sm:$0x77]
      %v311 = vcombine.high %v309, %v309
      %v313 = vpack.c.bf16 %v309, %v309
      %v314 = vpack.c.bf16 %v311, %v311
      %v317 = vunpack.c.l.b16 %v313
      %v318 = vunpack.c.l.b16 %v314
      %v319 = vpack.c.b16 %v318, %v317
      %v321 = vld [vmem:[#allocation2 + $0x4] sm:$0x33]
      %v322 = vsel %vm302, %v319, %v321
      %323 = vst [vmem:[#allocation2 + $0x4] sm:$0x33] %v322
      %v324 = vld [vmem:[#allocation2] sm:$0x33]
      %v325 = vld [vmem:[#allocation2 + $0x8] sm:$0x3]
      %v326 = vsel %vm288, 1, 0
      %v327 = vsel %vm289, 1, 0
      %vm328 = vcmp.eq.s32.totalorder %v326, 1
      %vm329 = vcmp.eq.s32.totalorder %v327, 1
      %vm330 = vmpackc.low %vm329, %vm328
      %v331 = vsel %vm330, 65537, 0
      %332 = vrot.lane.b32.xlu0 %v331, 111
      %v333 = vpop.permute.xlu0 %332
      %v334 = vrot.slane %v333, 4
      %vm335 = vcmask 908288
      %v336 = vsel %vm335, %v334, %v333
      %vm337 = vcmp.ne.s16.totalorder %v336, 0
      %vm338 = vcmp.ne.s16.totalorder %v334, 0
      %v339 = vsel %vm337, %v324, 0
      %v340 = vsel %vm338, %v325, 0
      %v341 = vld [vmem:[%s2] sm:$0xf]
      %v342 = vld [vmem:[%s2 + $0x4] sm:$0xf]
      %s343 = scalar_lea.vmem %s2, 12
      %v344 = vld [vmem:[%s343] sm:$0xf]
      %v345 = vld [vmem:[%s343 + $0x4] sm:$0xf]
      %v348 = vunpack.c.l.b16 %v344
      %v349 = vunpack.c.l.b16 %v345
      %v350 = vpack.c.b16 %v349, %v348
      %v353 = vunpack.c.l.b16 %v324
      %v354 = vunpack.c.h.b16 %v324
      %v355 = vunpack.c.l.b16 %v325
      %v356 = vpack.c.b16 %v353, %v353
      %v357 = vpack.c.b16 %v354, %v354
      %v358 = vpack.c.b16 %v355, %v355
      %359 = vrot.lane.b32.xlu0 %v356, 16
      %v360 = vpop.permute.xlu0 %359
      %361 = vrot.lane.b32.xlu0 %v357, 16
      %v362 = vpop.permute.xlu0 %361
      %363 = vrot.lane.b32.xlu0 %v358, 16
      %v364 = vpop.permute.xlu0 %363
      %vm365 = vcmask 130048
      %v366 = vsel %vm365, %v360, %v362
      %v367 = vsel %vm365, %v362, %v364
      %vm368 = vcmask 23552
      %v370 = vsel %vm368, %v350, 0
      %vm372 = vcmask 1040384
      %vm373 = vcmask 1041408
      %v374 = vsel %vm372, 4294967295, 65535
      %v375 = vsel %vm373, %v374, 0
      %v377 = vand.u32 %v366, %v375
      %v380 = vand.u32 %v367, %v375
      %382 = vmatprep.subr.bf16.mxu0 %v380
      %383 = vmatpush1.bf16.msra.mxu0 %v377
      %384 = vmatprep.subr.bf16.mxu0 0
      %385 = vmatpush1.bf16.msra.mxu0 0
      %386 = vmatprep.subr.bf16.mxu0 0
      %387 = vmatpush1.bf16.msra.mxu0 0
      %388 = vmatprep.subr.bf16.mxu0 0
      %389 = vmatpush1.bf16.msra.mxu0 0
      %390 = vmatprep.subr.bf16.mxu0 0
      %391 = vmatpush1.bf16.msra.mxu0 0
      %392 = vmatprep.subr.bf16.mxu0 0
      %393 = vmatpush1.bf16.msra.mxu0 0
      %394 = vmatprep.subr.bf16.mxu0 0
      %395 = vmatpush1.bf16.msra.mxu0 0
      %396 = vmatprep.subr.bf16.mxu0 0
      %397 = vmatpush1.bf16.msra.mxu0 0
      %398 = vmatprep.subr.bf16.mxu0 0
      %399 = vmatpush1.bf16.msra.mxu0 0
      %400 = vmatprep.subr.bf16.mxu0 0
      %401 = vmatpush1.bf16.msra.mxu0 0
      %402 = vmatprep.subr.bf16.mxu0 0
      %403 = vmatpush1.bf16.msra.mxu0 0
      %404 = vmatprep.subr.bf16.mxu0 0
      %405 = vmatpush1.bf16.msra.mxu0 0
      %406 = vmatprep.subr.bf16.mxu0 0
      %407 = vmatpush1.bf16.msra.mxu0 0
      %408 = vmatprep.subr.bf16.mxu0 0
      %409 = vmatpush1.bf16.msra.mxu0 0
      %410 = vmatprep.subr.bf16.mxu0 0
      %411 = vmatpush1.bf16.msra.mxu0 0
      %412 = vmatprep.subr.bf16.mxu0 0
      %413 = vmatpush1.bf16.msra.mxu0 0
      %414 = vmatprep.mubr.bf16.mxu0 0
      %415 = vmatmul.mubr.bf16.gmra.mrb[0].mxu0 %v370
      %v416 = vpop.f32.mrb[0].mxu0
      %v417 = vadd.f32 0.0, %v416
      %v418 = vpop.f32.mrb[0].mxu0
      %v419 = vadd.f32 0.0, %v418
      %v420 = vpop.f32.mrb[0].mxu0
      %v421 = vadd.f32 0.0, %v420
      %v422 = vpop.f32.mrb[0].mxu0
      %v423 = vadd.f32 0.0, %v422
      %424 = vdwg.mxu0
      %v427 = vunpack.c.l.b16 %v341
      %v428 = vunpack.c.l.b16 %v342
      %v429 = vpack.c.b16 %v428, %v427
      %v432 = vunpack.c.l.b16 %v339
      %v433 = vunpack.c.h.b16 %v339
      %v434 = vunpack.c.l.b16 %v340
      %v435 = vpack.c.b16 %v432, %v432
      %v436 = vpack.c.b16 %v433, %v433
      %v437 = vpack.c.b16 %v434, %v434
      %438 = vrot.lane.b32.xlu0 %v435, 17
      %v439 = vpop.permute.xlu0 %438
      %440 = vrot.lane.b32.xlu0 %v436, 17
      %v441 = vpop.permute.xlu0 %440
      %442 = vrot.lane.b32.xlu0 %v437, 17
      %v443 = vpop.permute.xlu0 %442
      %vm444 = vcmask 138240
      %v445 = vsel %vm444, %v439, %v441
      %v446 = vsel %vm444, %v441, %v443
      %v448 = vsel %vm368, %v429, 0
      %v451 = vand.u32 %v445, %v375
      %v454 = vand.u32 %v446, %v375
      %456 = vmatprep.subr.bf16.mxu0 %v454
      %457 = vmatpush1.bf16.msra.mxu0 %v451
      %458 = vmatprep.subr.bf16.mxu0 0
      %459 = vmatpush1.bf16.msra.mxu0 0
      %460 = vmatprep.subr.bf16.mxu0 0
      %461 = vmatpush1.bf16.msra.mxu0 0
      %462 = vmatprep.subr.bf16.mxu0 0
      %463 = vmatpush1.bf16.msra.mxu0 0
      %464 = vmatprep.subr.bf16.mxu0 0
      %465 = vmatpush1.bf16.msra.mxu0 0
      %466 = vmatprep.subr.bf16.mxu0 0
      %467 = vmatpush1.bf16.msra.mxu0 0
      %468 = vmatprep.subr.bf16.mxu0 0
      %469 = vmatpush1.bf16.msra.mxu0 0
      %470 = vmatprep.subr.bf16.mxu0 0
      %471 = vmatpush1.bf16.msra.mxu0 0
      %472 = vmatprep.subr.bf16.mxu0 0
      %473 = vmatpush1.bf16.msra.mxu0 0
      %474 = vmatprep.subr.bf16.mxu0 0
      %475 = vmatpush1.bf16.msra.mxu0 0
      %476 = vmatprep.subr.bf16.mxu0 0
      %477 = vmatpush1.bf16.msra.mxu0 0
      %478 = vmatprep.subr.bf16.mxu0 0
      %479 = vmatpush1.bf16.msra.mxu0 0
      %480 = vmatprep.subr.bf16.mxu0 0
      %481 = vmatpush1.bf16.msra.mxu0 0
      %482 = vmatprep.subr.bf16.mxu0 0
      %483 = vmatpush1.bf16.msra.mxu0 0
      %484 = vmatprep.subr.bf16.mxu0 0
      %485 = vmatpush1.bf16.msra.mxu0 0
      %486 = vmatprep.subr.bf16.mxu0 0
      %487 = vmatpush1.bf16.msra.mxu0 0
      %488 = vmatprep.mubr.bf16.mxu0 0
      %489 = vmatmul.mubr.bf16.gmra.mrb[0].mxu0 %v448
      %v490 = vpop.f32.mrb[0].mxu0
      %v491 = vadd.f32 %v417, %v490
      %v492 = vpop.f32.mrb[0].mxu0
      %v493 = vadd.f32 %v419, %v492
      %v494 = vpop.f32.mrb[0].mxu0
      %v495 = vadd.f32 %v421, %v494
      %v496 = vpop.f32.mrb[0].mxu0
      %v497 = vadd.f32 %v423, %v496
      %498 = vdwg.mxu0
      %v499 = vsel %vm290, 1, 0
      %v500 = vsel %vm291, 1, 0
      %vm501 = vcmp.eq.s32.totalorder %v499, 1
      %vm502 = vcmp.eq.s32.totalorder %v500, 1
      %vm503 = vmpackc.low %vm502, %vm501
      %v504 = vsel %vm503, 65537, 0
      %505 = vrot.lane.b32.xlu0 %v504, 113
      %v506 = vpop.permute.xlu0 %505
      %v507 = vrot.slane %v506, 4
      %vm508 = vcmask 924672
      %v509 = vsel %vm508, %v507, %v506
      %vm510 = vcmp.ne.s16.totalorder %v509, 0
      %vm511 = vcmp.ne.s16.totalorder %v507, 0
      %v512 = vsel %vm510, %v324, 0
      %v513 = vsel %vm511, %v325, 0
      %s514 = scalar_lea.vmem %s2, 24
      %v515 = vld [vmem:[%s514] sm:$0xf]
      %v516 = vld [vmem:[%s514 + $0x4] sm:$0xf]
      %v519 = vunpack.c.l.b16 %v515
      %v520 = vunpack.c.l.b16 %v516
      %v521 = vpack.c.b16 %v520, %v519
      %v524 = vunpack.c.l.b16 %v512
      %v525 = vunpack.c.h.b16 %v512
      %v526 = vunpack.c.l.b16 %v513
      %v527 = vpack.c.b16 %v524, %v524
      %v528 = vpack.c.b16 %v525, %v525
      %v529 = vpack.c.b16 %v526, %v526
      %530 = vrot.lane.b32.xlu0 %v527, 15
      %v531 = vpop.permute.xlu0 %530
      %532 = vrot.lane.b32.xlu0 %v528, 15
      %v533 = vpop.permute.xlu0 %532
      %534 = vrot.lane.b32.xlu0 %v529, 15
      %v535 = vpop.permute.xlu0 %534
      %vm536 = vcmask 121856
      %v537 = vsel %vm536, %v531, %v533
      %v538 = vsel %vm536, %v533, %v535
      %v540 = vsel %vm368, %v521, 0
      %v543 = vand.u32 %v537, %v375
      %v546 = vand.u32 %v538, %v375
      %548 = vmatprep.subr.bf16.mxu0 %v546
      %549 = vmatpush1.bf16.msra.mxu0 %v543
      %550 = vmatprep.subr.bf16.mxu0 0
      %551 = vmatpush1.bf16.msra.mxu0 0
      %552 = vmatprep.subr.bf16.mxu0 0
      %553 = vmatpush1.bf16.msra.mxu0 0
      %554 = vmatprep.subr.bf16.mxu0 0
      %555 = vmatpush1.bf16.msra.mxu0 0
      %556 = vmatprep.subr.bf16.mxu0 0
      %557 = vmatpush1.bf16.msra.mxu0 0
      %558 = vmatprep.subr.bf16.mxu0 0
      %559 = vmatpush1.bf16.msra.mxu0 0
      %560 = vmatprep.subr.bf16.mxu0 0
      %561 = vmatpush1.bf16.msra.mxu0 0
      %562 = vmatprep.subr.bf16.mxu0 0
      %563 = vmatpush1.bf16.msra.mxu0 0
      %564 = vmatprep.subr.bf16.mxu0 0
      %565 = vmatpush1.bf16.msra.mxu0 0
      %566 = vmatprep.subr.bf16.mxu0 0
      %567 = vmatpush1.bf16.msra.mxu0 0
      %568 = vmatprep.subr.bf16.mxu0 0
      %569 = vmatpush1.bf16.msra.mxu0 0
      %570 = vmatprep.subr.bf16.mxu0 0
      %571 = vmatpush1.bf16.msra.mxu0 0
      %572 = vmatprep.subr.bf16.mxu0 0
      %573 = vmatpush1.bf16.msra.mxu0 0
      %574 = vmatprep.subr.bf16.mxu0 0
      %575 = vmatpush1.bf16.msra.mxu0 0
      %576 = vmatprep.subr.bf16.mxu0 0
      %577 = vmatpush1.bf16.msra.mxu0 0
      %578 = vmatprep.subr.bf16.mxu0 0
      %579 = vmatpush1.bf16.msra.mxu0 0
      %580 = vmatprep.mubr.bf16.mxu0 0
      %581 = vmatmul.mubr.bf16.gmra.mrb[0].mxu0 %v540
      %v582 = vpop.f32.mrb[0].mxu0
      %v583 = vadd.f32 0.0, %v582
      %v584 = vpop.f32.mrb[0].mxu0
      %v585 = vadd.f32 0.0, %v584
      %v586 = vpop.f32.mrb[0].mxu0
      %v587 = vadd.f32 0.0, %v586
      %v588 = vpop.f32.mrb[0].mxu0
      %v589 = vadd.f32 0.0, %v588
      %590 = vdwg.mxu0
      %v591 = vadd.f32 %v491, %v583
      %v592 = vadd.f32 %v493, %v585
      %v593 = vadd.f32 %v495, %v587
      %v594 = vadd.f32 %v497, %v589
      %595 = vrot.lane.b32.xlu0 %v331, 127
      %v596 = vpop.permute.xlu0 %595
      %v597 = vrot.slane %v596, 4
      %vm598 = vcmask 1039360
      %v599 = vsel %vm598, %v597, %v596
      %vm600 = vcmp.ne.s16.totalorder %v599, 0
      %vm601 = vcmp.ne.s16.totalorder %v597, 0
      %v602 = vsel %vm600, %v324, 0
      %v603 = vsel %vm601, %v325, 0
      %s604 = scalar_lea.vmem %s2, 36
      %v605 = vld [vmem:[%s604] sm:$0xf]
      %v606 = vld [vmem:[%s604 + $0x4] sm:$0xf]
      %v609 = vunpack.c.l.b16 %v605
      %v610 = vunpack.c.l.b16 %v606
      %v611 = vpack.c.b16 %v610, %v609
      %v614 = vunpack.c.l.b16 %v602
      %v615 = vunpack.c.h.b16 %v602
      %v616 = vunpack.c.l.b16 %v603
      %v617 = vpack.c.b16 %v614, %v614
      %v618 = vpack.c.b16 %v615, %v615
      %v619 = vpack.c.b16 %v616, %v616
      %620 = vrot.lane.b32.xlu0 %v617, 1
      %v621 = vpop.permute.xlu0 %620
      %622 = vrot.lane.b32.xlu0 %v618, 1
      %v623 = vpop.permute.xlu0 %622
      %624 = vrot.lane.b32.xlu0 %v619, 1
      %v625 = vpop.permute.xlu0 %624
      %vm626 = vcmask 7168
      %v627 = vsel %vm626, %v621, %v623
      %v628 = vsel %vm626, %v623, %v625
      %v630 = vsel %vm368, %v611, 0
      %v633 = vand.u32 %v627, %v375
      %v636 = vand.u32 %v628, %v375
      %638 = vmatprep.subr.bf16.mxu0 %v636
      %639 = vmatpush1.bf16.msra.mxu0 %v633
      %640 = vmatprep.subr.bf16.mxu0 0
      %641 = vmatpush1.bf16.msra.mxu0 0
      %642 = vmatprep.subr.bf16.mxu0 0
      %643 = vmatpush1.bf16.msra.mxu0 0
      %644 = vmatprep.subr.bf16.mxu0 0
      %645 = vmatpush1.bf16.msra.mxu0 0
      %646 = vmatprep.subr.bf16.mxu0 0
      %647 = vmatpush1.bf16.msra.mxu0 0
      %648 = vmatprep.subr.bf16.mxu0 0
      %649 = vmatpush1.bf16.msra.mxu0 0
      %650 = vmatprep.subr.bf16.mxu0 0
      %651 = vmatpush1.bf16.msra.mxu0 0
      %652 = vmatprep.subr.bf16.mxu0 0
      %653 = vmatpush1.bf16.msra.mxu0 0
      %654 = vmatprep.subr.bf16.mxu0 0
      %655 = vmatpush1.bf16.msra.mxu0 0
      %656 = vmatprep.subr.bf16.mxu0 0
      %657 = vmatpush1.bf16.msra.mxu0 0
      %658 = vmatprep.subr.bf16.mxu0 0
      %659 = vmatpush1.bf16.msra.mxu0 0
      %660 = vmatprep.subr.bf16.mxu0 0
      %661 = vmatpush1.bf16.msra.mxu0 0
      %662 = vmatprep.subr.bf16.mxu0 0
      %663 = vmatpush1.bf16.msra.mxu0 0
      %664 = vmatprep.subr.bf16.mxu0 0
      %665 = vmatpush1.bf16.msra.mxu0 0
      %666 = vmatprep.subr.bf16.mxu0 0
      %667 = vmatpush1.bf16.msra.mxu0 0
      %668 = vmatprep.subr.bf16.mxu0 0
      %669 = vmatpush1.bf16.msra.mxu0 0
      %670 = vmatprep.mubr.bf16.mxu0 0
      %671 = vmatmul.mubr.bf16.gmra.mrb[0].mxu0 %v630
      %v672 = vpop.f32.mrb[0].mxu0
      %v673 = vadd.f32 0.0, %v672
      %v674 = vpop.f32.mrb[0].mxu0
      %v675 = vadd.f32 0.0, %v674
      %v676 = vpop.f32.mrb[0].mxu0
      %v677 = vadd.f32 0.0, %v676
      %v678 = vpop.f32.mrb[0].mxu0
      %v679 = vadd.f32 0.0, %v678
      %680 = vdwg.mxu0
      %v681 = vadd.f32 %v591, %v673
      %v682 = vadd.f32 %v592, %v675
      %v683 = vadd.f32 %v593, %v677
      %v684 = vadd.f32 %v594, %v679
      %v685 = vld [vmem:[#allocation2 + $0x4] sm:$0x33]
      %s686 = scalar_lea.vmem %s2, 48
      %v687 = vld [vmem:[%s686] sm:$0xf]
      %v688 = vld [vmem:[%s686 + $0x4] sm:$0xf]
      %v691 = vunpack.c.l.b16 %v687
      %v692 = vunpack.c.l.b16 %v688
      %v693 = vpack.c.b16 %v692, %v691
      %v695 = vunpack.c.l.b16 %v685
      %v696 = vunpack.c.h.b16 %v685
      %v697 = vpack.c.b16 %v695, %v695
      %v698 = vpack.c.b16 %v696, %v696
      %v700 = vsel %vm368, %v693, 0
      %v703 = vand.u32 %v697, %v375
      %v706 = vand.u32 %v698, %v375
      %708 = vmatprep.subr.bf16.mxu0 %v706
      %709 = vmatpush1.bf16.msra.mxu0 %v703
      %710 = vmatprep.subr.bf16.mxu0 0
      %711 = vmatpush1.bf16.msra.mxu0 0
      %712 = vmatprep.subr.bf16.mxu0 0
      %713 = vmatpush1.bf16.msra.mxu0 0
      %714 = vmatprep.subr.bf16.mxu0 0
      %715 = vmatpush1.bf16.msra.mxu0 0
      %716 = vmatprep.subr.bf16.mxu0 0
      %717 = vmatpush1.bf16.msra.mxu0 0
      %718 = vmatprep.subr.bf16.mxu0 0
      %719 = vmatpush1.bf16.msra.mxu0 0
      %720 = vmatprep.subr.bf16.mxu0 0
      %721 = vmatpush1.bf16.msra.mxu0 0
      %722 = vmatprep.subr.bf16.mxu0 0
      %723 = vmatpush1.bf16.msra.mxu0 0
      %724 = vmatprep.subr.bf16.mxu0 0
      %725 = vmatpush1.bf16.msra.mxu0 0
      %726 = vmatprep.subr.bf16.mxu0 0
      %727 = vmatpush1.bf16.msra.mxu0 0
      %728 = vmatprep.subr.bf16.mxu0 0
      %729 = vmatpush1.bf16.msra.mxu0 0
      %730 = vmatprep.subr.bf16.mxu0 0
      %731 = vmatpush1.bf16.msra.mxu0 0
      %732 = vmatprep.subr.bf16.mxu0 0
      %733 = vmatpush1.bf16.msra.mxu0 0
      %734 = vmatprep.subr.bf16.mxu0 0
      %735 = vmatpush1.bf16.msra.mxu0 0
      %736 = vmatprep.subr.bf16.mxu0 0
      %737 = vmatpush1.bf16.msra.mxu0 0
      %738 = vmatprep.subr.bf16.mxu0 0
      %739 = vmatpush1.bf16.msra.mxu0 0
      %740 = vmatprep.mubr.bf16.mxu0 0
      %741 = vmatmul.mubr.bf16.gmra.mrb[0].mxu0 %v700
      %v742 = vpop.f32.mrb[0].mxu0
      %v743 = vadd.f32 0.0, %v742
      %v744 = vpop.f32.mrb[0].mxu0
      %v745 = vadd.f32 0.0, %v744
      %v746 = vpop.f32.mrb[0].mxu0
      %v747 = vadd.f32 0.0, %v746
      %v748 = vpop.f32.mrb[0].mxu0
      %v749 = vadd.f32 0.0, %v748
      %750 = vdwg.mxu0
      %v751 = vadd.f32 %v681, %v743
      %v752 = vadd.f32 %v682, %v745
      %v753 = vadd.f32 %v683, %v747
      %v754 = vadd.f32 %v684, %v749
      %v755 = vld [vmem:[#allocation2 + $0x4] sm:$0x33]
      %v756 = vld [vmem:[#allocation2 + $0xc] sm:$0x3]
      %757 = vrot.lane.b32.xlu0 %v504, 1
      %v758 = vpop.permute.xlu0 %757
      %v759 = vrot.slane %v758, 4
      %v760 = vsel %vm626, %v759, %v758
      %vm761 = vcmp.ne.s16.totalorder %v760, 0
      %vm762 = vcmp.ne.s16.totalorder %v759, 0
      %v763 = vsel %vm761, %v755, 0
      %v764 = vsel %vm762, %v756, 0
      %s765 = scalar_lea.vmem %s2, 60
      %v766 = vld [vmem:[%s765] sm:$0xf]
      %v767 = vld [vmem:[%s765 + $0x4] sm:$0xf]
      %v770 = vunpack.c.l.b16 %v766
      %v771 = vunpack.c.l.b16 %v767
      %v772 = vpack.c.b16 %v771, %v770
      %v775 = vunpack.c.l.b16 %v763
      %v776 = vunpack.c.h.b16 %v763
      %v777 = vunpack.c.l.b16 %v764
      %v778 = vpack.c.b16 %v775, %v775
      %v779 = vpack.c.b16 %v776, %v776
      %v780 = vpack.c.b16 %v777, %v777
      %781 = vrot.lane.b32.xlu0 %v778, 127
      %v782 = vpop.permute.xlu0 %781
      %783 = vrot.lane.b32.xlu0 %v779, 127
      %v784 = vpop.permute.xlu0 %783
      %785 = vrot.lane.b32.xlu0 %v780, 127
      %v786 = vpop.permute.xlu0 %785
      %v787 = vsel %vm598, %v782, %v784
      %v788 = vsel %vm598, %v784, %v786
      %v790 = vsel %vm368, %v772, 0
      %v793 = vand.u32 %v787, %v375
      %v796 = vand.u32 %v788, %v375
      %798 = vmatprep.subr.bf16.mxu0 %v796
      %799 = vmatpush1.bf16.msra.mxu0 %v793
      %800 = vmatprep.subr.bf16.mxu0 0
      %801 = vmatpush1.bf16.msra.mxu0 0
      %802 = vmatprep.subr.bf16.mxu0 0
      %803 = vmatpush1.bf16.msra.mxu0 0
      %804 = vmatprep.subr.bf16.mxu0 0
      %805 = vmatpush1.bf16.msra.mxu0 0
      %806 = vmatprep.subr.bf16.mxu0 0
      %807 = vmatpush1.bf16.msra.mxu0 0
      %808 = vmatprep.subr.bf16.mxu0 0
      %809 = vmatpush1.bf16.msra.mxu0 0
      %810 = vmatprep.subr.bf16.mxu0 0
      %811 = vmatpush1.bf16.msra.mxu0 0
      %812 = vmatprep.subr.bf16.mxu0 0
      %813 = vmatpush1.bf16.msra.mxu0 0
      %814 = vmatprep.subr.bf16.mxu0 0
      %815 = vmatpush1.bf16.msra.mxu0 0
      %816 = vmatprep.subr.bf16.mxu0 0
      %817 = vmatpush1.bf16.msra.mxu0 0
      %818 = vmatprep.subr.bf16.mxu0 0
      %819 = vmatpush1.bf16.msra.mxu0 0
      %820 = vmatprep.subr.bf16.mxu0 0
      %821 = vmatpush1.bf16.msra.mxu0 0
      %822 = vmatprep.subr.bf16.mxu0 0
      %823 = vmatpush1.bf16.msra.mxu0 0
      %824 = vmatprep.subr.bf16.mxu0 0
      %825 = vmatpush1.bf16.msra.mxu0 0
      %826 = vmatprep.subr.bf16.mxu0 0
      %827 = vmatpush1.bf16.msra.mxu0 0
      %828 = vmatprep.subr.bf16.mxu0 0
      %829 = vmatpush1.bf16.msra.mxu0 0
      %830 = vmatprep.mubr.bf16.mxu0 0
      %831 = vmatmul.mubr.bf16.gmra.mrb[0].mxu0 %v790
      %v832 = vpop.f32.mrb[0].mxu0
      %v833 = vadd.f32 0.0, %v832
      %v834 = vpop.f32.mrb[0].mxu0
      %v835 = vadd.f32 0.0, %v834
      %v836 = vpop.f32.mrb[0].mxu0
      %v837 = vadd.f32 0.0, %v836
      %v838 = vpop.f32.mrb[0].mxu0
      %v839 = vadd.f32 0.0, %v838
      %840 = vdwg.mxu0
      %v841 = vadd.f32 %v751, %v833
      %v842 = vadd.f32 %v752, %v835
      %v843 = vadd.f32 %v753, %v837
      %v844 = vadd.f32 %v754, %v839
      %845 = vrot.lane.b32.xlu0 %v331, 15
      %v846 = vpop.permute.xlu0 %845
      %v847 = vrot.slane %v846, 4
      %v848 = vsel %vm536, %v847, %v846
      %vm849 = vcmp.ne.s16.totalorder %v848, 0
      %vm850 = vcmp.ne.s16.totalorder %v847, 0
      %v851 = vsel %vm849, %v755, 0
      %v852 = vsel %vm850, %v756, 0
      %s853 = scalar_lea.vmem %s2, 72
      %v854 = vld [vmem:[%s853] sm:$0xf]
      %v855 = vld [vmem:[%s853 + $0x4] sm:$0xf]
      %v858 = vunpack.c.l.b16 %v854
      %v859 = vunpack.c.l.b16 %v855
      %v860 = vpack.c.b16 %v859, %v858
      %v863 = vunpack.c.l.b16 %v851
      %v864 = vunpack.c.h.b16 %v851
      %v865 = vunpack.c.l.b16 %v852
      %v866 = vpack.c.b16 %v863, %v863
      %v867 = vpack.c.b16 %v864, %v864
      %v868 = vpack.c.b16 %v865, %v865
      %869 = vrot.lane.b32.xlu0 %v866, 113
      %v870 = vpop.permute.xlu0 %869
      %871 = vrot.lane.b32.xlu0 %v867, 113
      %v872 = vpop.permute.xlu0 %871
      %873 = vrot.lane.b32.xlu0 %v868, 113
      %v874 = vpop.permute.xlu0 %873
      %v875 = vsel %vm508, %v870, %v872
      %v876 = vsel %vm508, %v872, %v874
      %v878 = vsel %vm368, %v860, 0
      %v881 = vand.u32 %v875, %v375
      %v884 = vand.u32 %v876, %v375
      %886 = vmatprep.subr.bf16.mxu0 %v884
      %887 = vmatpush1.bf16.msra.mxu0 %v881
      %888 = vmatprep.subr.bf16.mxu0 0
      %889 = vmatpush1.bf16.msra.mxu0 0
      %890 = vmatprep.subr.bf16.mxu0 0
      %891 = vmatpush1.bf16.msra.mxu0 0
      %892 = vmatprep.subr.bf16.mxu0 0
      %893 = vmatpush1.bf16.msra.mxu0 0
      %894 = vmatprep.subr.bf16.mxu0 0
      %895 = vmatpush1.bf16.msra.mxu0 0
      %896 = vmatprep.subr.bf16.mxu0 0
      %897 = vmatpush1.bf16.msra.mxu0 0
      %898 = vmatprep.subr.bf16.mxu0 0
      %899 = vmatpush1.bf16.msra.mxu0 0
      %900 = vmatprep.subr.bf16.mxu0 0
      %901 = vmatpush1.bf16.msra.mxu0 0
      %902 = vmatprep.subr.bf16.mxu0 0
      %903 = vmatpush1.bf16.msra.mxu0 0
      %904 = vmatprep.subr.bf16.mxu0 0
      %905 = vmatpush1.bf16.msra.mxu0 0
      %906 = vmatprep.subr.bf16.mxu0 0
      %907 = vmatpush1.bf16.msra.mxu0 0
      %908 = vmatprep.subr.bf16.mxu0 0
      %909 = vmatpush1.bf16.msra.mxu0 0
      %910 = vmatprep.subr.bf16.mxu0 0
      %911 = vmatpush1.bf16.msra.mxu0 0
      %912 = vmatprep.subr.bf16.mxu0 0
      %913 = vmatpush1.bf16.msra.mxu0 0
      %914 = vmatprep.subr.bf16.mxu0 0
      %915 = vmatpush1.bf16.msra.mxu0 0
      %916 = vmatprep.subr.bf16.mxu0 0
      %917 = vmatpush1.bf16.msra.mxu0 0
      %918 = vmatprep.mubr.bf16.mxu0 0
      %919 = vmatmul.mubr.bf16.gmra.mrb[0].mxu0 %v878
      %v920 = vpop.f32.mrb[0].mxu0
      %v921 = vadd.f32 0.0, %v920
      %v922 = vpop.f32.mrb[0].mxu0
      %v923 = vadd.f32 0.0, %v922
      %v924 = vpop.f32.mrb[0].mxu0
      %v925 = vadd.f32 0.0, %v924
      %v926 = vpop.f32.mrb[0].mxu0
      %v927 = vadd.f32 0.0, %v926
      %928 = vdwg.mxu0
      %v929 = vadd.f32 %v841, %v921
      %v930 = vadd.f32 %v842, %v923
      %v931 = vadd.f32 %v843, %v925
      %v932 = vadd.f32 %v844, %v927
      %s933 = scalar_lea.vmem %s2, 84
      %v934 = vld [vmem:[%s933] sm:$0xf]
      %v935 = vld [vmem:[%s933 + $0x4] sm:$0xf]
      %v938 = vunpack.c.l.b16 %v934
      %v939 = vunpack.c.l.b16 %v935
      %v940 = vpack.c.b16 %v939, %v938
      %v943 = vunpack.c.l.b16 %v755
      %v944 = vunpack.c.h.b16 %v755
      %v945 = vunpack.c.l.b16 %v756
      %v946 = vpack.c.b16 %v943, %v943
      %v947 = vpack.c.b16 %v944, %v944
      %v948 = vpack.c.b16 %v945, %v945
      %949 = vrot.lane.b32.xlu0 %v946, 112
      %v950 = vpop.permute.xlu0 %949
      %951 = vrot.lane.b32.xlu0 %v947, 112
      %v952 = vpop.permute.xlu0 %951
      %953 = vrot.lane.b32.xlu0 %v948, 112
      %v954 = vpop.permute.xlu0 %953
      %vm955 = vcmask 916480
      %v956 = vsel %vm955, %v950, %v952
      %v957 = vsel %vm955, %v952, %v954
      %v959 = vsel %vm368, %v940, 0
      %v962 = vand.u32 %v956, %v375
      %v965 = vand.u32 %v957, %v375
      %967 = vmatprep.subr.bf16.mxu0 %v965
      %968 = vmatpush1.bf16.msra.mxu0 %v962
      %969 = vmatprep.subr.bf16.mxu0 0
      %970 = vmatpush1.bf16.msra.mxu0 0
      %971 = vmatprep.subr.bf16.mxu0 0
      %972 = vmatpush1.bf16.msra.mxu0 0
      %973 = vmatprep.subr.bf16.mxu0 0
      %974 = vmatpush1.bf16.msra.mxu0 0
      %975 = vmatprep.subr.bf16.mxu0 0
      %976 = vmatpush1.bf16.msra.mxu0 0
      %977 = vmatprep.subr.bf16.mxu0 0
      %978 = vmatpush1.bf16.msra.mxu0 0
      %979 = vmatprep.subr.bf16.mxu0 0
      %980 = vmatpush1.bf16.msra.mxu0 0
      %981 = vmatprep.subr.bf16.mxu0 0
      %982 = vmatpush1.bf16.msra.mxu0 0
      %983 = vmatprep.subr.bf16.mxu0 0
      %984 = vmatpush1.bf16.msra.mxu0 0
      %985 = vmatprep.subr.bf16.mxu0 0
      %986 = vmatpush1.bf16.msra.mxu0 0
      %987 = vmatprep.subr.bf16.mxu0 0
      %988 = vmatpush1.bf16.msra.mxu0 0
      %989 = vmatprep.subr.bf16.mxu0 0
      %990 = vmatpush1.bf16.msra.mxu0 0
      %991 = vmatprep.subr.bf16.mxu0 0
      %992 = vmatpush1.bf16.msra.mxu0 0
      %993 = vmatprep.subr.bf16.mxu0 0
      %994 = vmatpush1.bf16.msra.mxu0 0
      %995 = vmatprep.subr.bf16.mxu0 0
      %996 = vmatpush1.bf16.msra.mxu0 0
      %997 = vmatprep.subr.bf16.mxu0 0
      %998 = vmatpush1.bf16.msra.mxu0 0
      %999 = vmatprep.mubr.bf16.mxu0 0
      %1000 = vmatmul.mubr.bf16.gmra.mrb[0].mxu0 %v959
      %v1001 = vpop.f32.mrb[0].mxu0
      %v1002 = vadd.f32 0.0, %v1001
      %v1003 = vpop.f32.mrb[0].mxu0
      %v1004 = vadd.f32 0.0, %v1003
      %v1005 = vpop.f32.mrb[0].mxu0
      %v1006 = vadd.f32 0.0, %v1005
      %v1007 = vpop.f32.mrb[0].mxu0
      %v1008 = vadd.f32 0.0, %v1007
      %1009 = vdwg.mxu0
      %v1010 = vadd.f32 %v929, %v1002
      %v1011 = vadd.f32 %v930, %v1004
      %v1012 = vadd.f32 %v931, %v1006
      %v1013 = vadd.f32 %v932, %v1008
      %1014 = vrot.lane.b32.xlu0 %v504, 17
      %v1015 = vpop.permute.xlu0 %1014
      %v1016 = vrot.slane %v1015, 4
      %v1017 = vsel %vm444, %v1016, %v1015
      %vm1018 = vcmp.ne.s16.totalorder %v1017, 0
      %vm1019 = vcmp.ne.s16.totalorder %v1016, 0
      %v1020 = vsel %vm1018, %v755, 0
      %v1021 = vsel %vm1019, %v756, 0
      %s1022 = scalar_lea.vmem %s2, 96
      %v1023 = vld [vmem:[%s1022] sm:$0xf]
      %v1024 = vld [vmem:[%s1022 + $0x4] sm:$0xf]
      %v1027 = vunpack.c.l.b16 %v1023
      %v1028 = vunpack.c.l.b16 %v1024
      %v1029 = vpack.c.b16 %v1028, %v1027
      %v1032 = vunpack.c.l.b16 %v1020
      %v1033 = vunpack.c.h.b16 %v1020
      %v1034 = vunpack.c.l.b16 %v1021
      %v1035 = vpack.c.b16 %v1032, %v1032
      %v1036 = vpack.c.b16 %v1033, %v1033
      %v1037 = vpack.c.b16 %v1034, %v1034
      %1038 = vrot.lane.b32.xlu0 %v1035, 111
      %v1039 = vpop.permute.xlu0 %1038
      %1040 = vrot.lane.b32.xlu0 %v1036, 111
      %v1041 = vpop.permute.xlu0 %1040
      %1042 = vrot.lane.b32.xlu0 %v1037, 111
      %v1043 = vpop.permute.xlu0 %1042
      %v1044 = vsel %vm335, %v1039, %v1041
      %v1045 = vsel %vm335, %v1041, %v1043
      %v1047 = vsel %vm368, %v1029, 0
      %v1050 = vand.u32 %v1044, %v375
      %v1053 = vand.u32 %v1045, %v375
      %1055 = vmatprep.subr.bf16.mxu0 %v1053
      %1056 = vmatpush1.bf16.msra.mxu0 %v1050
      %1057 = vmatprep.subr.bf16.mxu0 0
      %1058 = vmatpush1.bf16.msra.mxu0 0
      %1059 = vmatprep.subr.bf16.mxu0 0
      %1060 = vmatpush1.bf16.msra.mxu0 0
      %1061 = vmatprep.subr.bf16.mxu0 0
      %1062 = vmatpush1.bf16.msra.mxu0 0
      %1063 = vmatprep.subr.bf16.mxu0 0
      %1064 = vmatpush1.bf16.msra.mxu0 0
      %1065 = vmatprep.subr.bf16.mxu0 0
      %1066 = vmatpush1.bf16.msra.mxu0 0
      %1067 = vmatprep.subr.bf16.mxu0 0
      %1068 = vmatpush1.bf16.msra.mxu0 0
      %1069 = vmatprep.subr.bf16.mxu0 0
      %1070 = vmatpush1.bf16.msra.mxu0 0
      %1071 = vmatprep.subr.bf16.mxu0 0
      %1072 = vmatpush1.bf16.msra.mxu0 0
      %1073 = vmatprep.subr.bf16.mxu0 0
      %1074 = vmatpush1.bf16.msra.mxu0 0
      %1075 = vmatprep.subr.bf16.mxu0 0
      %1076 = vmatpush1.bf16.msra.mxu0 0
      %1077 = vmatprep.subr.bf16.mxu0 0
      %1078 = vmatpush1.bf16.msra.mxu0 0
      %1079 = vmatprep.subr.bf16.mxu0 0
      %1080 = vmatpush1.bf16.msra.mxu0 0
      %1081 = vmatprep.subr.bf16.mxu0 0
      %1082 = vmatpush1.bf16.msra.mxu0 0
      %1083 = vmatprep.subr.bf16.mxu0 0
      %1084 = vmatpush1.bf16.msra.mxu0 0
      %1085 = vmatprep.subr.bf16.mxu0 0
      %1086 = vmatpush1.bf16.msra.mxu0 0
      %1087 = vmatprep.mubr.bf16.mxu0 0
      %1088 = vmatmul.mubr.bf16.gmra.mrb[0].mxu0 %v1047
      %v1089 = vpop.f32.mrb[0].mxu0
      %v1090 = vadd.f32 0.0, %v1089
      %v1091 = vpop.f32.mrb[0].mxu0
      %v1092 = vadd.f32 0.0, %v1091
      %v1093 = vpop.f32.mrb[0].mxu0
      %v1094 = vadd.f32 0.0, %v1093
      %v1095 = vpop.f32.mrb[0].mxu0
      %v1096 = vadd.f32 0.0, %v1095
      %1097 = vdwg.mxu0
      %v1098 = vadd.f32 %v1010, %v1090
      %v1099 = vadd.f32 %v1011, %v1092
      %v1100 = vadd.f32 %v1012, %v1094
      %v1101 = vadd.f32 %v1013, %v1096
      %v1102 = vld [vmem:[%s3] sm:$0xff]
      %v1103 = vld [vmem:[%s3 + $0x8] sm:$0xff]
      %1105 = vset.pattern.permute.xlu0 0
      %1106 = vperm.xlu0 %1105, %v1102
      %v1107 = vpop.permute.xlu0 %1106
      %1110 = vset.pattern.permute.xlu0 0
      %1111 = vperm.xlu0 %1110, %v1103
      %v1112 = vpop.permute.xlu0 %1111
      %v1114 = vadd.f32 %v1098, %v1107
      %v1115 = vadd.f32 %v1099, %v1107
      %v1116 = vadd.f32 %v1100, %v1112
      %v1117 = vadd.f32 %v1101, %v1112
      %v1118 = vmax.f32 %v1114, 0.0
      %v1119 = vmax.f32 %v1115, 0.0
      %v1120 = vmax.f32 %v1116, 0.0
      %v1121 = vmax.f32 %v1117, 0.0
      %v1122 = vpack.c.bf16 %v1120, %v1118
      %v1123 = vpack.c.bf16 %v1121, %v1119
      %v1126 = vunpack.c.l.b16 %v1122
      %v1127 = vunpack.c.l.b16 %v1123
      %v1128 = vunpack.c.h.b16 %v1122
      %v1129 = vunpack.c.h.b16 %v1123
      %v1130 = vpack.c.b16 %v1127, %v1126
      %v1131 = vpack.c.b16 %v1129, %v1128
      %1134 = vst [vmem:[#allocation2 + $0x4] sm:$0xff] %v1130
      %1135 = vst [vmem:[#allocation2 + $0x14] sm:$0xff] %v1131
      %v1136 = vld [vmem:[#allocation2] sm:$0xff]
      %v1137 = vld [vmem:[#allocation2 + $0x8] sm:$0xf]
      %v1138 = vld [vmem:[#allocation2 + $0x10] sm:$0xff]
      %v1139 = vld [vmem:[#allocation2 + $0x18] sm:$0xf]
      %v1140 = vsel %vm337, %v1136, 0
      %v1141 = vsel %vm338, %v1137, 0
      %v1142 = vsel %vm337, %v1138, 0
      %v1143 = vsel %vm338, %v1139, 0
      %s1144 = scalar_lea.vmem %s2, 108
      %v1145 = vld [vmem:[%s1144] sm:$0xf]
      %v1146 = vld [vmem:[%s1144 + $0x4] sm:$0xf]
      %s1147 = scalar_lea.vmem %s2, 120
      %v1148 = vld [vmem:[%s1147] sm:$0xf]
      %v1149 = vld [vmem:[%s1147 + $0x4] sm:$0xf]
      %v1152 = vunpack.c.l.b16 %v1148
      %v1153 = vunpack.c.l.b16 %v1149
      %v1154 = vpack.c.b16 %v1153, %v1152
      %v1159 = vunpack.c.l.b16 %v1136
      %v1160 = vunpack.c.h.b16 %v1136
      %v1161 = vunpack.c.l.b16 %v1137
      %v1162 = vunpack.c.l.b16 %v1138
      %v1163 = vunpack.c.h.b16 %v1138
      %v1164 = vunpack.c.l.b16 %v1139
      %v1165 = vpack.c.b16 %v1162, %v1159
      %v1166 = vpack.c.b16 %v1163, %v1160
      %v1167 = vpack.c.b16 %v1164, %v1161
      %1168 = vrot.lane.b32.xlu0 %v1165, 16
      %v1169 = vpop.permute.xlu0 %1168
      %1170 = vrot.lane.b32.xlu0 %v1166, 16
      %v1171 = vpop.permute.xlu0 %1170
      %1172 = vrot.lane.b32.xlu0 %v1167, 16
      %v1173 = vpop.permute.xlu0 %1172
      %v1174 = vsel %vm365, %v1169, %v1171
      %v1175 = vsel %vm365, %v1171, %v1173
      %vm1178 = vcmask 130048
      %v1180 = vsel %vm1178, %v1154, 0
      %1182 = vmatprep.subr.bf16.mxu0 %v1175
      %1183 = vmatpush1.bf16.msra.mxu0 %v1174
      %1184 = vmatprep.subr.bf16.mxu0 0
      %1185 = vmatpush1.bf16.msra.mxu0 0
      %1186 = vmatprep.subr.bf16.mxu0 0
      %1187 = vmatpush1.bf16.msra.mxu0 0
      %1188 = vmatprep.subr.bf16.mxu0 0
      %1189 = vmatpush1.bf16.msra.mxu0 0
      %1190 = vmatprep.subr.bf16.mxu0 0
      %1191 = vmatpush1.bf16.msra.mxu0 0
      %1192 = vmatprep.subr.bf16.mxu0 0
      %1193 = vmatpush1.bf16.msra.mxu0 0
      %1194 = vmatprep.subr.bf16.mxu0 0
      %1195 = vmatpush1.bf16.msra.mxu0 0
      %1196 = vmatprep.subr.bf16.mxu0 0
      %1197 = vmatpush1.bf16.msra.mxu0 0
      %1198 = vmatprep.subr.bf16.mxu0 0
      %1199 = vmatpush1.bf16.msra.mxu0 0
      %1200 = vmatprep.subr.bf16.mxu0 0
      %1201 = vmatpush1.bf16.msra.mxu0 0
      %1202 = vmatprep.subr.bf16.mxu0 0
      %1203 = vmatpush1.bf16.msra.mxu0 0
      %1204 = vmatprep.subr.bf16.mxu0 0
      %1205 = vmatpush1.bf16.msra.mxu0 0
      %1206 = vmatprep.subr.bf16.mxu0 0
      %1207 = vmatpush1.bf16.msra.mxu0 0
      %1208 = vmatprep.subr.bf16.mxu0 0
      %1209 = vmatpush1.bf16.msra.mxu0 0
      %1210 = vmatprep.subr.bf16.mxu0 0
      %1211 = vmatpush1.bf16.msra.mxu0 0
      %1212 = vmatprep.subr.bf16.mxu0 0
      %1213 = vmatpush1.bf16.msra.mxu0 0
      %1214 = vmatprep.mubr.bf16.mxu0 0
      %1215 = vmatmul.mubr.bf16.gmra.mrb[0].mxu0 %v1180
      %v1216 = vpop.f32.mrb[0].mxu0
      %v1217 = vadd.f32 0.0, %v1216
      %v1218 = vpop.f32.mrb[0].mxu0
      %v1219 = vadd.f32 0.0, %v1218
      %v1220 = vpop.f32.mrb[0].mxu0
      %v1221 = vadd.f32 0.0, %v1220
      %v1222 = vpop.f32.mrb[0].mxu0
      %v1223 = vadd.f32 0.0, %v1222
      %1224 = vdwg.mxu0
      %v1227 = vunpack.c.l.b16 %v1145
      %v1228 = vunpack.c.l.b16 %v1146
      %v1229 = vpack.c.b16 %v1228, %v1227
      %v1234 = vunpack.c.l.b16 %v1140
      %v1235 = vunpack.c.h.b16 %v1140
      %v1236 = vunpack.c.l.b16 %v1141
      %v1237 = vunpack.c.l.b16 %v1142
      %v1238 = vunpack.c.h.b16 %v1142
      %v1239 = vunpack.c.l.b16 %v1143
      %v1240 = vpack.c.b16 %v1237, %v1234
      %v1241 = vpack.c.b16 %v1238, %v1235
      %v1242 = vpack.c.b16 %v1239, %v1236
      %1243 = vrot.lane.b32.xlu0 %v1240, 17
      %v1244 = vpop.permute.xlu0 %1243
      %1245 = vrot.lane.b32.xlu0 %v1241, 17
      %v1246 = vpop.permute.xlu0 %1245
      %1247 = vrot.lane.b32.xlu0 %v1242, 17
      %v1248 = vpop.permute.xlu0 %1247
      %v1249 = vsel %vm444, %v1244, %v1246
      %v1250 = vsel %vm444, %v1246, %v1248
      %v1254 = vsel %vm1178, %v1229, 0
      %1256 = vmatprep.subr.bf16.mxu0 %v1250
      %1257 = vmatpush1.bf16.msra.mxu0 %v1249
      %1258 = vmatprep.subr.bf16.mxu0 0
      %1259 = vmatpush1.bf16.msra.mxu0 0
      %1260 = vmatprep.subr.bf16.mxu0 0
      %1261 = vmatpush1.bf16.msra.mxu0 0
      %1262 = vmatprep.subr.bf16.mxu0 0
      %1263 = vmatpush1.bf16.msra.mxu0 0
      %1264 = vmatprep.subr.bf16.mxu0 0
      %1265 = vmatpush1.bf16.msra.mxu0 0
      %1266 = vmatprep.subr.bf16.mxu0 0
      %1267 = vmatpush1.bf16.msra.mxu0 0
      %1268 = vmatprep.subr.bf16.mxu0 0
      %1269 = vmatpush1.bf16.msra.mxu0 0
      %1270 = vmatprep.subr.bf16.mxu0 0
      %1271 = vmatpush1.bf16.msra.mxu0 0
      %1272 = vmatprep.subr.bf16.mxu0 0
      %1273 = vmatpush1.bf16.msra.mxu0 0
      %1274 = vmatprep.subr.bf16.mxu0 0
      %1275 = vmatpush1.bf16.msra.mxu0 0
      %1276 = vmatprep.subr.bf16.mxu0 0
      %1277 = vmatpush1.bf16.msra.mxu0 0
      %1278 = vmatprep.subr.bf16.mxu0 0
      %1279 = vmatpush1.bf16.msra.mxu0 0
      %1280 = vmatprep.subr.bf16.mxu0 0
      %1281 = vmatpush1.bf16.msra.mxu0 0
      %1282 = vmatprep.subr.bf16.mxu0 0
      %1283 = vmatpush1.bf16.msra.mxu0 0
      %1284 = vmatprep.subr.bf16.mxu0 0
      %1285 = vmatpush1.bf16.msra.mxu0 0
      %1286 = vmatprep.subr.bf16.mxu0 0
      %1287 = vmatpush1.bf16.msra.mxu0 0
      %1288 = vmatprep.mubr.bf16.mxu0 0
      %1289 = vmatmul.mubr.bf16.gmra.mrb[0].mxu0 %v1254
      %v1290 = vpop.f32.mrb[0].mxu0
      %v1291 = vadd.f32 %v1217, %v1290
      %v1292 = vpop.f32.mrb[0].mxu0
      %v1293 = vadd.f32 %v1219, %v1292
      %v1294 = vpop.f32.mrb[0].mxu0
      %v1295 = vadd.f32 %v1221, %v1294
      %v1296 = vpop.f32.mrb[0].mxu0
      %v1297 = vadd.f32 %v1223, %v1296
      %1298 = vdwg.mxu0
      %v1299 = vsel %vm510, %v1136, 0
      %v1300 = vsel %vm511, %v1137, 0
      %v1301 = vsel %vm510, %v1138, 0
      %v1302 = vsel %vm511, %v1139, 0
      %s1303 = scalar_lea.vmem %s2, 132
      %v1304 = vld [vmem:[%s1303] sm:$0xf]
      %v1305 = vld [vmem:[%s1303 + $0x4] sm:$0xf]
      %v1308 = vunpack.c.l.b16 %v1304
      %v1309 = vunpack.c.l.b16 %v1305
      %v1310 = vpack.c.b16 %v1309, %v1308
      %v1315 = vunpack.c.l.b16 %v1299
      %v1316 = vunpack.c.h.b16 %v1299
      %v1317 = vunpack.c.l.b16 %v1300
      %v1318 = vunpack.c.l.b16 %v1301
      %v1319 = vunpack.c.h.b16 %v1301
      %v1320 = vunpack.c.l.b16 %v1302
      %v1321 = vpack.c.b16 %v1318, %v1315
      %v1322 = vpack.c.b16 %v1319, %v1316
      %v1323 = vpack.c.b16 %v1320, %v1317
      %1324 = vrot.lane.b32.xlu0 %v1321, 15
      %v1325 = vpop.permute.xlu0 %1324
      %1326 = vrot.lane.b32.xlu0 %v1322, 15
      %v1327 = vpop.permute.xlu0 %1326
      %1328 = vrot.lane.b32.xlu0 %v1323, 15
      %v1329 = vpop.permute.xlu0 %1328
      %v1330 = vsel %vm536, %v1325, %v1327
      %v1331 = vsel %vm536, %v1327, %v1329
      %v1335 = vsel %vm1178, %v1310, 0
      %1337 = vmatprep.subr.bf16.mxu0 %v1331
      %1338 = vmatpush1.bf16.msra.mxu0 %v1330
      %1339 = vmatprep.subr.bf16.mxu0 0
      %1340 = vmatpush1.bf16.msra.mxu0 0
      %1341 = vmatprep.subr.bf16.mxu0 0
      %1342 = vmatpush1.bf16.msra.mxu0 0
      %1343 = vmatprep.subr.bf16.mxu0 0
      %1344 = vmatpush1.bf16.msra.mxu0 0
      %1345 = vmatprep.subr.bf16.mxu0 0
      %1346 = vmatpush1.bf16.msra.mxu0 0
      %1347 = vmatprep.subr.bf16.mxu0 0
      %1348 = vmatpush1.bf16.msra.mxu0 0
      %1349 = vmatprep.subr.bf16.mxu0 0
      %1350 = vmatpush1.bf16.msra.mxu0 0
      %1351 = vmatprep.subr.bf16.mxu0 0
      %1352 = vmatpush1.bf16.msra.mxu0 0
      %1353 = vmatprep.subr.bf16.mxu0 0
      %1354 = vmatpush1.bf16.msra.mxu0 0
      %1355 = vmatprep.subr.bf16.mxu0 0
      %1356 = vmatpush1.bf16.msra.mxu0 0
      %1357 = vmatprep.subr.bf16.mxu0 0
      %1358 = vmatpush1.bf16.msra.mxu0 0
      %1359 = vmatprep.subr.bf16.mxu0 0
      %1360 = vmatpush1.bf16.msra.mxu0 0
      %1361 = vmatprep.subr.bf16.mxu0 0
      %1362 = vmatpush1.bf16.msra.mxu0 0
      %1363 = vmatprep.subr.bf16.mxu0 0
      %1364 = vmatpush1.bf16.msra.mxu0 0
      %1365 = vmatprep.subr.bf16.mxu0 0
      %1366 = vmatpush1.bf16.msra.mxu0 0
      %1367 = vmatprep.subr.bf16.mxu0 0
      %1368 = vmatpush1.bf16.msra.mxu0 0
      %1369 = vmatprep.mubr.bf16.mxu0 0
      %1370 = vmatmul.mubr.bf16.gmra.mrb[0].mxu0 %v1335
      %v1371 = vpop.f32.mrb[0].mxu0
      %v1372 = vadd.f32 0.0, %v1371
      %v1373 = vpop.f32.mrb[0].mxu0
      %v1374 = vadd.f32 0.0, %v1373
      %v1375 = vpop.f32.mrb[0].mxu0
      %v1376 = vadd.f32 0.0, %v1375
      %v1377 = vpop.f32.mrb[0].mxu0
      %v1378 = vadd.f32 0.0, %v1377
      %1379 = vdwg.mxu0
      %v1380 = vadd.f32 %v1291, %v1372
      %v1381 = vadd.f32 %v1293, %v1374
      %v1382 = vadd.f32 %v1295, %v1376
      %v1383 = vadd.f32 %v1297, %v1378
      %v1384 = vsel %vm600, %v1136, 0
      %v1385 = vsel %vm601, %v1137, 0
      %v1386 = vsel %vm600, %v1138, 0
      %v1387 = vsel %vm601, %v1139, 0
      %s1388 = scalar_lea.vmem %s2, 144
      %v1389 = vld [vmem:[%s1388] sm:$0xf]
      %v1390 = vld [vmem:[%s1388 + $0x4] sm:$0xf]
      %v1393 = vunpack.c.l.b16 %v1389
      %v1394 = vunpack.c.l.b16 %v1390
      %v1395 = vpack.c.b16 %v1394, %v1393
      %v1400 = vunpack.c.l.b16 %v1384
      %v1401 = vunpack.c.h.b16 %v1384
      %v1402 = vunpack.c.l.b16 %v1385
      %v1403 = vunpack.c.l.b16 %v1386
      %v1404 = vunpack.c.h.b16 %v1386
      %v1405 = vunpack.c.l.b16 %v1387
      %v1406 = vpack.c.b16 %v1403, %v1400
      %v1407 = vpack.c.b16 %v1404, %v1401
      %v1408 = vpack.c.b16 %v1405, %v1402
      %1409 = vrot.lane.b32.xlu0 %v1406, 1
      %v1410 = vpop.permute.xlu0 %1409
      %1411 = vrot.lane.b32.xlu0 %v1407, 1
      %v1412 = vpop.permute.xlu0 %1411
      %1413 = vrot.lane.b32.xlu0 %v1408, 1
      %v1414 = vpop.permute.xlu0 %1413
      %v1415 = vsel %vm626, %v1410, %v1412
      %v1416 = vsel %vm626, %v1412, %v1414
      %v1420 = vsel %vm1178, %v1395, 0
      %1422 = vmatprep.subr.bf16.mxu0 %v1416
      %1423 = vmatpush1.bf16.msra.mxu0 %v1415
      %1424 = vmatprep.subr.bf16.mxu0 0
      %1425 = vmatpush1.bf16.msra.mxu0 0
      %1426 = vmatprep.subr.bf16.mxu0 0
      %1427 = vmatpush1.bf16.msra.mxu0 0
      %1428 = vmatprep.subr.bf16.mxu0 0
      %1429 = vmatpush1.bf16.msra.mxu0 0
      %1430 = vmatprep.subr.bf16.mxu0 0
      %1431 = vmatpush1.bf16.msra.mxu0 0
      %1432 = vmatprep.subr.bf16.mxu0 0
      %1433 = vmatpush1.bf16.msra.mxu0 0
      %1434 = vmatprep.subr.bf16.mxu0 0
      %1435 = vmatpush1.bf16.msra.mxu0 0
      %1436 = vmatprep.subr.bf16.mxu0 0
      %1437 = vmatpush1.bf16.msra.mxu0 0
      %1438 = vmatprep.subr.bf16.mxu0 0
      %1439 = vmatpush1.bf16.msra.mxu0 0
      %1440 = vmatprep.subr.bf16.mxu0 0
      %1441 = vmatpush1.bf16.msra.mxu0 0
      %1442 = vmatprep.subr.bf16.mxu0 0
      %1443 = vmatpush1.bf16.msra.mxu0 0
      %1444 = vmatprep.subr.bf16.mxu0 0
      %1445 = vmatpush1.bf16.msra.mxu0 0
      %1446 = vmatprep.subr.bf16.mxu0 0
      %1447 = vmatpush1.bf16.msra.mxu0 0
      %1448 = vmatprep.subr.bf16.mxu0 0
      %1449 = vmatpush1.bf16.msra.mxu0 0
      %1450 = vmatprep.subr.bf16.mxu0 0
      %1451 = vmatpush1.bf16.msra.mxu0 0
      %1452 = vmatprep.subr.bf16.mxu0 0
      %1453 = vmatpush1.bf16.msra.mxu0 0
      %1454 = vmatprep.mubr.bf16.mxu0 0
      %1455 = vmatmul.mubr.bf16.gmra.mrb[0].mxu0 %v1420
      %v1456 = vpop.f32.mrb[0].mxu0
      %v1457 = vadd.f32 0.0, %v1456
      %v1458 = vpop.f32.mrb[0].mxu0
      %v1459 = vadd.f32 0.0, %v1458
      %v1460 = vpop.f32.mrb[0].mxu0
      %v1461 = vadd.f32 0.0, %v1460
      %v1462 = vpop.f32.mrb[0].mxu0
      %v1463 = vadd.f32 0.0, %v1462
      %1464 = vdwg.mxu0
      %v1465 = vadd.f32 %v1380, %v1457
      %v1466 = vadd.f32 %v1381, %v1459
      %v1467 = vadd.f32 %v1382, %v1461
      %v1468 = vadd.f32 %v1383, %v1463
      %v1469 = vld [vmem:[#allocation2 + $0x4] sm:$0xff]
      %v1470 = vld [vmem:[#allocation2 + $0x14] sm:$0xff]
      %s1471 = scalar_lea.vmem %s2, 156
      %v1472 = vld [vmem:[%s1471] sm:$0xf]
      %v1473 = vld [vmem:[%s1471 + $0x4] sm:$0xf]
      %v1476 = vunpack.c.l.b16 %v1472
      %v1477 = vunpack.c.l.b16 %v1473
      %v1478 = vpack.c.b16 %v1477, %v1476
      %v1481 = vunpack.c.l.b16 %v1469
      %v1482 = vunpack.c.h.b16 %v1469
      %v1483 = vunpack.c.l.b16 %v1470
      %v1484 = vunpack.c.h.b16 %v1470
      %v1485 = vpack.c.b16 %v1483, %v1481
      %v1486 = vpack.c.b16 %v1484, %v1482
      %v1490 = vsel %vm1178, %v1478, 0
      %1492 = vmatprep.subr.bf16.mxu0 %v1486
      %1493 = vmatpush1.bf16.msra.mxu0 %v1485
      %1494 = vmatprep.subr.bf16.mxu0 0
      %1495 = vmatpush1.bf16.msra.mxu0 0
      %1496 = vmatprep.subr.bf16.mxu0 0
      %1497 = vmatpush1.bf16.msra.mxu0 0
      %1498 = vmatprep.subr.bf16.mxu0 0
      %1499 = vmatpush1.bf16.msra.mxu0 0
      %1500 = vmatprep.subr.bf16.mxu0 0
      %1501 = vmatpush1.bf16.msra.mxu0 0
      %1502 = vmatprep.subr.bf16.mxu0 0
      %1503 = vmatpush1.bf16.msra.mxu0 0
      %1504 = vmatprep.subr.bf16.mxu0 0
      %1505 = vmatpush1.bf16.msra.mxu0 0
      %1506 = vmatprep.subr.bf16.mxu0 0
      %1507 = vmatpush1.bf16.msra.mxu0 0
      %1508 = vmatprep.subr.bf16.mxu0 0
      %1509 = vmatpush1.bf16.msra.mxu0 0
      %1510 = vmatprep.subr.bf16.mxu0 0
      %1511 = vmatpush1.bf16.msra.mxu0 0
      %1512 = vmatprep.subr.bf16.mxu0 0
      %1513 = vmatpush1.bf16.msra.mxu0 0
      %1514 = vmatprep.subr.bf16.mxu0 0
      %1515 = vmatpush1.bf16.msra.mxu0 0
      %1516 = vmatprep.subr.bf16.mxu0 0
      %1517 = vmatpush1.bf16.msra.mxu0 0
      %1518 = vmatprep.subr.bf16.mxu0 0
      %1519 = vmatpush1.bf16.msra.mxu0 0
      %1520 = vmatprep.subr.bf16.mxu0 0
      %1521 = vmatpush1.bf16.msra.mxu0 0
      %1522 = vmatprep.subr.bf16.mxu0 0
      %1523 = vmatpush1.bf16.msra.mxu0 0
      %1524 = vmatprep.mubr.bf16.mxu0 0
      %1525 = vmatmul.mubr.bf16.gmra.mrb[0].mxu0 %v1490
      %v1526 = vpop.f32.mrb[0].mxu0
      %v1527 = vadd.f32 0.0, %v1526
      %v1528 = vpop.f32.mrb[0].mxu0
      %v1529 = vadd.f32 0.0, %v1528
      %v1530 = vpop.f32.mrb[0].mxu0
      %v1531 = vadd.f32 0.0, %v1530
      %v1532 = vpop.f32.mrb[0].mxu0
      %v1533 = vadd.f32 0.0, %v1532
      %1534 = vdwg.mxu0
      %v1535 = vadd.f32 %v1465, %v1527
      %v1536 = vadd.f32 %v1466, %v1529
      %v1537 = vadd.f32 %v1467, %v1531
      %v1538 = vadd.f32 %v1468, %v1533
      %v1539 = vld [vmem:[#allocation2 + $0x4] sm:$0xff]
      %v1540 = vld [vmem:[#allocation2 + $0xc] sm:$0xf]
      %v1541 = vld [vmem:[#allocation2 + $0x14] sm:$0xff]
      %v1542 = vld [vmem:[#allocation2 + $0x1c] sm:$0xf]
      %v1543 = vsel %vm761, %v1539, 0
      %v1544 = vsel %vm762, %v1540, 0
      %v1545 = vsel %vm761, %v1541, 0
      %v1546 = vsel %vm762, %v1542, 0
      %s1547 = scalar_lea.vmem %s2, 168
      %v1548 = vld [vmem:[%s1547] sm:$0xf]
      %v1549 = vld [vmem:[%s1547 + $0x4] sm:$0xf]
      %v1552 = vunpack.c.l.b16 %v1548
      %v1553 = vunpack.c.l.b16 %v1549
      %v1554 = vpack.c.b16 %v1553, %v1552
      %v1559 = vunpack.c.l.b16 %v1543
      %v1560 = vunpack.c.h.b16 %v1543
      %v1561 = vunpack.c.l.b16 %v1544
      %v1562 = vunpack.c.l.b16 %v1545
      %v1563 = vunpack.c.h.b16 %v1545
      %v1564 = vunpack.c.l.b16 %v1546
      %v1565 = vpack.c.b16 %v1562, %v1559
      %v1566 = vpack.c.b16 %v1563, %v1560
      %v1567 = vpack.c.b16 %v1564, %v1561
      %1568 = vrot.lane.b32.xlu0 %v1565, 127
      %v1569 = vpop.permute.xlu0 %1568
      %1570 = vrot.lane.b32.xlu0 %v1566, 127
      %v1571 = vpop.permute.xlu0 %1570
      %1572 = vrot.lane.b32.xlu0 %v1567, 127
      %v1573 = vpop.permute.xlu0 %1572
      %v1574 = vsel %vm598, %v1569, %v1571
      %v1575 = vsel %vm598, %v1571, %v1573
      %v1579 = vsel %vm1178, %v1554, 0
      %1581 = vmatprep.subr.bf16.mxu0 %v1575
      %1582 = vmatpush1.bf16.msra.mxu0 %v1574
      %1583 = vmatprep.subr.bf16.mxu0 0
      %1584 = vmatpush1.bf16.msra.mxu0 0
      %1585 = vmatprep.subr.bf16.mxu0 0
      %1586 = vmatpush1.bf16.msra.mxu0 0
      %1587 = vmatprep.subr.bf16.mxu0 0
      %1588 = vmatpush1.bf16.msra.mxu0 0
      %1589 = vmatprep.subr.bf16.mxu0 0
      %1590 = vmatpush1.bf16.msra.mxu0 0
      %1591 = vmatprep.subr.bf16.mxu0 0
      %1592 = vmatpush1.bf16.msra.mxu0 0
      %1593 = vmatprep.subr.bf16.mxu0 0
      %1594 = vmatpush1.bf16.msra.mxu0 0
      %1595 = vmatprep.subr.bf16.mxu0 0
      %1596 = vmatpush1.bf16.msra.mxu0 0
      %1597 = vmatprep.subr.bf16.mxu0 0
      %1598 = vmatpush1.bf16.msra.mxu0 0
      %1599 = vmatprep.subr.bf16.mxu0 0
      %1600 = vmatpush1.bf16.msra.mxu0 0
      %1601 = vmatprep.subr.bf16.mxu0 0
      %1602 = vmatpush1.bf16.msra.mxu0 0
      %1603 = vmatprep.subr.bf16.mxu0 0
      %1604 = vmatpush1.bf16.msra.mxu0 0
      %1605 = vmatprep.subr.bf16.mxu0 0
      %1606 = vmatpush1.bf16.msra.mxu0 0
      %1607 = vmatprep.subr.bf16.mxu0 0
      %1608 = vmatpush1.bf16.msra.mxu0 0
      %1609 = vmatprep.subr.bf16.mxu0 0
      %1610 = vmatpush1.bf16.msra.mxu0 0
      %1611 = vmatprep.subr.bf16.mxu0 0
      %1612 = vmatpush1.bf16.msra.mxu0 0
      %1613 = vmatprep.mubr.bf16.mxu0 0
      %1614 = vmatmul.mubr.bf16.gmra.mrb[0].mxu0 %v1579
      %v1615 = vpop.f32.mrb[0].mxu0
      %v1616 = vadd.f32 0.0, %v1615
      %v1617 = vpop.f32.mrb[0].mxu0
      %v1618 = vadd.f32 0.0, %v1617
      %v1619 = vpop.f32.mrb[0].mxu0
      %v1620 = vadd.f32 0.0, %v1619
      %v1621 = vpop.f32.mrb[0].mxu0
      %v1622 = vadd.f32 0.0, %v1621
      %1623 = vdwg.mxu0
      %v1624 = vadd.f32 %v1535, %v1616
      %v1625 = vadd.f32 %v1536, %v1618
      %v1626 = vadd.f32 %v1537, %v1620
      %v1627 = vadd.f32 %v1538, %v1622
      %v1628 = vsel %vm849, %v1539, 0
      %v1629 = vsel %vm850, %v1540, 0
      %v1630 = vsel %vm849, %v1541, 0
      %v1631 = vsel %vm850, %v1542, 0
      %s1632 = scalar_lea.vmem %s2, 180
      %v1633 = vld [vmem:[%s1632] sm:$0xf]
      %v1634 = vld [vmem:[%s1632 + $0x4] sm:$0xf]
      %v1637 = vunpack.c.l.b16 %v1633
      %v1638 = vunpack.c.l.b16 %v1634
      %v1639 = vpack.c.b16 %v1638, %v1637
      %v1644 = vunpack.c.l.b16 %v1628
      %v1645 = vunpack.c.h.b16 %v1628
      %v1646 = vunpack.c.l.b16 %v1629
      %v1647 = vunpack.c.l.b16 %v1630
      %v1648 = vunpack.c.h.b16 %v1630
      %v1649 = vunpack.c.l.b16 %v1631
      %v1650 = vpack.c.b16 %v1647, %v1644
      %v1651 = vpack.c.b16 %v1648, %v1645
      %v1652 = vpack.c.b16 %v1649, %v1646
      %1653 = vrot.lane.b32.xlu0 %v1650, 113
      %v1654 = vpop.permute.xlu0 %1653
      %1655 = vrot.lane.b32.xlu0 %v1651, 113
      %v1656 = vpop.permute.xlu0 %1655
      %1657 = vrot.lane.b32.xlu0 %v1652, 113
      %v1658 = vpop.permute.xlu0 %1657
      %v1659 = vsel %vm508, %v1654, %v1656
      %v1660 = vsel %vm508, %v1656, %v1658
      %v1664 = vsel %vm1178, %v1639, 0
      %1666 = vmatprep.subr.bf16.mxu0 %v1660
      %1667 = vmatpush1.bf16.msra.mxu0 %v1659
      %1668 = vmatprep.subr.bf16.mxu0 0
      %1669 = vmatpush1.bf16.msra.mxu0 0
      %1670 = vmatprep.subr.bf16.mxu0 0
      %1671 = vmatpush1.bf16.msra.mxu0 0
      %1672 = vmatprep.subr.bf16.mxu0 0
      %1673 = vmatpush1.bf16.msra.mxu0 0
      %1674 = vmatprep.subr.bf16.mxu0 0
      %1675 = vmatpush1.bf16.msra.mxu0 0
      %1676 = vmatprep.subr.bf16.mxu0 0
      %1677 = vmatpush1.bf16.msra.mxu0 0
      %1678 = vmatprep.subr.bf16.mxu0 0
      %1679 = vmatpush1.bf16.msra.mxu0 0
      %1680 = vmatprep.subr.bf16.mxu0 0
      %1681 = vmatpush1.bf16.msra.mxu0 0
      %1682 = vmatprep.subr.bf16.mxu0 0
      %1683 = vmatpush1.bf16.msra.mxu0 0
      %1684 = vmatprep.subr.bf16.mxu0 0
      %1685 = vmatpush1.bf16.msra.mxu0 0
      %1686 = vmatprep.subr.bf16.mxu0 0
      %1687 = vmatpush1.bf16.msra.mxu0 0
      %1688 = vmatprep.subr.bf16.mxu0 0
      %1689 = vmatpush1.bf16.msra.mxu0 0
      %1690 = vmatprep.subr.bf16.mxu0 0
      %1691 = vmatpush1.bf16.msra.mxu0 0
      %1692 = vmatprep.subr.bf16.mxu0 0
      %1693 = vmatpush1.bf16.msra.mxu0 0
      %1694 = vmatprep.subr.bf16.mxu0 0
      %1695 = vmatpush1.bf16.msra.mxu0 0
      %1696 = vmatprep.subr.bf16.mxu0 0
      %1697 = vmatpush1.bf16.msra.mxu0 0
      %1698 = vmatprep.mubr.bf16.mxu0 0
      %1699 = vmatmul.mubr.bf16.gmra.mrb[0].mxu0 %v1664
      %v1700 = vpop.f32.mrb[0].mxu0
      %v1701 = vadd.f32 0.0, %v1700
      %v1702 = vpop.f32.mrb[0].mxu0
      %v1703 = vadd.f32 0.0, %v1702
      %v1704 = vpop.f32.mrb[0].mxu0
      %v1705 = vadd.f32 0.0, %v1704
      %v1706 = vpop.f32.mrb[0].mxu0
      %v1707 = vadd.f32 0.0, %v1706
      %1708 = vdwg.mxu0
      %v1709 = vadd.f32 %v1624, %v1701
      %v1710 = vadd.f32 %v1625, %v1703
      %v1711 = vadd.f32 %v1626, %v1705
      %v1712 = vadd.f32 %v1627, %v1707
      %s1713 = scalar_lea.vmem %s2, 192
      %v1714 = vld [vmem:[%s1713] sm:$0xf]
      %v1715 = vld [vmem:[%s1713 + $0x4] sm:$0xf]
      %v1718 = vunpack.c.l.b16 %v1714
      %v1719 = vunpack.c.l.b16 %v1715
      %v1720 = vpack.c.b16 %v1719, %v1718
      %v1725 = vunpack.c.l.b16 %v1539
      %v1726 = vunpack.c.h.b16 %v1539
      %v1727 = vunpack.c.l.b16 %v1540
      %v1728 = vunpack.c.l.b16 %v1541
      %v1729 = vunpack.c.h.b16 %v1541
      %v1730 = vunpack.c.l.b16 %v1542
      %v1731 = vpack.c.b16 %v1728, %v1725
      %v1732 = vpack.c.b16 %v1729, %v1726
      %v1733 = vpack.c.b16 %v1730, %v1727
      %1734 = vrot.lane.b32.xlu0 %v1731, 112
      %v1735 = vpop.permute.xlu0 %1734
      %1736 = vrot.lane.b32.xlu0 %v1732, 112
      %v1737 = vpop.permute.xlu0 %1736
      %1738 = vrot.lane.b32.xlu0 %v1733, 112
      %v1739 = vpop.permute.xlu0 %1738
      %v1740 = vsel %vm955, %v1735, %v1737
      %v1741 = vsel %vm955, %v1737, %v1739
      %v1745 = vsel %vm1178, %v1720, 0
      %1747 = vmatprep.subr.bf16.mxu0 %v1741
      %1748 = vmatpush1.bf16.msra.mxu0 %v1740
      %1749 = vmatprep.subr.bf16.mxu0 0
      %1750 = vmatpush1.bf16.msra.mxu0 0
      %1751 = vmatprep.subr.bf16.mxu0 0
      %1752 = vmatpush1.bf16.msra.mxu0 0
      %1753 = vmatprep.subr.bf16.mxu0 0
      %1754 = vmatpush1.bf16.msra.mxu0 0
      %1755 = vmatprep.subr.bf16.mxu0 0
      %1756 = vmatpush1.bf16.msra.mxu0 0
      %1757 = vmatprep.subr.bf16.mxu0 0
      %1758 = vmatpush1.bf16.msra.mxu0 0
      %1759 = vmatprep.subr.bf16.mxu0 0
      %1760 = vmatpush1.bf16.msra.mxu0 0
      %1761 = vmatprep.subr.bf16.mxu0 0
      %1762 = vmatpush1.bf16.msra.mxu0 0
      %1763 = vmatprep.subr.bf16.mxu0 0
      %1764 = vmatpush1.bf16.msra.mxu0 0
      %1765 = vmatprep.subr.bf16.mxu0 0
      %1766 = vmatpush1.bf16.msra.mxu0 0
      %1767 = vmatprep.subr.bf16.mxu0 0
      %1768 = vmatpush1.bf16.msra.mxu0 0
      %1769 = vmatprep.subr.bf16.mxu0 0
      %1770 = vmatpush1.bf16.msra.mxu0 0
      %1771 = vmatprep.subr.bf16.mxu0 0
      %1772 = vmatpush1.bf16.msra.mxu0 0
      %1773 = vmatprep.subr.bf16.mxu0 0
      %1774 = vmatpush1.bf16.msra.mxu0 0
      %1775 = vmatprep.subr.bf16.mxu0 0
      %1776 = vmatpush1.bf16.msra.mxu0 0
      %1777 = vmatprep.subr.bf16.mxu0 0
      %1778 = vmatpush1.bf16.msra.mxu0 0
      %1779 = vmatprep.mubr.bf16.mxu0 0
      %1780 = vmatmul.mubr.bf16.gmra.mrb[0].mxu0 %v1745
      %v1781 = vpop.f32.mrb[0].mxu0
      %v1782 = vadd.f32 0.0, %v1781
      %v1783 = vpop.f32.mrb[0].mxu0
      %v1784 = vadd.f32 0.0, %v1783
      %v1785 = vpop.f32.mrb[0].mxu0
      %v1786 = vadd.f32 0.0, %v1785
      %v1787 = vpop.f32.mrb[0].mxu0
      %v1788 = vadd.f32 0.0, %v1787
      %1789 = vdwg.mxu0
      %v1790 = vadd.f32 %v1709, %v1782
      %v1791 = vadd.f32 %v1710, %v1784
      %v1792 = vadd.f32 %v1711, %v1786
      %v1793 = vadd.f32 %v1712, %v1788
      %v1794 = vsel %vm1018, %v1539, 0
      %v1795 = vsel %vm1019, %v1540, 0
      %v1796 = vsel %vm1018, %v1541, 0
      %v1797 = vsel %vm1019, %v1542, 0
      %s1798 = scalar_lea.vmem %s2, 204
      %v1799 = vld [vmem:[%s1798] sm:$0xf]
      %v1800 = vld [vmem:[%s1798 + $0x4] sm:$0xf]
      %v1803 = vunpack.c.l.b16 %v1799
      %v1804 = vunpack.c.l.b16 %v1800
      %v1805 = vpack.c.b16 %v1804, %v1803
      %v1810 = vunpack.c.l.b16 %v1794
      %v1811 = vunpack.c.h.b16 %v1794
      %v1812 = vunpack.c.l.b16 %v1795
      %v1813 = vunpack.c.l.b16 %v1796
      %v1814 = vunpack.c.h.b16 %v1796
      %v1815 = vunpack.c.l.b16 %v1797
      %v1816 = vpack.c.b16 %v1813, %v1810
      %v1817 = vpack.c.b16 %v1814, %v1811
      %v1818 = vpack.c.b16 %v1815, %v1812
      %1819 = vrot.lane.b32.xlu0 %v1816, 111
      %v1820 = vpop.permute.xlu0 %1819
      %1821 = vrot.lane.b32.xlu0 %v1817, 111
      %v1822 = vpop.permute.xlu0 %1821
      %1823 = vrot.lane.b32.xlu0 %v1818, 111
      %v1824 = vpop.permute.xlu0 %1823
      %v1825 = vsel %vm335, %v1820, %v1822
      %v1826 = vsel %vm335, %v1822, %v1824
      %v1830 = vsel %vm1178, %v1805, 0
      %1832 = vmatprep.subr.bf16.mxu0 %v1826
      %1833 = vmatpush1.bf16.msra.mxu0 %v1825
      %1834 = vmatprep.subr.bf16.mxu0 0
      %1835 = vmatpush1.bf16.msra.mxu0 0
      %1836 = vmatprep.subr.bf16.mxu0 0
      %1837 = vmatpush1.bf16.msra.mxu0 0
      %1838 = vmatprep.subr.bf16.mxu0 0
      %1839 = vmatpush1.bf16.msra.mxu0 0
      %1840 = vmatprep.subr.bf16.mxu0 0
      %1841 = vmatpush1.bf16.msra.mxu0 0
      %1842 = vmatprep.subr.bf16.mxu0 0
      %1843 = vmatpush1.bf16.msra.mxu0 0
      %1844 = vmatprep.subr.bf16.mxu0 0
      %1845 = vmatpush1.bf16.msra.mxu0 0
      %1846 = vmatprep.subr.bf16.mxu0 0
      %1847 = vmatpush1.bf16.msra.mxu0 0
      %1848 = vmatprep.subr.bf16.mxu0 0
      %1849 = vmatpush1.bf16.msra.mxu0 0
      %1850 = vmatprep.subr.bf16.mxu0 0
      %1851 = vmatpush1.bf16.msra.mxu0 0
      %1852 = vmatprep.subr.bf16.mxu0 0
      %1853 = vmatpush1.bf16.msra.mxu0 0
      %1854 = vmatprep.subr.bf16.mxu0 0
      %1855 = vmatpush1.bf16.msra.mxu0 0
      %1856 = vmatprep.subr.bf16.mxu0 0
      %1857 = vmatpush1.bf16.msra.mxu0 0
      %1858 = vmatprep.subr.bf16.mxu0 0
      %1859 = vmatpush1.bf16.msra.mxu0 0
      %1860 = vmatprep.subr.bf16.mxu0 0
      %1861 = vmatpush1.bf16.msra.mxu0 0
      %1862 = vmatprep.subr.bf16.mxu0 0
      %1863 = vmatpush1.bf16.msra.mxu0 0
      %1864 = vmatprep.mubr.bf16.mxu0 0
      %1865 = vmatmul.mubr.bf16.gmra.mrb[0].mxu0 %v1830
      %v1866 = vpop.f32.mrb[0].mxu0
      %v1867 = vadd.f32 0.0, %v1866
      %v1868 = vpop.f32.mrb[0].mxu0
      %v1869 = vadd.f32 0.0, %v1868
      %v1870 = vpop.f32.mrb[0].mxu0
      %v1871 = vadd.f32 0.0, %v1870
      %v1872 = vpop.f32.mrb[0].mxu0
      %v1873 = vadd.f32 0.0, %v1872
      %1874 = vdwg.mxu0
      %v1875 = vadd.f32 %v1790, %v1867
      %v1876 = vadd.f32 %v1791, %v1869
      %v1877 = vadd.f32 %v1792, %v1871
      %v1878 = vadd.f32 %v1793, %v1873
      %v1879 = vld [vmem:[%s3] sm:$0xff]
      %v1880 = vld [vmem:[%s3 + $0x8] sm:$0xff]
      %1882 = vset.pattern.permute.xlu0 1
      %1883 = vperm.xlu0 %1882, %v1879
      %v1884 = vpop.permute.xlu0 %1883
      %1887 = vset.pattern.permute.xlu0 1
      %1888 = vperm.xlu0 %1887, %v1880
      %v1889 = vpop.permute.xlu0 %1888
      %v1891 = vadd.f32 %v1875, %v1884
      %v1892 = vadd.f32 %v1876, %v1884
      %v1893 = vadd.f32 %v1877, %v1889
      %v1894 = vadd.f32 %v1878, %v1889
      %v1895 = vmax.f32 %v1891, 0.0
      %v1896 = vmax.f32 %v1892, 0.0
      %v1897 = vmax.f32 %v1893, 0.0
      %v1898 = vmax.f32 %v1894, 0.0
      %v1899 = vpack.c.bf16 %v1897, %v1895
      %v1900 = vpack.c.bf16 %v1898, %v1896
      %v1903 = vunpack.c.l.b16 %v1899
      %v1904 = vunpack.c.l.b16 %v1900
      %v1905 = vunpack.c.h.b16 %v1899
      %v1906 = vunpack.c.h.b16 %v1900
      %v1907 = vpack.c.b16 %v1904, %v1903
      %v1908 = vpack.c.b16 %v1906, %v1905
      %1911 = vst [vmem:[#allocation2 + $0x4] sm:$0xff] %v1907
      %1912 = vst [vmem:[#allocation2 + $0x14] sm:$0xff] %v1908
      %v1913 = vld [vmem:[#allocation2] sm:$0xff]
      %v1914 = vld [vmem:[#allocation2 + $0x8] sm:$0xf]
      %v1915 = vld [vmem:[#allocation2 + $0x10] sm:$0xff]
      %v1916 = vld [vmem:[#allocation2 + $0x18] sm:$0xf]
      %v1917 = vsel %vm337, %v1913, 0
      %v1918 = vsel %vm338, %v1914, 0
      %v1919 = vsel %vm337, %v1915, 0
      %v1920 = vsel %vm338, %v1916, 0
      %s1921 = scalar_lea.vmem %s2, 216
      %v1922 = vld [vmem:[%s1921] sm:$0xf]
      %v1923 = vld [vmem:[%s1921 + $0x4] sm:$0xf]
      %v1924 = vld [vmem:[%s1921 + $0x8] sm:$0xf]
      %s1925 = scalar_lea.vmem %s2, 228
      %v1926 = vld [vmem:[%s1925] sm:$0xf]
      %v1927 = vld [vmem:[%s1925 + $0x4] sm:$0xf]
      %v1928 = vld [vmem:[%s1925 + $0x8] sm:$0xf]
      %v1932 = vunpack.c.l.b16 %v1926
      %v1933 = vunpack.c.l.b16 %v1927
      %v1934 = vunpack.c.l.b16 %v1928
      %v1935 = vpack.c.b16 %v1933, %v1932
      %v1936 = vpack.c.b16 %v1934, %v1934
      %v1941 = vunpack.c.l.b16 %v1913
      %v1942 = vunpack.c.h.b16 %v1913
      %v1943 = vunpack.c.l.b16 %v1914
      %v1944 = vunpack.c.l.b16 %v1915
      %v1945 = vunpack.c.h.b16 %v1915
      %v1946 = vunpack.c.l.b16 %v1916
      %v1947 = vpack.c.b16 %v1944, %v1941
      %v1948 = vpack.c.b16 %v1945, %v1942
      %v1949 = vpack.c.b16 %v1946, %v1943
      %1950 = vrot.lane.b32.xlu0 %v1947, 16
      %v1951 = vpop.permute.xlu0 %1950
      %1952 = vrot.lane.b32.xlu0 %v1948, 16
      %v1953 = vpop.permute.xlu0 %1952
      %1954 = vrot.lane.b32.xlu0 %v1949, 16
      %v1955 = vpop.permute.xlu0 %1954
      %v1956 = vsel %vm365, %v1951, %v1953
      %v1957 = vsel %vm365, %v1953, %v1955
      %v1961 = vsel %vm1178, %v1935, 0
      %v1964 = vsel %vm1178, %v1936, 0
      %1966 = vmatprep.subr.bf16.mxu0 %v1957
      %1967 = vmatpush1.bf16.msra.mxu0 %v1956
      %1968 = vmatprep.subr.bf16.mxu0 0
      %1969 = vmatpush1.bf16.msra.mxu0 0
      %1970 = vmatprep.subr.bf16.mxu0 0
      %1971 = vmatpush1.bf16.msra.mxu0 0
      %1972 = vmatprep.subr.bf16.mxu0 0
      %1973 = vmatpush1.bf16.msra.mxu0 0
      %1974 = vmatprep.subr.bf16.mxu0 0
      %1975 = vmatpush1.bf16.msra.mxu0 0
      %1976 = vmatprep.subr.bf16.mxu0 0
      %1977 = vmatpush1.bf16.msra.mxu0 0
      %1978 = vmatprep.subr.bf16.mxu0 0
      %1979 = vmatpush1.bf16.msra.mxu0 0
      %1980 = vmatprep.subr.bf16.mxu0 0
      %1981 = vmatpush1.bf16.msra.mxu0 0
      %1982 = vmatprep.subr.bf16.mxu0 0
      %1983 = vmatpush1.bf16.msra.mxu0 0
      %1984 = vmatprep.subr.bf16.mxu0 0
      %1985 = vmatpush1.bf16.msra.mxu0 0
      %1986 = vmatprep.subr.bf16.mxu0 0
      %1987 = vmatpush1.bf16.msra.mxu0 0
      %1988 = vmatprep.subr.bf16.mxu0 0
      %1989 = vmatpush1.bf16.msra.mxu0 0
      %1990 = vmatprep.subr.bf16.mxu0 0
      %1991 = vmatpush1.bf16.msra.mxu0 0
      %1992 = vmatprep.subr.bf16.mxu0 0
      %1993 = vmatpush1.bf16.msra.mxu0 0
      %1994 = vmatprep.subr.bf16.mxu0 0
      %1995 = vmatpush1.bf16.msra.mxu0 0
      %1996 = vmatprep.subr.bf16.mxu0 0
      %1997 = vmatpush1.bf16.msra.mxu0 0
      %1998 = vmatprep.mubr.bf16.mxu0 0
      %1999 = vmatmul.mubr.bf16.gmra.mrb[0].mxu0 %v1961
      %v2000 = vpop.f32.mrb[0].mxu0
      %v2001 = vadd.f32 0.0, %v2000
      %v2002 = vpop.f32.mrb[0].mxu0
      %v2003 = vadd.f32 0.0, %v2002
      %v2004 = vpop.f32.mrb[0].mxu0
      %v2005 = vadd.f32 0.0, %v2004
      %v2006 = vpop.f32.mrb[0].mxu0
      %v2007 = vadd.f32 0.0, %v2006
      %2008 = vmatprep.mubr.bf16.mxu0 0
      %2009 = vmatmul.mubr.bf16.gmra.mrb[0].mxu0 %v1964
      %v2010 = vpop.f32.mrb[0].mxu0
      %v2011 = vadd.f32 0.0, %v2010
      %v2012 = vpop.f32.mrb[0].mxu0
      %v2013 = vadd.f32 0.0, %v2012
      %v2014 = vpop.f32.mrb[0].mxu0
      %v2015 = vpop.f32.mrb[0].mxu0
      %2016 = vdwg.mxu0
      %v2020 = vunpack.c.l.b16 %v1922
      %v2021 = vunpack.c.l.b16 %v1923
      %v2022 = vunpack.c.l.b16 %v1924
      %v2023 = vpack.c.b16 %v2021, %v2020
      %v2024 = vpack.c.b16 %v2022, %v2022
      %v2029 = vunpack.c.l.b16 %v1917
      %v2030 = vunpack.c.h.b16 %v1917
      %v2031 = vunpack.c.l.b16 %v1918
      %v2032 = vunpack.c.l.b16 %v1919
      %v2033 = vunpack.c.h.b16 %v1919
      %v2034 = vunpack.c.l.b16 %v1920
      %v2035 = vpack.c.b16 %v2032, %v2029
      %v2036 = vpack.c.b16 %v2033, %v2030
      %v2037 = vpack.c.b16 %v2034, %v2031
      %2038 = vrot.lane.b32.xlu0 %v2035, 17
      %v2039 = vpop.permute.xlu0 %2038
      %2040 = vrot.lane.b32.xlu0 %v2036, 17
      %v2041 = vpop.permute.xlu0 %2040
      %2042 = vrot.lane.b32.xlu0 %v2037, 17
      %v2043 = vpop.permute.xlu0 %2042
      %v2044 = vsel %vm444, %v2039, %v2041
      %v2045 = vsel %vm444, %v2041, %v2043
      %v2049 = vsel %vm1178, %v2023, 0
      %v2052 = vsel %vm1178, %v2024, 0
      %2054 = vmatprep.subr.bf16.mxu0 %v2045
      %2055 = vmatpush1.bf16.msra.mxu0 %v2044
      %2056 = vmatprep.subr.bf16.mxu0 0
      %2057 = vmatpush1.bf16.msra.mxu0 0
      %2058 = vmatprep.subr.bf16.mxu0 0
      %2059 = vmatpush1.bf16.msra.mxu0 0
      %2060 = vmatprep.subr.bf16.mxu0 0
      %2061 = vmatpush1.bf16.msra.mxu0 0
      %2062 = vmatprep.subr.bf16.mxu0 0
      %2063 = vmatpush1.bf16.msra.mxu0 0
      %2064 = vmatprep.subr.bf16.mxu0 0
      %2065 = vmatpush1.bf16.msra.mxu0 0
      %2066 = vmatprep.subr.bf16.mxu0 0
      %2067 = vmatpush1.bf16.msra.mxu0 0
      %2068 = vmatprep.subr.bf16.mxu0 0
      %2069 = vmatpush1.bf16.msra.mxu0 0
      %2070 = vmatprep.subr.bf16.mxu0 0
      %2071 = vmatpush1.bf16.msra.mxu0 0
      %2072 = vmatprep.subr.bf16.mxu0 0
      %2073 = vmatpush1.bf16.msra.mxu0 0
      %2074 = vmatprep.subr.bf16.mxu0 0
      %2075 = vmatpush1.bf16.msra.mxu0 0
      %2076 = vmatprep.subr.bf16.mxu0 0
      %2077 = vmatpush1.bf16.msra.mxu0 0
      %2078 = vmatprep.subr.bf16.mxu0 0
      %2079 = vmatpush1.bf16.msra.mxu0 0
      %2080 = vmatprep.subr.bf16.mxu0 0
      %2081 = vmatpush1.bf16.msra.mxu0 0
      %2082 = vmatprep.subr.bf16.mxu0 0
      %2083 = vmatpush1.bf16.msra.mxu0 0
      %2084 = vmatprep.subr.bf16.mxu0 0
      %2085 = vmatpush1.bf16.msra.mxu0 0
      %2086 = vmatprep.mubr.bf16.mxu0 0
      %2087 = vmatmul.mubr.bf16.gmra.mrb[0].mxu0 %v2049
      %v2088 = vpop.f32.mrb[0].mxu0
      %v2089 = vadd.f32 %v2001, %v2088
      %v2090 = vpop.f32.mrb[0].mxu0
      %v2091 = vadd.f32 %v2003, %v2090
      %v2092 = vpop.f32.mrb[0].mxu0
      %v2093 = vadd.f32 %v2005, %v2092
      %v2094 = vpop.f32.mrb[0].mxu0
      %v2095 = vadd.f32 %v2007, %v2094
      %2096 = vmatprep.mubr.bf16.mxu0 0
      %2097 = vmatmul.mubr.bf16.gmra.mrb[0].mxu0 %v2052
      %v2098 = vpop.f32.mrb[0].mxu0
      %v2099 = vadd.f32 %v2011, %v2098
      %v2100 = vpop.f32.mrb[0].mxu0
      %v2101 = vadd.f32 %v2013, %v2100
      %v2102 = vpop.f32.mrb[0].mxu0
      %v2103 = vpop.f32.mrb[0].mxu0
      %2104 = vdwg.mxu0
      %v2105 = vsel %vm510, %v1913, 0
      %v2106 = vsel %vm511, %v1914, 0
      %v2107 = vsel %vm510, %v1915, 0
      %v2108 = vsel %vm511, %v1916, 0
      %s2109 = scalar_lea.vmem %s2, 240
      %v2110 = vld [vmem:[%s2109] sm:$0xf]
      %v2111 = vld [vmem:[%s2109 + $0x4] sm:$0xf]
      %v2112 = vld [vmem:[%s2109 + $0x8] sm:$0xf]
      %v2116 = vunpack.c.l.b16 %v2110
      %v2117 = vunpack.c.l.b16 %v2111
      %v2118 = vunpack.c.l.b16 %v2112
      %v2119 = vpack.c.b16 %v2117, %v2116
      %v2120 = vpack.c.b16 %v2118, %v2118
      %v2125 = vunpack.c.l.b16 %v2105
      %v2126 = vunpack.c.h.b16 %v2105
      %v2127 = vunpack.c.l.b16 %v2106
      %v2128 = vunpack.c.l.b16 %v2107
      %v2129 = vunpack.c.h.b16 %v2107
      %v2130 = vunpack.c.l.b16 %v2108
      %v2131 = vpack.c.b16 %v2128, %v2125
      %v2132 = vpack.c.b16 %v2129, %v2126
      %v2133 = vpack.c.b16 %v2130, %v2127
      %2134 = vrot.lane.b32.xlu0 %v2131, 15
      %v2135 = vpop.permute.xlu0 %2134
      %2136 = vrot.lane.b32.xlu0 %v2132, 15
      %v2137 = vpop.permute.xlu0 %2136
      %2138 = vrot.lane.b32.xlu0 %v2133, 15
      %v2139 = vpop.permute.xlu0 %2138
      %v2140 = vsel %vm536, %v2135, %v2137
      %v2141 = vsel %vm536, %v2137, %v2139
      %v2145 = vsel %vm1178, %v2119, 0
      %v2148 = vsel %vm1178, %v2120, 0
      %2150 = vmatprep.subr.bf16.mxu0 %v2141
      %2151 = vmatpush1.bf16.msra.mxu0 %v2140
      %2152 = vmatprep.subr.bf16.mxu0 0
      %2153 = vmatpush1.bf16.msra.mxu0 0
      %2154 = vmatprep.subr.bf16.mxu0 0
      %2155 = vmatpush1.bf16.msra.mxu0 0
      %2156 = vmatprep.subr.bf16.mxu0 0
      %2157 = vmatpush1.bf16.msra.mxu0 0
      %2158 = vmatprep.subr.bf16.mxu0 0
      %2159 = vmatpush1.bf16.msra.mxu0 0
      %2160 = vmatprep.subr.bf16.mxu0 0
      %2161 = vmatpush1.bf16.msra.mxu0 0
      %2162 = vmatprep.subr.bf16.mxu0 0
      %2163 = vmatpush1.bf16.msra.mxu0 0
      %2164 = vmatprep.subr.bf16.mxu0 0
      %2165 = vmatpush1.bf16.msra.mxu0 0
      %2166 = vmatprep.subr.bf16.mxu0 0
      %2167 = vmatpush1.bf16.msra.mxu0 0
      %2168 = vmatprep.subr.bf16.mxu0 0
      %2169 = vmatpush1.bf16.msra.mxu0 0
      %2170 = vmatprep.subr.bf16.mxu0 0
      %2171 = vmatpush1.bf16.msra.mxu0 0
      %2172 = vmatprep.subr.bf16.mxu0 0
      %2173 = vmatpush1.bf16.msra.mxu0 0
      %2174 = vmatprep.subr.bf16.mxu0 0
      %2175 = vmatpush1.bf16.msra.mxu0 0
      %2176 = vmatprep.subr.bf16.mxu0 0
      %2177 = vmatpush1.bf16.msra.mxu0 0
      %2178 = vmatprep.subr.bf16.mxu0 0
      %2179 = vmatpush1.bf16.msra.mxu0 0
      %2180 = vmatprep.subr.bf16.mxu0 0
      %2181 = vmatpush1.bf16.msra.mxu0 0
      %2182 = vmatprep.mubr.bf16.mxu0 0
      %2183 = vmatmul.mubr.bf16.gmra.mrb[0].mxu0 %v2145
      %v2184 = vpop.f32.mrb[0].mxu0
      %v2185 = vadd.f32 0.0, %v2184
      %v2186 = vpop.f32.mrb[0].mxu0
      %v2187 = vadd.f32 0.0, %v2186
      %v2188 = vpop.f32.mrb[0].mxu0
      %v2189 = vadd.f32 0.0, %v2188
      %v2190 = vpop.f32.mrb[0].mxu0
      %v2191 = vadd.f32 0.0, %v2190
      %2192 = vmatprep.mubr.bf16.mxu0 0
      %2193 = vmatmul.mubr.bf16.gmra.mrb[0].mxu0 %v2148
      %v2194 = vpop.f32.mrb[0].mxu0
      %v2195 = vadd.f32 0.0, %v2194
      %v2196 = vpop.f32.mrb[0].mxu0
      %v2197 = vadd.f32 0.0, %v2196
      %v2198 = vpop.f32.mrb[0].mxu0
      %v2199 = vpop.f32.mrb[0].mxu0
      %2200 = vdwg.mxu0
      %v2201 = vadd.f32 %v2089, %v2185
      %v2202 = vadd.f32 %v2091, %v2187
      %v2203 = vadd.f32 %v2093, %v2189
      %v2204 = vadd.f32 %v2095, %v2191
      %v2205 = vadd.f32 %v2099, %v2195
      %v2206 = vadd.f32 %v2101, %v2197
      %v2207 = vsel %vm600, %v1913, 0
      %v2208 = vsel %vm601, %v1914, 0
      %v2209 = vsel %vm600, %v1915, 0
      %v2210 = vsel %vm601, %v1916, 0
      %s2211 = scalar_lea.vmem %s2, 252
      %v2212 = vld [vmem:[%s2211] sm:$0xf]
      %v2213 = vld [vmem:[%s2211 + $0x4] sm:$0xf]
      %v2214 = vld [vmem:[%s2211 + $0x8] sm:$0xf]
      %v2218 = vunpack.c.l.b16 %v2212
      %v2219 = vunpack.c.l.b16 %v2213
      %v2220 = vunpack.c.l.b16 %v2214
      %v2221 = vpack.c.b16 %v2219, %v2218
      %v2222 = vpack.c.b16 %v2220, %v2220
      %v2227 = vunpack.c.l.b16 %v2207
      %v2228 = vunpack.c.h.b16 %v2207
      %v2229 = vunpack.c.l.b16 %v2208
      %v2230 = vunpack.c.l.b16 %v2209
      %v2231 = vunpack.c.h.b16 %v2209
      %v2232 = vunpack.c.l.b16 %v2210
      %v2233 = vpack.c.b16 %v2230, %v2227
      %v2234 = vpack.c.b16 %v2231, %v2228
      %v2235 = vpack.c.b16 %v2232, %v2229
      %2236 = vrot.lane.b32.xlu0 %v2233, 1
      %v2237 = vpop.permute.xlu0 %2236
      %2238 = vrot.lane.b32.xlu0 %v2234, 1
      %v2239 = vpop.permute.xlu0 %2238
      %2240 = vrot.lane.b32.xlu0 %v2235, 1
      %v2241 = vpop.permute.xlu0 %2240
      %v2242 = vsel %vm626, %v2237, %v2239
      %v2243 = vsel %vm626, %v2239, %v2241
      %v2247 = vsel %vm1178, %v2221, 0
      %v2250 = vsel %vm1178, %v2222, 0
      %2252 = vmatprep.subr.bf16.mxu0 %v2243
      %2253 = vmatpush1.bf16.msra.mxu0 %v2242
      %2254 = vmatprep.subr.bf16.mxu0 0
      %2255 = vmatpush1.bf16.msra.mxu0 0
      %2256 = vmatprep.subr.bf16.mxu0 0
      %2257 = vmatpush1.bf16.msra.mxu0 0
      %2258 = vmatprep.subr.bf16.mxu0 0
      %2259 = vmatpush1.bf16.msra.mxu0 0
      %2260 = vmatprep.subr.bf16.mxu0 0
      %2261 = vmatpush1.bf16.msra.mxu0 0
      %2262 = vmatprep.subr.bf16.mxu0 0
      %2263 = vmatpush1.bf16.msra.mxu0 0
      %2264 = vmatprep.subr.bf16.mxu0 0
      %2265 = vmatpush1.bf16.msra.mxu0 0
      %2266 = vmatprep.subr.bf16.mxu0 0
      %2267 = vmatpush1.bf16.msra.mxu0 0
      %2268 = vmatprep.subr.bf16.mxu0 0
      %2269 = vmatpush1.bf16.msra.mxu0 0
      %2270 = vmatprep.subr.bf16.mxu0 0
      %2271 = vmatpush1.bf16.msra.mxu0 0
      %2272 = vmatprep.subr.bf16.mxu0 0
      %2273 = vmatpush1.bf16.msra.mxu0 0
      %2274 = vmatprep.subr.bf16.mxu0 0
      %2275 = vmatpush1.bf16.msra.mxu0 0
      %2276 = vmatprep.subr.bf16.mxu0 0
      %2277 = vmatpush1.bf16.msra.mxu0 0
      %2278 = vmatprep.subr.bf16.mxu0 0
      %2279 = vmatpush1.bf16.msra.mxu0 0
      %2280 = vmatprep.subr.bf16.mxu0 0
      %2281 = vmatpush1.bf16.msra.mxu0 0
      %2282 = vmatprep.subr.bf16.mxu0 0
      %2283 = vmatpush1.bf16.msra.mxu0 0
      %2284 = vmatprep.mubr.bf16.mxu0 0
      %2285 = vmatmul.mubr.bf16.gmra.mrb[0].mxu0 %v2247
      %v2286 = vpop.f32.mrb[0].mxu0
      %v2287 = vadd.f32 0.0, %v2286
      %v2288 = vpop.f32.mrb[0].mxu0
      %v2289 = vadd.f32 0.0, %v2288
      %v2290 = vpop.f32.mrb[0].mxu0
      %v2291 = vadd.f32 0.0, %v2290
      %v2292 = vpop.f32.mrb[0].mxu0
      %v2293 = vadd.f32 0.0, %v2292
      %2294 = vmatprep.mubr.bf16.mxu0 0
      %2295 = vmatmul.mubr.bf16.gmra.mrb[0].mxu0 %v2250
      %v2296 = vpop.f32.mrb[0].mxu0
      %v2297 = vadd.f32 0.0, %v2296
      %v2298 = vpop.f32.mrb[0].mxu0
      %v2299 = vadd.f32 0.0, %v2298
      %v2300 = vpop.f32.mrb[0].mxu0
      %v2301 = vpop.f32.mrb[0].mxu0
      %2302 = vdwg.mxu0
      %v2303 = vadd.f32 %v2201, %v2287
      %v2304 = vadd.f32 %v2202, %v2289
      %v2305 = vadd.f32 %v2203, %v2291
      %v2306 = vadd.f32 %v2204, %v2293
      %v2307 = vadd.f32 %v2205, %v2297
      %v2308 = vadd.f32 %v2206, %v2299
      %v2309 = vld [vmem:[#allocation2 + $0x4] sm:$0xff]
      %v2310 = vld [vmem:[#allocation2 + $0x14] sm:$0xff]
      %s2311 = scalar_lea.vmem %s2, 264
      %v2312 = vld [vmem:[%s2311] sm:$0xf]
      %v2313 = vld [vmem:[%s2311 + $0x4] sm:$0xf]
      %v2314 = vld [vmem:[%s2311 + $0x8] sm:$0xf]
      %v2318 = vunpack.c.l.b16 %v2312
      %v2319 = vunpack.c.l.b16 %v2313
      %v2320 = vunpack.c.l.b16 %v2314
      %v2321 = vpack.c.b16 %v2319, %v2318
      %v2322 = vpack.c.b16 %v2320, %v2320
      %v2325 = vunpack.c.l.b16 %v2309
      %v2326 = vunpack.c.h.b16 %v2309
      %v2327 = vunpack.c.l.b16 %v2310
      %v2328 = vunpack.c.h.b16 %v2310
      %v2329 = vpack.c.b16 %v2327, %v2325
      %v2330 = vpack.c.b16 %v2328, %v2326
      %v2334 = vsel %vm1178, %v2321, 0
      %v2337 = vsel %vm1178, %v2322, 0
      %2339 = vmatprep.subr.bf16.mxu0 %v2330
      %2340 = vmatpush1.bf16.msra.mxu0 %v2329
      %2341 = vmatprep.subr.bf16.mxu0 0
      %2342 = vmatpush1.bf16.msra.mxu0 0
      %2343 = vmatprep.subr.bf16.mxu0 0
      %2344 = vmatpush1.bf16.msra.mxu0 0
      %2345 = vmatprep.subr.bf16.mxu0 0
      %2346 = vmatpush1.bf16.msra.mxu0 0
      %2347 = vmatprep.subr.bf16.mxu0 0
      %2348 = vmatpush1.bf16.msra.mxu0 0
      %2349 = vmatprep.subr.bf16.mxu0 0
      %2350 = vmatpush1.bf16.msra.mxu0 0
      %2351 = vmatprep.subr.bf16.mxu0 0
      %2352 = vmatpush1.bf16.msra.mxu0 0
      %2353 = vmatprep.subr.bf16.mxu0 0
      %2354 = vmatpush1.bf16.msra.mxu0 0
      %2355 = vmatprep.subr.bf16.mxu0 0
      %2356 = vmatpush1.bf16.msra.mxu0 0
      %2357 = vmatprep.subr.bf16.mxu0 0
      %2358 = vmatpush1.bf16.msra.mxu0 0
      %2359 = vmatprep.subr.bf16.mxu0 0
      %2360 = vmatpush1.bf16.msra.mxu0 0
      %2361 = vmatprep.subr.bf16.mxu0 0
      %2362 = vmatpush1.bf16.msra.mxu0 0
      %2363 = vmatprep.subr.bf16.mxu0 0
      %2364 = vmatpush1.bf16.msra.mxu0 0
      %2365 = vmatprep.subr.bf16.mxu0 0
      %2366 = vmatpush1.bf16.msra.mxu0 0
      %2367 = vmatprep.subr.bf16.mxu0 0
      %2368 = vmatpush1.bf16.msra.mxu0 0
      %2369 = vmatprep.subr.bf16.mxu0 0
      %2370 = vmatpush1.bf16.msra.mxu0 0
      %2371 = vmatprep.mubr.bf16.mxu0 0
      %2372 = vmatmul.mubr.bf16.gmra.mrb[0].mxu0 %v2334
      %v2373 = vpop.f32.mrb[0].mxu0
      %v2374 = vadd.f32 0.0, %v2373
      %v2375 = vpop.f32.mrb[0].mxu0
      %v2376 = vadd.f32 0.0, %v2375
      %v2377 = vpop.f32.mrb[0].mxu0
      %v2378 = vadd.f32 0.0, %v2377
      %v2379 = vpop.f32.mrb[0].mxu0
      %v2380 = vadd.f32 0.0, %v2379
      %2381 = vmatprep.mubr.bf16.mxu0 0
      %2382 = vmatmul.mubr.bf16.gmra.mrb[0].mxu0 %v2337
      %v2383 = vpop.f32.mrb[0].mxu0
      %v2384 = vadd.f32 0.0, %v2383
      %v2385 = vpop.f32.mrb[0].mxu0
      %v2386 = vadd.f32 0.0, %v2385
      %v2387 = vpop.f32.mrb[0].mxu0
      %v2388 = vpop.f32.mrb[0].mxu0
      %2389 = vdwg.mxu0
      %v2390 = vadd.f32 %v2303, %v2374
      %v2391 = vadd.f32 %v2304, %v2376
      %v2392 = vadd.f32 %v2305, %v2378
      %v2393 = vadd.f32 %v2306, %v2380
      %v2394 = vadd.f32 %v2307, %v2384
      %v2395 = vadd.f32 %v2308, %v2386
      %v2396 = vld [vmem:[#allocation2 + $0x4] sm:$0xff]
      %v2397 = vld [vmem:[#allocation2 + $0xc] sm:$0xf]
      %v2398 = vld [vmem:[#allocation2 + $0x14] sm:$0xff]
      %v2399 = vld [vmem:[#allocation2 + $0x1c] sm:$0xf]
      %v2400 = vsel %vm761, %v2396, 0
      %v2401 = vsel %vm762, %v2397, 0
      %v2402 = vsel %vm761, %v2398, 0
      %v2403 = vsel %vm762, %v2399, 0
      %s2404 = scalar_lea.vmem %s2, 276
      %v2405 = vld [vmem:[%s2404] sm:$0xf]
      %v2406 = vld [vmem:[%s2404 + $0x4] sm:$0xf]
      %v2407 = vld [vmem:[%s2404 + $0x8] sm:$0xf]
      %v2411 = vunpack.c.l.b16 %v2405
      %v2412 = vunpack.c.l.b16 %v2406
      %v2413 = vunpack.c.l.b16 %v2407
      %v2414 = vpack.c.b16 %v2412, %v2411
      %v2415 = vpack.c.b16 %v2413, %v2413
      %v2420 = vunpack.c.l.b16 %v2400
      %v2421 = vunpack.c.h.b16 %v2400
      %v2422 = vunpack.c.l.b16 %v2401
      %v2423 = vunpack.c.l.b16 %v2402
      %v2424 = vunpack.c.h.b16 %v2402
      %v2425 = vunpack.c.l.b16 %v2403
      %v2426 = vpack.c.b16 %v2423, %v2420
      %v2427 = vpack.c.b16 %v2424, %v2421
      %v2428 = vpack.c.b16 %v2425, %v2422
      %2429 = vrot.lane.b32.xlu0 %v2426, 127
      %v2430 = vpop.permute.xlu0 %2429
      %2431 = vrot.lane.b32.xlu0 %v2427, 127
      %v2432 = vpop.permute.xlu0 %2431
      %2433 = vrot.lane.b32.xlu0 %v2428, 127
      %v2434 = vpop.permute.xlu0 %2433
      %v2435 = vsel %vm598, %v2430, %v2432
      %v2436 = vsel %vm598, %v2432, %v2434
      %v2440 = vsel %vm1178, %v2414, 0
      %v2443 = vsel %vm1178, %v2415, 0
      %2445 = vmatprep.subr.bf16.mxu0 %v2436
      %2446 = vmatpush1.bf16.msra.mxu0 %v2435
      %2447 = vmatprep.subr.bf16.mxu0 0
      %2448 = vmatpush1.bf16.msra.mxu0 0
      %2449 = vmatprep.subr.bf16.mxu0 0
      %2450 = vmatpush1.bf16.msra.mxu0 0
      %2451 = vmatprep.subr.bf16.mxu0 0
      %2452 = vmatpush1.bf16.msra.mxu0 0
      %2453 = vmatprep.subr.bf16.mxu0 0
      %2454 = vmatpush1.bf16.msra.mxu0 0
      %2455 = vmatprep.subr.bf16.mxu0 0
      %2456 = vmatpush1.bf16.msra.mxu0 0
      %2457 = vmatprep.subr.bf16.mxu0 0
      %2458 = vmatpush1.bf16.msra.mxu0 0
      %2459 = vmatprep.subr.bf16.mxu0 0
      %2460 = vmatpush1.bf16.msra.mxu0 0
      %2461 = vmatprep.subr.bf16.mxu0 0
      %2462 = vmatpush1.bf16.msra.mxu0 0
      %2463 = vmatprep.subr.bf16.mxu0 0
      %2464 = vmatpush1.bf16.msra.mxu0 0
      %2465 = vmatprep.subr.bf16.mxu0 0
      %2466 = vmatpush1.bf16.msra.mxu0 0
      %2467 = vmatprep.subr.bf16.mxu0 0
      %2468 = vmatpush1.bf16.msra.mxu0 0
      %2469 = vmatprep.subr.bf16.mxu0 0
      %2470 = vmatpush1.bf16.msra.mxu0 0
      %2471 = vmatprep.subr.bf16.mxu0 0
      %2472 = vmatpush1.bf16.msra.mxu0 0
      %2473 = vmatprep.subr.bf16.mxu0 0
      %2474 = vmatpush1.bf16.msra.mxu0 0
      %2475 = vmatprep.subr.bf16.mxu0 0
      %2476 = vmatpush1.bf16.msra.mxu0 0
      %2477 = vmatprep.mubr.bf16.mxu0 0
      %2478 = vmatmul.mubr.bf16.gmra.mrb[0].mxu0 %v2440
      %v2479 = vpop.f32.mrb[0].mxu0
      %v2480 = vadd.f32 0.0, %v2479
      %v2481 = vpop.f32.mrb[0].mxu0
      %v2482 = vadd.f32 0.0, %v2481
      %v2483 = vpop.f32.mrb[0].mxu0
      %v2484 = vadd.f32 0.0, %v2483
      %v2485 = vpop.f32.mrb[0].mxu0
      %v2486 = vadd.f32 0.0, %v2485
      %2487 = vmatprep.mubr.bf16.mxu0 0
      %2488 = vmatmul.mubr.bf16.gmra.mrb[0].mxu0 %v2443
      %v2489 = vpop.f32.mrb[0].mxu0
      %v2490 = vadd.f32 0.0, %v2489
      %v2491 = vpop.f32.mrb[0].mxu0
      %v2492 = vadd.f32 0.0, %v2491
      %v2493 = vpop.f32.mrb[0].mxu0
      %v2494 = vpop.f32.mrb[0].mxu0
      %2495 = vdwg.mxu0
      %v2496 = vadd.f32 %v2390, %v2480
      %v2497 = vadd.f32 %v2391, %v2482
      %v2498 = vadd.f32 %v2392, %v2484
      %v2499 = vadd.f32 %v2393, %v2486
      %v2500 = vadd.f32 %v2394, %v2490
      %v2501 = vadd.f32 %v2395, %v2492
      %v2502 = vsel %vm849, %v2396, 0
      %v2503 = vsel %vm850, %v2397, 0
      %v2504 = vsel %vm849, %v2398, 0
      %v2505 = vsel %vm850, %v2399, 0
      %s2506 = scalar_lea.vmem %s2, 288
      %v2507 = vld [vmem:[%s2506] sm:$0xf]
      %v2508 = vld [vmem:[%s2506 + $0x4] sm:$0xf]
      %v2509 = vld [vmem:[%s2506 + $0x8] sm:$0xf]
      %v2513 = vunpack.c.l.b16 %v2507
      %v2514 = vunpack.c.l.b16 %v2508
      %v2515 = vunpack.c.l.b16 %v2509
      %v2516 = vpack.c.b16 %v2514, %v2513
      %v2517 = vpack.c.b16 %v2515, %v2515
      %v2522 = vunpack.c.l.b16 %v2502
      %v2523 = vunpack.c.h.b16 %v2502
      %v2524 = vunpack.c.l.b16 %v2503
      %v2525 = vunpack.c.l.b16 %v2504
      %v2526 = vunpack.c.h.b16 %v2504
      %v2527 = vunpack.c.l.b16 %v2505
      %v2528 = vpack.c.b16 %v2525, %v2522
      %v2529 = vpack.c.b16 %v2526, %v2523
      %v2530 = vpack.c.b16 %v2527, %v2524
      %2531 = vrot.lane.b32.xlu0 %v2528, 113
      %v2532 = vpop.permute.xlu0 %2531
      %2533 = vrot.lane.b32.xlu0 %v2529, 113
      %v2534 = vpop.permute.xlu0 %2533
      %2535 = vrot.lane.b32.xlu0 %v2530, 113
      %v2536 = vpop.permute.xlu0 %2535
      %v2537 = vsel %vm508, %v2532, %v2534
      %v2538 = vsel %vm508, %v2534, %v2536
      %v2542 = vsel %vm1178, %v2516, 0
      %v2545 = vsel %vm1178, %v2517, 0
      %2547 = vmatprep.subr.bf16.mxu0 %v2538
      %2548 = vmatpush1.bf16.msra.mxu0 %v2537
      %2549 = vmatprep.subr.bf16.mxu0 0
      %2550 = vmatpush1.bf16.msra.mxu0 0
      %2551 = vmatprep.subr.bf16.mxu0 0
      %2552 = vmatpush1.bf16.msra.mxu0 0
      %2553 = vmatprep.subr.bf16.mxu0 0
      %2554 = vmatpush1.bf16.msra.mxu0 0
      %2555 = vmatprep.subr.bf16.mxu0 0
      %2556 = vmatpush1.bf16.msra.mxu0 0
      %2557 = vmatprep.subr.bf16.mxu0 0
      %2558 = vmatpush1.bf16.msra.mxu0 0
      %2559 = vmatprep.subr.bf16.mxu0 0
      %2560 = vmatpush1.bf16.msra.mxu0 0
      %2561 = vmatprep.subr.bf16.mxu0 0
      %2562 = vmatpush1.bf16.msra.mxu0 0
      %2563 = vmatprep.subr.bf16.mxu0 0
      %2564 = vmatpush1.bf16.msra.mxu0 0
      %2565 = vmatprep.subr.bf16.mxu0 0
      %2566 = vmatpush1.bf16.msra.mxu0 0
      %2567 = vmatprep.subr.bf16.mxu0 0
      %2568 = vmatpush1.bf16.msra.mxu0 0
      %2569 = vmatprep.subr.bf16.mxu0 0
      %2570 = vmatpush1.bf16.msra.mxu0 0
      %2571 = vmatprep.subr.bf16.mxu0 0
      %2572 = vmatpush1.bf16.msra.mxu0 0
      %2573 = vmatprep.subr.bf16.mxu0 0
      %2574 = vmatpush1.bf16.msra.mxu0 0
      %2575 = vmatprep.subr.bf16.mxu0 0
      %2576 = vmatpush1.bf16.msra.mxu0 0
      %2577 = vmatprep.subr.bf16.mxu0 0
      %2578 = vmatpush1.bf16.msra.mxu0 0
      %2579 = vmatprep.mubr.bf16.mxu0 0
      %2580 = vmatmul.mubr.bf16.gmra.mrb[0].mxu0 %v2542
      %v2581 = vpop.f32.mrb[0].mxu0
      %v2582 = vadd.f32 0.0, %v2581
      %v2583 = vpop.f32.mrb[0].mxu0
      %v2584 = vadd.f32 0.0, %v2583
      %v2585 = vpop.f32.mrb[0].mxu0
      %v2586 = vadd.f32 0.0, %v2585
      %v2587 = vpop.f32.mrb[0].mxu0
      %v2588 = vadd.f32 0.0, %v2587
      %2589 = vmatprep.mubr.bf16.mxu0 0
      %2590 = vmatmul.mubr.bf16.gmra.mrb[0].mxu0 %v2545
      %v2591 = vpop.f32.mrb[0].mxu0
      %v2592 = vadd.f32 0.0, %v2591
      %v2593 = vpop.f32.mrb[0].mxu0
      %v2594 = vadd.f32 0.0, %v2593
      %v2595 = vpop.f32.mrb[0].mxu0
      %v2596 = vpop.f32.mrb[0].mxu0
      %2597 = vdwg.mxu0
      %v2598 = vadd.f32 %v2496, %v2582
      %v2599 = vadd.f32 %v2497, %v2584
      %v2600 = vadd.f32 %v2498, %v2586
      %v2601 = vadd.f32 %v2499, %v2588
      %v2602 = vadd.f32 %v2500, %v2592
      %v2603 = vadd.f32 %v2501, %v2594
      %s2604 = scalar_lea.vmem %s2, 300
      %v2605 = vld [vmem:[%s2604] sm:$0xf]
      %v2606 = vld [vmem:[%s2604 + $0x4] sm:$0xf]
      %v2607 = vld [vmem:[%s2604 + $0x8] sm:$0xf]
      %v2611 = vunpack.c.l.b16 %v2605
      %v2612 = vunpack.c.l.b16 %v2606
      %v2613 = vunpack.c.l.b16 %v2607
      %v2614 = vpack.c.b16 %v2612, %v2611
      %v2615 = vpack.c.b16 %v2613, %v2613
      %v2620 = vunpack.c.l.b16 %v2396
      %v2621 = vunpack.c.h.b16 %v2396
      %v2622 = vunpack.c.l.b16 %v2397
      %v2623 = vunpack.c.l.b16 %v2398
      %v2624 = vunpack.c.h.b16 %v2398
      %v2625 = vunpack.c.l.b16 %v2399
      %v2626 = vpack.c.b16 %v2623, %v2620
      %v2627 = vpack.c.b16 %v2624, %v2621
      %v2628 = vpack.c.b16 %v2625, %v2622
      %2629 = vrot.lane.b32.xlu0 %v2626, 112
      %v2630 = vpop.permute.xlu0 %2629
      %2631 = vrot.lane.b32.xlu0 %v2627, 112
      %v2632 = vpop.permute.xlu0 %2631
      %2633 = vrot.lane.b32.xlu0 %v2628, 112
      %v2634 = vpop.permute.xlu0 %2633
      %v2635 = vsel %vm955, %v2630, %v2632
      %v2636 = vsel %vm955, %v2632, %v2634
      %v2640 = vsel %vm1178, %v2614, 0
      %v2643 = vsel %vm1178, %v2615, 0
      %2645 = vmatprep.subr.bf16.mxu0 %v2636
      %2646 = vmatpush1.bf16.msra.mxu0 %v2635
      %2647 = vmatprep.subr.bf16.mxu0 0
      %2648 = vmatpush1.bf16.msra.mxu0 0
      %2649 = vmatprep.subr.bf16.mxu0 0
      %2650 = vmatpush1.bf16.msra.mxu0 0
      %2651 = vmatprep.subr.bf16.mxu0 0
      %2652 = vmatpush1.bf16.msra.mxu0 0
      %2653 = vmatprep.subr.bf16.mxu0 0
      %2654 = vmatpush1.bf16.msra.mxu0 0
      %2655 = vmatprep.subr.bf16.mxu0 0
      %2656 = vmatpush1.bf16.msra.mxu0 0
      %2657 = vmatprep.subr.bf16.mxu0 0
      %2658 = vmatpush1.bf16.msra.mxu0 0
      %2659 = vmatprep.subr.bf16.mxu0 0
      %2660 = vmatpush1.bf16.msra.mxu0 0
      %2661 = vmatprep.subr.bf16.mxu0 0
      %2662 = vmatpush1.bf16.msra.mxu0 0
      %2663 = vmatprep.subr.bf16.mxu0 0
      %2664 = vmatpush1.bf16.msra.mxu0 0
      %2665 = vmatprep.subr.bf16.mxu0 0
      %2666 = vmatpush1.bf16.msra.mxu0 0
      %2667 = vmatprep.subr.bf16.mxu0 0
      %2668 = vmatpush1.bf16.msra.mxu0 0
      %2669 = vmatprep.subr.bf16.mxu0 0
      %2670 = vmatpush1.bf16.msra.mxu0 0
      %2671 = vmatprep.subr.bf16.mxu0 0
      %2672 = vmatpush1.bf16.msra.mxu0 0
      %2673 = vmatprep.subr.bf16.mxu0 0
      %2674 = vmatpush1.bf16.msra.mxu0 0
      %2675 = vmatprep.subr.bf16.mxu0 0
      %2676 = vmatpush1.bf16.msra.mxu0 0
      %2677 = vmatprep.mubr.bf16.mxu0 0
      %2678 = vmatmul.mubr.bf16.gmra.mrb[0].mxu0 %v2640
      %v2679 = vpop.f32.mrb[0].mxu0
      %v2680 = vadd.f32 0.0, %v2679
      %v2681 = vpop.f32.mrb[0].mxu0
      %v2682 = vadd.f32 0.0, %v2681
      %v2683 = vpop.f32.mrb[0].mxu0
      %v2684 = vadd.f32 0.0, %v2683
      %v2685 = vpop.f32.mrb[0].mxu0
      %v2686 = vadd.f32 0.0, %v2685
      %2687 = vmatprep.mubr.bf16.mxu0 0
      %2688 = vmatmul.mubr.bf16.gmra.mrb[0].mxu0 %v2643
      %v2689 = vpop.f32.mrb[0].mxu0
      %v2690 = vadd.f32 0.0, %v2689
      %v2691 = vpop.f32.mrb[0].mxu0
      %v2692 = vadd.f32 0.0, %v2691
      %v2693 = vpop.f32.mrb[0].mxu0
      %v2694 = vpop.f32.mrb[0].mxu0
      %2695 = vdwg.mxu0
      %v2696 = vadd.f32 %v2598, %v2680
      %v2697 = vadd.f32 %v2599, %v2682
      %v2698 = vadd.f32 %v2600, %v2684
      %v2699 = vadd.f32 %v2601, %v2686
      %v2700 = vadd.f32 %v2602, %v2690
      %v2701 = vadd.f32 %v2603, %v2692
      %v2702 = vsel %vm1018, %v2396, 0
      %v2703 = vsel %vm1019, %v2397, 0
      %v2704 = vsel %vm1018, %v2398, 0
      %v2705 = vsel %vm1019, %v2399, 0
      %s2706 = scalar_lea.vmem %s2, 312
      %v2707 = vld [vmem:[%s2706] sm:$0xf]
      %v2708 = vld [vmem:[%s2706 + $0x4] sm:$0xf]
      %v2709 = vld [vmem:[%s2706 + $0x8] sm:$0xf]
      %v2713 = vunpack.c.l.b16 %v2707
      %v2714 = vunpack.c.l.b16 %v2708
      %v2715 = vunpack.c.l.b16 %v2709
      %v2716 = vpack.c.b16 %v2714, %v2713
      %v2717 = vpack.c.b16 %v2715, %v2715
      %v2722 = vunpack.c.l.b16 %v2702
      %v2723 = vunpack.c.h.b16 %v2702
      %v2724 = vunpack.c.l.b16 %v2703
      %v2725 = vunpack.c.l.b16 %v2704
      %v2726 = vunpack.c.h.b16 %v2704
      %v2727 = vunpack.c.l.b16 %v2705
      %v2728 = vpack.c.b16 %v2725, %v2722
      %v2729 = vpack.c.b16 %v2726, %v2723
      %v2730 = vpack.c.b16 %v2727, %v2724
      %2731 = vrot.lane.b32.xlu0 %v2728, 111
      %v2732 = vpop.permute.xlu0 %2731
      %2733 = vrot.lane.b32.xlu0 %v2729, 111
      %v2734 = vpop.permute.xlu0 %2733
      %2735 = vrot.lane.b32.xlu0 %v2730, 111
      %v2736 = vpop.permute.xlu0 %2735
      %v2737 = vsel %vm335, %v2732, %v2734
      %v2738 = vsel %vm335, %v2734, %v2736
      %v2742 = vsel %vm1178, %v2716, 0
      %v2745 = vsel %vm1178, %v2717, 0
      %2747 = vmatprep.subr.bf16.mxu0 %v2738
      %2748 = vmatpush1.bf16.msra.mxu0 %v2737
      %2749 = vmatprep.subr.bf16.mxu0 0
      %2750 = vmatpush1.bf16.msra.mxu0 0
      %2751 = vmatprep.subr.bf16.mxu0 0
      %2752 = vmatpush1.bf16.msra.mxu0 0
      %2753 = vmatprep.subr.bf16.mxu0 0
      %2754 = vmatpush1.bf16.msra.mxu0 0
      %2755 = vmatprep.subr.bf16.mxu0 0
      %2756 = vmatpush1.bf16.msra.mxu0 0
      %2757 = vmatprep.subr.bf16.mxu0 0
      %2758 = vmatpush1.bf16.msra.mxu0 0
      %2759 = vmatprep.subr.bf16.mxu0 0
      %2760 = vmatpush1.bf16.msra.mxu0 0
      %2761 = vmatprep.subr.bf16.mxu0 0
      %2762 = vmatpush1.bf16.msra.mxu0 0
      %2763 = vmatprep.subr.bf16.mxu0 0
      %2764 = vmatpush1.bf16.msra.mxu0 0
      %2765 = vmatprep.subr.bf16.mxu0 0
      %2766 = vmatpush1.bf16.msra.mxu0 0
      %2767 = vmatprep.subr.bf16.mxu0 0
      %2768 = vmatpush1.bf16.msra.mxu0 0
      %2769 = vmatprep.subr.bf16.mxu0 0
      %2770 = vmatpush1.bf16.msra.mxu0 0
      %2771 = vmatprep.subr.bf16.mxu0 0
      %2772 = vmatpush1.bf16.msra.mxu0 0
      %2773 = vmatprep.subr.bf16.mxu0 0
      %2774 = vmatpush1.bf16.msra.mxu0 0
      %2775 = vmatprep.subr.bf16.mxu0 0
      %2776 = vmatpush1.bf16.msra.mxu0 0
      %2777 = vmatprep.subr.bf16.mxu0 0
      %2778 = vmatpush1.bf16.msra.mxu0 0
      %2779 = vmatprep.mubr.bf16.mxu0 0
      %2780 = vmatmul.mubr.bf16.gmra.mrb[0].mxu0 %v2742
      %v2781 = vpop.f32.mrb[0].mxu0
      %v2782 = vadd.f32 0.0, %v2781
      %v2783 = vpop.f32.mrb[0].mxu0
      %v2784 = vadd.f32 0.0, %v2783
      %v2785 = vpop.f32.mrb[0].mxu0
      %v2786 = vadd.f32 0.0, %v2785
      %v2787 = vpop.f32.mrb[0].mxu0
      %v2788 = vadd.f32 0.0, %v2787
      %2789 = vmatprep.mubr.bf16.mxu0 0
      %2790 = vmatmul.mubr.bf16.gmra.mrb[0].mxu0 %v2745
      %v2791 = vpop.f32.mrb[0].mxu0
      %v2792 = vadd.f32 0.0, %v2791
      %v2793 = vpop.f32.mrb[0].mxu0
      %v2794 = vadd.f32 0.0, %v2793
      %v2795 = vpop.f32.mrb[0].mxu0
      %v2796 = vpop.f32.mrb[0].mxu0
      %2797 = vdwg.mxu0
      %v2798 = vadd.f32 %v2696, %v2782
      %v2799 = vadd.f32 %v2697, %v2784
      %v2800 = vadd.f32 %v2698, %v2786
      %v2801 = vadd.f32 %v2699, %v2788
      %v2802 = vadd.f32 %v2700, %v2792
      %v2803 = vadd.f32 %v2701, %v2794
      %v2804 = vld [vmem:[%s3] sm:$0xff]
      %v2805 = vld [vmem:[%s3 + $0x8] sm:$0xff]
      %v2806 = vld [vmem:[%s3 + $0x10] sm:$0xff]
      %2808 = vset.pattern.permute.xlu0 2
      %2809 = vperm.xlu0 %2808, %v2804
      %v2810 = vpop.permute.xlu0 %2809
      %2813 = vset.pattern.permute.xlu0 2
      %2814 = vperm.xlu0 %2813, %v2805
      %v2815 = vpop.permute.xlu0 %2814
      %2818 = vset.pattern.permute.xlu0 2
      %2819 = vperm.xlu0 %2818, %v2806
      %v2820 = vpop.permute.xlu0 %2819
      %v2822 = vadd.f32 %v2798, %v2810
      %v2823 = vadd.f32 %v2799, %v2810
      %v2824 = vadd.f32 %v2800, %v2815
      %v2825 = vadd.f32 %v2801, %v2815
      %v2826 = vadd.f32 %v2802, %v2820
      %v2827 = vadd.f32 %v2803, %v2820
      %v2828 = vrot.slane %v2826, 4
      %v2829 = vmax.f32 %v2826, %v2828
      %v2830 = vrot.slane %v2829, 2
      %v2831 = vmax.f32 %v2829, %v2830
      %v2832 = vrot.slane %v2831, 1
      %v2833 = vmax.f32 %v2831, %v2832
      %v2834 = vrot.slane %v2827, 4
      %v2835 = vmax.f32 %v2827, %v2834
      %v2836 = vrot.slane %v2835, 2
      %v2837 = vmax.f32 %v2835, %v2836
      %v2838 = vrot.slane %v2837, 1
      %v2839 = vmax.f32 %v2837, %v2838
      %v2840 = vsub.f32 %v2826, %v2833
      %v2841 = vsub.f32 %v2827, %v2839
      %v2842 = vmul.f32 %v2840, 1.442695
      %v2843 = vpow.pop %v2842
      %v2844 = vmul.f32 %v2841, 1.442695
      %v2845 = vpow.pop %v2844
      %v2846 = vrot.slane %v2843, 4
      %v2847 = vadd.f32 %v2843, %v2846
      %v2848 = vrot.slane %v2847, 2
      %v2849 = vadd.f32 %v2847, %v2848
      %v2850 = vrot.slane %v2849, 1
      %v2851 = vadd.f32 %v2849, %v2850
      %v2852 = vrot.slane %v2845, 4
      %v2853 = vadd.f32 %v2845, %v2852
      %v2854 = vrot.slane %v2853, 2
      %v2855 = vadd.f32 %v2853, %v2854
      %v2856 = vrot.slane %v2855, 1
      %v2857 = vadd.f32 %v2855, %v2856
      %v2858 = vrcp.pop %v2851
      %v2859 = vmul.f32 %v2843, %v2858
      %v2860 = vrcp.pop %v2857
      %v2861 = vmul.f32 %v2845, %v2860
      %2862 = vst [vmem:[%s257] sm:$0xff] %v2859
      %2863 = vst [vmem:[%s257 + $0x8] sm:$0xff] %v2861
      %v2864 = vpack.c.bf16 %v2824, %v2822
      %v2865 = vpack.c.bf16 %v2825, %v2823
      %v2868 = vunpack.c.l.b16 %v2864
      %v2869 = vunpack.c.l.b16 %v2865
      %v2870 = vunpack.c.h.b16 %v2864
      %v2871 = vunpack.c.h.b16 %v2865
      %v2872 = vpack.c.b16 %v2869, %v2868
      %v2873 = vpack.c.b16 %v2871, %v2870
      %2876 = vst [vmem:[#allocation2 + $0x4] sm:$0xff] %v2872
      %2877 = vst [vmem:[#allocation2 + $0x14] sm:$0xff] %v2873
      %v2878 = vld [vmem:[%s247] sm:$0x77]
      %v2880 = vcombine.high %v2878, %v2878
      %v2882 = vpack.c.bf16 %v2878, %v2878
      %v2883 = vpack.c.bf16 %v2880, %v2880
      %v2886 = vunpack.c.l.b16 %v2882
      %v2887 = vunpack.c.l.b16 %v2883
      %v2888 = vpack.c.b16 %v2887, %v2886
      %v2890 = vld [vmem:[#allocation2 + $0x24] sm:$0x33]
      %v2891 = vsel %vm302, %v2888, %v2890
      %2892 = vst [vmem:[#allocation2 + $0x24] sm:$0x33] %v2891
      %v2893 = vld [vmem:[#allocation2] sm:$0xff]
      %v2894 = vld [vmem:[#allocation2 + $0x8] sm:$0xf]
      %v2895 = vld [vmem:[#allocation2 + $0x10] sm:$0xff]
      %v2896 = vld [vmem:[#allocation2 + $0x18] sm:$0xf]
      %v2897 = vld [vmem:[#allocation2 + $0x20] sm:$0x33]
      %v2898 = vld [vmem:[#allocation2 + $0x28] sm:$0x3]
      %v2899 = vsel %vm337, %v2893, 0
      %v2900 = vsel %vm338, %v2894, 0
      %v2901 = vsel %vm337, %v2895, 0
      %v2902 = vsel %vm338, %v2896, 0
      %v2903 = vsel %vm337, %v2897, 0
      %v2904 = vsel %vm338, %v2898, 0
      %s2905 = scalar_lea.vmem %s2, 324
      %v2906 = vld [vmem:[%s2905] sm:$0xf]
      %v2907 = vld [vmem:[%s2905 + $0x4] sm:$0xf]
      %s2908 = scalar_lea.vmem %s2, 336
      %v2909 = vld [vmem:[%s2908] sm:$0xf]
      %v2910 = vld [vmem:[%s2908 + $0x4] sm:$0xf]
      %v2913 = vunpack.c.l.b16 %v2909
      %v2914 = vunpack.c.l.b16 %v2910
      %v2915 = vpack.c.b16 %v2914, %v2913
      %v2922 = vunpack.c.l.b16 %v2893
      %v2923 = vunpack.c.h.b16 %v2893
      %v2924 = vunpack.c.l.b16 %v2894
      %v2925 = vunpack.c.l.b16 %v2895
      %v2926 = vunpack.c.h.b16 %v2895
      %v2927 = vunpack.c.l.b16 %v2896
      %v2928 = vunpack.c.l.b16 %v2897
      %v2929 = vunpack.c.h.b16 %v2897
      %v2930 = vunpack.c.l.b16 %v2898
      %v2931 = vpack.c.b16 %v2925, %v2922
      %v2932 = vpack.c.b16 %v2926, %v2923
      %v2933 = vpack.c.b16 %v2927, %v2924
      %v2934 = vpack.c.b16 %v2928, %v2928
      %v2935 = vpack.c.b16 %v2929, %v2929
      %v2936 = vpack.c.b16 %v2930, %v2930
      %2937 = vrot.lane.b32.xlu0 %v2931, 16
      %v2938 = vpop.permute.xlu0 %2937
      %2939 = vrot.lane.b32.xlu0 %v2932, 16
      %v2940 = vpop.permute.xlu0 %2939
      %2941 = vrot.lane.b32.xlu0 %v2933, 16
      %v2942 = vpop.permute.xlu0 %2941
      %2943 = vrot.lane.b32.xlu0 %v2934, 16
      %v2944 = vpop.permute.xlu0 %2943
      %2945 = vrot.lane.b32.xlu0 %v2935, 16
      %v2946 = vpop.permute.xlu0 %2945
      %2947 = vrot.lane.b32.xlu0 %v2936, 16
      %v2948 = vpop.permute.xlu0 %2947
      %v2949 = vsel %vm365, %v2938, %v2940
      %v2950 = vsel %vm365, %v2940, %v2942
      %v2951 = vsel %vm365, %v2944, %v2946
      %v2952 = vsel %vm365, %v2946, %v2948
      %vm2955 = vcmask 154624
      %v2957 = vsel %vm2955, %v2915, 0
      %v2960 = vand.u32 %v2951, %v375
      %v2963 = vand.u32 %v2952, %v375
      %2965 = vmatprep.subr.bf16.mxu0 %v2950
      %2966 = vmatpush1.bf16.msra.mxu0 %v2949
      %2967 = vmatprep.subr.bf16.mxu0 %v2963
      %2968 = vmatpush1.bf16.msra.mxu0 %v2960
      %2969 = vmatprep.subr.bf16.mxu0 0
      %2970 = vmatpush1.bf16.msra.mxu0 0
      %2971 = vmatprep.subr.bf16.mxu0 0
      %2972 = vmatpush1.bf16.msra.mxu0 0
      %2973 = vmatprep.subr.bf16.mxu0 0
      %2974 = vmatpush1.bf16.msra.mxu0 0
      %2975 = vmatprep.subr.bf16.mxu0 0
      %2976 = vmatpush1.bf16.msra.mxu0 0
      %2977 = vmatprep.subr.bf16.mxu0 0
      %2978 = vmatpush1.bf16.msra.mxu0 0
      %2979 = vmatprep.subr.bf16.mxu0 0
      %2980 = vmatpush1.bf16.msra.mxu0 0
      %2981 = vmatprep.subr.bf16.mxu0 0
      %2982 = vmatpush1.bf16.msra.mxu0 0
      %2983 = vmatprep.subr.bf16.mxu0 0
      %2984 = vmatpush1.bf16.msra.mxu0 0
      %2985 = vmatprep.subr.bf16.mxu0 0
      %2986 = vmatpush1.bf16.msra.mxu0 0
      %2987 = vmatprep.subr.bf16.mxu0 0
      %2988 = vmatpush1.bf16.msra.mxu0 0
      %2989 = vmatprep.subr.bf16.mxu0 0
      %2990 = vmatpush1.bf16.msra.mxu0 0
      %2991 = vmatprep.subr.bf16.mxu0 0
      %2992 = vmatpush1.bf16.msra.mxu0 0
      %2993 = vmatprep.subr.bf16.mxu0 0
      %2994 = vmatpush1.bf16.msra.mxu0 0
      %2995 = vmatprep.subr.bf16.mxu0 0
      %2996 = vmatpush1.bf16.msra.mxu0 0
      %2997 = vmatprep.mubr.bf16.mxu0 0
      %2998 = vmatmul.mubr.bf16.gmra.mrb[0].mxu0 %v2957
      %v2999 = vpop.f32.mrb[0].mxu0
      %v3000 = vadd.f32 0.0, %v2999
      %v3001 = vpop.f32.mrb[0].mxu0
      %v3002 = vadd.f32 0.0, %v3001
      %v3003 = vpop.f32.mrb[0].mxu0
      %v3004 = vadd.f32 0.0, %v3003
      %v3005 = vpop.f32.mrb[0].mxu0
      %v3006 = vadd.f32 0.0, %v3005
      %3007 = vdwg.mxu0
      %v3010 = vunpack.c.l.b16 %v2906
      %v3011 = vunpack.c.l.b16 %v2907
      %v3012 = vpack.c.b16 %v3011, %v3010
      %v3019 = vunpack.c.l.b16 %v2899
      %v3020 = vunpack.c.h.b16 %v2899
      %v3021 = vunpack.c.l.b16 %v2900
      %v3022 = vunpack.c.l.b16 %v2901
      %v3023 = vunpack.c.h.b16 %v2901
      %v3024 = vunpack.c.l.b16 %v2902
      %v3025 = vunpack.c.l.b16 %v2903
      %v3026 = vunpack.c.h.b16 %v2903
      %v3027 = vunpack.c.l.b16 %v2904
      %v3028 = vpack.c.b16 %v3022, %v3019
      %v3029 = vpack.c.b16 %v3023, %v3020
      %v3030 = vpack.c.b16 %v3024, %v3021
      %v3031 = vpack.c.b16 %v3025, %v3025
      %v3032 = vpack.c.b16 %v3026, %v3026
      %v3033 = vpack.c.b16 %v3027, %v3027
      %3034 = vrot.lane.b32.xlu0 %v3028, 17
      %v3035 = vpop.permute.xlu0 %3034
      %3036 = vrot.lane.b32.xlu0 %v3029, 17
      %v3037 = vpop.permute.xlu0 %3036
      %3038 = vrot.lane.b32.xlu0 %v3030, 17
      %v3039 = vpop.permute.xlu0 %3038
      %3040 = vrot.lane.b32.xlu0 %v3031, 17
      %v3041 = vpop.permute.xlu0 %3040
      %3042 = vrot.lane.b32.xlu0 %v3032, 17
      %v3043 = vpop.permute.xlu0 %3042
      %3044 = vrot.lane.b32.xlu0 %v3033, 17
      %v3045 = vpop.permute.xlu0 %3044
      %v3046 = vsel %vm444, %v3035, %v3037
      %v3047 = vsel %vm444, %v3037, %v3039
      %v3048 = vsel %vm444, %v3041, %v3043
      %v3049 = vsel %vm444, %v3043, %v3045
      %v3053 = vsel %vm2955, %v3012, 0
      %v3056 = vand.u32 %v3048, %v375
      %v3059 = vand.u32 %v3049, %v375
      %3061 = vmatprep.subr.bf16.mxu0 %v3047
      %3062 = vmatpush1.bf16.msra.mxu0 %v3046
      %3063 = vmatprep.subr.bf16.mxu0 %v3059
      %3064 = vmatpush1.bf16.msra.mxu0 %v3056
      %3065 = vmatprep.subr.bf16.mxu0 0
      %3066 = vmatpush1.bf16.msra.mxu0 0
      %3067 = vmatprep.subr.bf16.mxu0 0
      %3068 = vmatpush1.bf16.msra.mxu0 0
      %3069 = vmatprep.subr.bf16.mxu0 0
      %3070 = vmatpush1.bf16.msra.mxu0 0
      %3071 = vmatprep.subr.bf16.mxu0 0
      %3072 = vmatpush1.bf16.msra.mxu0 0
      %3073 = vmatprep.subr.bf16.mxu0 0
      %3074 = vmatpush1.bf16.msra.mxu0 0
      %3075 = vmatprep.subr.bf16.mxu0 0
      %3076 = vmatpush1.bf16.msra.mxu0 0
      %3077 = vmatprep.subr.bf16.mxu0 0
      %3078 = vmatpush1.bf16.msra.mxu0 0
      %3079 = vmatprep.subr.bf16.mxu0 0
      %3080 = vmatpush1.bf16.msra.mxu0 0
      %3081 = vmatprep.subr.bf16.mxu0 0
      %3082 = vmatpush1.bf16.msra.mxu0 0
      %3083 = vmatprep.subr.bf16.mxu0 0
      %3084 = vmatpush1.bf16.msra.mxu0 0
      %3085 = vmatprep.subr.bf16.mxu0 0
      %3086 = vmatpush1.bf16.msra.mxu0 0
      %3087 = vmatprep.subr.bf16.mxu0 0
      %3088 = vmatpush1.bf16.msra.mxu0 0
      %3089 = vmatprep.subr.bf16.mxu0 0
      %3090 = vmatpush1.bf16.msra.mxu0 0
      %3091 = vmatprep.subr.bf16.mxu0 0
      %3092 = vmatpush1.bf16.msra.mxu0 0
      %3093 = vmatprep.mubr.bf16.mxu0 0
      %3094 = vmatmul.mubr.bf16.gmra.mrb[0].mxu0 %v3053
      %v3095 = vpop.f32.mrb[0].mxu0
      %v3096 = vadd.f32 %v3000, %v3095
      %v3097 = vpop.f32.mrb[0].mxu0
      %v3098 = vadd.f32 %v3002, %v3097
      %v3099 = vpop.f32.mrb[0].mxu0
      %v3100 = vadd.f32 %v3004, %v3099
      %v3101 = vpop.f32.mrb[0].mxu0
      %v3102 = vadd.f32 %v3006, %v3101
      %3103 = vdwg.mxu0
      %v3104 = vsel %vm510, %v2893, 0
      %v3105 = vsel %vm511, %v2894, 0
      %v3106 = vsel %vm510, %v2895, 0
      %v3107 = vsel %vm511, %v2896, 0
      %v3108 = vsel %vm510, %v2897, 0
      %v3109 = vsel %vm511, %v2898, 0
      %s3110 = scalar_lea.vmem %s2, 348
      %v3111 = vld [vmem:[%s3110] sm:$0xf]
      %v3112 = vld [vmem:[%s3110 + $0x4] sm:$0xf]
      %v3115 = vunpack.c.l.b16 %v3111
      %v3116 = vunpack.c.l.b16 %v3112
      %v3117 = vpack.c.b16 %v3116, %v3115
      %v3124 = vunpack.c.l.b16 %v3104
      %v3125 = vunpack.c.h.b16 %v3104
      %v3126 = vunpack.c.l.b16 %v3105
      %v3127 = vunpack.c.l.b16 %v3106
      %v3128 = vunpack.c.h.b16 %v3106
      %v3129 = vunpack.c.l.b16 %v3107
      %v3130 = vunpack.c.l.b16 %v3108
      %v3131 = vunpack.c.h.b16 %v3108
      %v3132 = vunpack.c.l.b16 %v3109
      %v3133 = vpack.c.b16 %v3127, %v3124
      %v3134 = vpack.c.b16 %v3128, %v3125
      %v3135 = vpack.c.b16 %v3129, %v3126
      %v3136 = vpack.c.b16 %v3130, %v3130
      %v3137 = vpack.c.b16 %v3131, %v3131
      %v3138 = vpack.c.b16 %v3132, %v3132
      %3139 = vrot.lane.b32.xlu0 %v3133, 15
      %v3140 = vpop.permute.xlu0 %3139
      %3141 = vrot.lane.b32.xlu0 %v3134, 15
      %v3142 = vpop.permute.xlu0 %3141
      %3143 = vrot.lane.b32.xlu0 %v3135, 15
      %v3144 = vpop.permute.xlu0 %3143
      %3145 = vrot.lane.b32.xlu0 %v3136, 15
      %v3146 = vpop.permute.xlu0 %3145
      %3147 = vrot.lane.b32.xlu0 %v3137, 15
      %v3148 = vpop.permute.xlu0 %3147
      %3149 = vrot.lane.b32.xlu0 %v3138, 15
      %v3150 = vpop.permute.xlu0 %3149
      %v3151 = vsel %vm536, %v3140, %v3142
      %v3152 = vsel %vm536, %v3142, %v3144
      %v3153 = vsel %vm536, %v3146, %v3148
      %v3154 = vsel %vm536, %v3148, %v3150
      %v3158 = vsel %vm2955, %v3117, 0
      %v3161 = vand.u32 %v3153, %v375
      %v3164 = vand.u32 %v3154, %v375
      %3166 = vmatprep.subr.bf16.mxu0 %v3152
      %3167 = vmatpush1.bf16.msra.mxu0 %v3151
      %3168 = vmatprep.subr.bf16.mxu0 %v3164
      %3169 = vmatpush1.bf16.msra.mxu0 %v3161
      %3170 = vmatprep.subr.bf16.mxu0 0
      %3171 = vmatpush1.bf16.msra.mxu0 0
      %3172 = vmatprep.subr.bf16.mxu0 0
      %3173 = vmatpush1.bf16.msra.mxu0 0
      %3174 = vmatprep.subr.bf16.mxu0 0
      %3175 = vmatpush1.bf16.msra.mxu0 0
      %3176 = vmatprep.subr.bf16.mxu0 0
      %3177 = vmatpush1.bf16.msra.mxu0 0
      %3178 = vmatprep.subr.bf16.mxu0 0
      %3179 = vmatpush1.bf16.msra.mxu0 0
      %3180 = vmatprep.subr.bf16.mxu0 0
      %3181 = vmatpush1.bf16.msra.mxu0 0
      %3182 = vmatprep.subr.bf16.mxu0 0
      %3183 = vmatpush1.bf16.msra.mxu0 0
      %3184 = vmatprep.subr.bf16.mxu0 0
      %3185 = vmatpush1.bf16.msra.mxu0 0
      %3186 = vmatprep.subr.bf16.mxu0 0
      %3187 = vmatpush1.bf16.msra.mxu0 0
      %3188 = vmatprep.subr.bf16.mxu0 0
      %3189 = vmatpush1.bf16.msra.mxu0 0
      %3190 = vmatprep.subr.bf16.mxu0 0
      %3191 = vmatpush1.bf16.msra.mxu0 0
      %3192 = vmatprep.subr.bf16.mxu0 0
      %3193 = vmatpush1.bf16.msra.mxu0 0
      %3194 = vmatprep.subr.bf16.mxu0 0
      %3195 = vmatpush1.bf16.msra.mxu0 0
      %3196 = vmatprep.subr.bf16.mxu0 0
      %3197 = vmatpush1.bf16.msra.mxu0 0
      %3198 = vmatprep.mubr.bf16.mxu0 0
      %3199 = vmatmul.mubr.bf16.gmra.mrb[0].mxu0 %v3158
      %v3200 = vpop.f32.mrb[0].mxu0
      %v3201 = vadd.f32 0.0, %v3200
      %v3202 = vpop.f32.mrb[0].mxu0
      %v3203 = vadd.f32 0.0, %v3202
      %v3204 = vpop.f32.mrb[0].mxu0
      %v3205 = vadd.f32 0.0, %v3204
      %v3206 = vpop.f32.mrb[0].mxu0
      %v3207 = vadd.f32 0.0, %v3206
      %3208 = vdwg.mxu0
      %v3209 = vadd.f32 %v3096, %v3201
      %v3210 = vadd.f32 %v3098, %v3203
      %v3211 = vadd.f32 %v3100, %v3205
      %v3212 = vadd.f32 %v3102, %v3207
      %v3213 = vsel %vm600, %v2893, 0
      %v3214 = vsel %vm601, %v2894, 0
      %v3215 = vsel %vm600, %v2895, 0
      %v3216 = vsel %vm601, %v2896, 0
      %v3217 = vsel %vm600, %v2897, 0
      %v3218 = vsel %vm601, %v2898, 0
      %s3219 = scalar_lea.vmem %s2, 360
      %v3220 = vld [vmem:[%s3219] sm:$0xf]
      %v3221 = vld [vmem:[%s3219 + $0x4] sm:$0xf]
      %v3224 = vunpack.c.l.b16 %v3220
      %v3225 = vunpack.c.l.b16 %v3221
      %v3226 = vpack.c.b16 %v3225, %v3224
      %v3233 = vunpack.c.l.b16 %v3213
      %v3234 = vunpack.c.h.b16 %v3213
      %v3235 = vunpack.c.l.b16 %v3214
      %v3236 = vunpack.c.l.b16 %v3215
      %v3237 = vunpack.c.h.b16 %v3215
      %v3238 = vunpack.c.l.b16 %v3216
      %v3239 = vunpack.c.l.b16 %v3217
      %v3240 = vunpack.c.h.b16 %v3217
      %v3241 = vunpack.c.l.b16 %v3218
      %v3242 = vpack.c.b16 %v3236, %v3233
      %v3243 = vpack.c.b16 %v3237, %v3234
      %v3244 = vpack.c.b16 %v3238, %v3235
      %v3245 = vpack.c.b16 %v3239, %v3239
      %v3246 = vpack.c.b16 %v3240, %v3240
      %v3247 = vpack.c.b16 %v3241, %v3241
      %3248 = vrot.lane.b32.xlu0 %v3242, 1
      %v3249 = vpop.permute.xlu0 %3248
      %3250 = vrot.lane.b32.xlu0 %v3243, 1
      %v3251 = vpop.permute.xlu0 %3250
      %3252 = vrot.lane.b32.xlu0 %v3244, 1
      %v3253 = vpop.permute.xlu0 %3252
      %3254 = vrot.lane.b32.xlu0 %v3245, 1
      %v3255 = vpop.permute.xlu0 %3254
      %3256 = vrot.lane.b32.xlu0 %v3246, 1
      %v3257 = vpop.permute.xlu0 %3256
      %3258 = vrot.lane.b32.xlu0 %v3247, 1
      %v3259 = vpop.permute.xlu0 %3258
      %v3260 = vsel %vm626, %v3249, %v3251
      %v3261 = vsel %vm626, %v3251, %v3253
      %v3262 = vsel %vm626, %v3255, %v3257
      %v3263 = vsel %vm626, %v3257, %v3259
      %v3267 = vsel %vm2955, %v3226, 0
      %v3270 = vand.u32 %v3262, %v375
      %v3273 = vand.u32 %v3263, %v375
      %3275 = vmatprep.subr.bf16.mxu0 %v3261
      %3276 = vmatpush1.bf16.msra.mxu0 %v3260
      %3277 = vmatprep.subr.bf16.mxu0 %v3273
      %3278 = vmatpush1.bf16.msra.mxu0 %v3270
      %3279 = vmatprep.subr.bf16.mxu0 0
      %3280 = vmatpush1.bf16.msra.mxu0 0
      %3281 = vmatprep.subr.bf16.mxu0 0
      %3282 = vmatpush1.bf16.msra.mxu0 0
      %3283 = vmatprep.subr.bf16.mxu0 0
      %3284 = vmatpush1.bf16.msra.mxu0 0
      %3285 = vmatprep.subr.bf16.mxu0 0
      %3286 = vmatpush1.bf16.msra.mxu0 0
      %3287 = vmatprep.subr.bf16.mxu0 0
      %3288 = vmatpush1.bf16.msra.mxu0 0
      %3289 = vmatprep.subr.bf16.mxu0 0
      %3290 = vmatpush1.bf16.msra.mxu0 0
      %3291 = vmatprep.subr.bf16.mxu0 0
      %3292 = vmatpush1.bf16.msra.mxu0 0
      %3293 = vmatprep.subr.bf16.mxu0 0
      %3294 = vmatpush1.bf16.msra.mxu0 0
      %3295 = vmatprep.subr.bf16.mxu0 0
      %3296 = vmatpush1.bf16.msra.mxu0 0
      %3297 = vmatprep.subr.bf16.mxu0 0
      %3298 = vmatpush1.bf16.msra.mxu0 0
      %3299 = vmatprep.subr.bf16.mxu0 0
      %3300 = vmatpush1.bf16.msra.mxu0 0
      %3301 = vmatprep.subr.bf16.mxu0 0
      %3302 = vmatpush1.bf16.msra.mxu0 0
      %3303 = vmatprep.subr.bf16.mxu0 0
      %3304 = vmatpush1.bf16.msra.mxu0 0
      %3305 = vmatprep.subr.bf16.mxu0 0
      %3306 = vmatpush1.bf16.msra.mxu0 0
      %3307 = vmatprep.mubr.bf16.mxu0 0
      %3308 = vmatmul.mubr.bf16.gmra.mrb[0].mxu0 %v3267
      %v3309 = vpop.f32.mrb[0].mxu0
      %v3310 = vadd.f32 0.0, %v3309
      %v3311 = vpop.f32.mrb[0].mxu0
      %v3312 = vadd.f32 0.0, %v3311
      %v3313 = vpop.f32.mrb[0].mxu0
      %v3314 = vadd.f32 0.0, %v3313
      %v3315 = vpop.f32.mrb[0].mxu0
      %v3316 = vadd.f32 0.0, %v3315
      %3317 = vdwg.mxu0
      %v3318 = vadd.f32 %v3209, %v3310
      %v3319 = vadd.f32 %v3210, %v3312
      %v3320 = vadd.f32 %v3211, %v3314
      %v3321 = vadd.f32 %v3212, %v3316
      %v3322 = vld [vmem:[#allocation2 + $0x4] sm:$0xff]
      %v3323 = vld [vmem:[#allocation2 + $0x14] sm:$0xff]
      %v3324 = vld [vmem:[#allocation2 + $0x24] sm:$0x33]
      %s3325 = scalar_lea.vmem %s2, 372
      %v3326 = vld [vmem:[%s3325] sm:$0xf]
      %v3327 = vld [vmem:[%s3325 + $0x4] sm:$0xf]
      %v3330 = vunpack.c.l.b16 %v3326
      %v3331 = vunpack.c.l.b16 %v3327
      %v3332 = vpack.c.b16 %v3331, %v3330
      %v3336 = vunpack.c.l.b16 %v3322
      %v3337 = vunpack.c.h.b16 %v3322
      %v3338 = vunpack.c.l.b16 %v3323
      %v3339 = vunpack.c.h.b16 %v3323
      %v3340 = vunpack.c.l.b16 %v3324
      %v3341 = vunpack.c.h.b16 %v3324
      %v3342 = vpack.c.b16 %v3338, %v3336
      %v3343 = vpack.c.b16 %v3339, %v3337
      %v3344 = vpack.c.b16 %v3340, %v3340
      %v3345 = vpack.c.b16 %v3341, %v3341
      %v3349 = vsel %vm2955, %v3332, 0
      %v3352 = vand.u32 %v3344, %v375
      %v3355 = vand.u32 %v3345, %v375
      %3357 = vmatprep.subr.bf16.mxu0 %v3343
      %3358 = vmatpush1.bf16.msra.mxu0 %v3342
      %3359 = vmatprep.subr.bf16.mxu0 %v3355
      %3360 = vmatpush1.bf16.msra.mxu0 %v3352
      %3361 = vmatprep.subr.bf16.mxu0 0
      %3362 = vmatpush1.bf16.msra.mxu0 0
      %3363 = vmatprep.subr.bf16.mxu0 0
      %3364 = vmatpush1.bf16.msra.mxu0 0
      %3365 = vmatprep.subr.bf16.mxu0 0
      %3366 = vmatpush1.bf16.msra.mxu0 0
      %3367 = vmatprep.subr.bf16.mxu0 0
      %3368 = vmatpush1.bf16.msra.mxu0 0
      %3369 = vmatprep.subr.bf16.mxu0 0
      %3370 = vmatpush1.bf16.msra.mxu0 0
      %3371 = vmatprep.subr.bf16.mxu0 0
      %3372 = vmatpush1.bf16.msra.mxu0 0
      %3373 = vmatprep.subr.bf16.mxu0 0
      %3374 = vmatpush1.bf16.msra.mxu0 0
      %3375 = vmatprep.subr.bf16.mxu0 0
      %3376 = vmatpush1.bf16.msra.mxu0 0
      %3377 = vmatprep.subr.bf16.mxu0 0
      %3378 = vmatpush1.bf16.msra.mxu0 0
      %3379 = vmatprep.subr.bf16.mxu0 0
      %3380 = vmatpush1.bf16.msra.mxu0 0
      %3381 = vmatprep.subr.bf16.mxu0 0
      %3382 = vmatpush1.bf16.msra.mxu0 0
      %3383 = vmatprep.subr.bf16.mxu0 0
      %3384 = vmatpush1.bf16.msra.mxu0 0
      %3385 = vmatprep.subr.bf16.mxu0 0
      %3386 = vmatpush1.bf16.msra.mxu0 0
      %3387 = vmatprep.subr.bf16.mxu0 0
      %3388 = vmatpush1.bf16.msra.mxu0 0
      %3389 = vmatprep.mubr.bf16.mxu0 0
      %3390 = vmatmul.mubr.bf16.gmra.mrb[0].mxu0 %v3349
      %v3391 = vpop.f32.mrb[0].mxu0
      %v3392 = vadd.f32 0.0, %v3391
      %v3393 = vpop.f32.mrb[0].mxu0
      %v3394 = vadd.f32 0.0, %v3393
      %v3395 = vpop.f32.mrb[0].mxu0
      %v3396 = vadd.f32 0.0, %v3395
      %v3397 = vpop.f32.mrb[0].mxu0
      %v3398 = vadd.f32 0.0, %v3397
      %3399 = vdwg.mxu0
      %v3400 = vadd.f32 %v3318, %v3392
      %v3401 = vadd.f32 %v3319, %v3394
      %v3402 = vadd.f32 %v3320, %v3396
      %v3403 = vadd.f32 %v3321, %v3398
      %v3404 = vld [vmem:[#allocation2 + $0x4] sm:$0xff]
      %v3405 = vld [vmem:[#allocation2 + $0xc] sm:$0xf]
      %v3406 = vld [vmem:[#allocation2 + $0x14] sm:$0xff]
      %v3407 = vld [vmem:[#allocation2 + $0x1c] sm:$0xf]
      %v3408 = vld [vmem:[#allocation2 + $0x24] sm:$0x33]
      %v3409 = vld [vmem:[#allocation2 + $0x2c] sm:$0x3]
      %v3410 = vsel %vm761, %v3404, 0
      %v3411 = vsel %vm762, %v3405, 0
      %v3412 = vsel %vm761, %v3406, 0
      %v3413 = vsel %vm762, %v3407, 0
      %v3414 = vsel %vm761, %v3408, 0
      %v3415 = vsel %vm762, %v3409, 0
      %s3416 = scalar_lea.vmem %s2, 384
      %v3417 = vld [vmem:[%s3416] sm:$0xf]
      %v3418 = vld [vmem:[%s3416 + $0x4] sm:$0xf]
      %v3421 = vunpack.c.l.b16 %v3417
      %v3422 = vunpack.c.l.b16 %v3418
      %v3423 = vpack.c.b16 %v3422, %v3421
      %v3430 = vunpack.c.l.b16 %v3410
      %v3431 = vunpack.c.h.b16 %v3410
      %v3432 = vunpack.c.l.b16 %v3411
      %v3433 = vunpack.c.l.b16 %v3412
      %v3434 = vunpack.c.h.b16 %v3412
      %v3435 = vunpack.c.l.b16 %v3413
      %v3436 = vunpack.c.l.b16 %v3414
      %v3437 = vunpack.c.h.b16 %v3414
      %v3438 = vunpack.c.l.b16 %v3415
      %v3439 = vpack.c.b16 %v3433, %v3430
      %v3440 = vpack.c.b16 %v3434, %v3431
      %v3441 = vpack.c.b16 %v3435, %v3432
      %v3442 = vpack.c.b16 %v3436, %v3436
      %v3443 = vpack.c.b16 %v3437, %v3437
      %v3444 = vpack.c.b16 %v3438, %v3438
      %3445 = vrot.lane.b32.xlu0 %v3439, 127
      %v3446 = vpop.permute.xlu0 %3445
      %3447 = vrot.lane.b32.xlu0 %v3440, 127
      %v3448 = vpop.permute.xlu0 %3447
      %3449 = vrot.lane.b32.xlu0 %v3441, 127
      %v3450 = vpop.permute.xlu0 %3449
      %3451 = vrot.lane.b32.xlu0 %v3442, 127
      %v3452 = vpop.permute.xlu0 %3451
      %3453 = vrot.lane.b32.xlu0 %v3443, 127
      %v3454 = vpop.permute.xlu0 %3453
      %3455 = vrot.lane.b32.xlu0 %v3444, 127
      %v3456 = vpop.permute.xlu0 %3455
      %v3457 = vsel %vm598, %v3446, %v3448
      %v3458 = vsel %vm598, %v3448, %v3450
      %v3459 = vsel %vm598, %v3452, %v3454
      %v3460 = vsel %vm598, %v3454, %v3456
      %v3464 = vsel %vm2955, %v3423, 0
      %v3467 = vand.u32 %v3459, %v375
      %v3470 = vand.u32 %v3460, %v375
      %3472 = vmatprep.subr.bf16.mxu0 %v3458
      %3473 = vmatpush1.bf16.msra.mxu0 %v3457
      %3474 = vmatprep.subr.bf16.mxu0 %v3470
      %3475 = vmatpush1.bf16.msra.mxu0 %v3467
      %3476 = vmatprep.subr.bf16.mxu0 0
      %3477 = vmatpush1.bf16.msra.mxu0 0
      %3478 = vmatprep.subr.bf16.mxu0 0
      %3479 = vmatpush1.bf16.msra.mxu0 0
      %3480 = vmatprep.subr.bf16.mxu0 0
      %3481 = vmatpush1.bf16.msra.mxu0 0
      %3482 = vmatprep.subr.bf16.mxu0 0
      %3483 = vmatpush1.bf16.msra.mxu0 0
      %3484 = vmatprep.subr.bf16.mxu0 0
      %3485 = vmatpush1.bf16.msra.mxu0 0
      %3486 = vmatprep.subr.bf16.mxu0 0
      %3487 = vmatpush1.bf16.msra.mxu0 0
      %3488 = vmatprep.subr.bf16.mxu0 0
      %3489 = vmatpush1.bf16.msra.mxu0 0
      %3490 = vmatprep.subr.bf16.mxu0 0
      %3491 = vmatpush1.bf16.msra.mxu0 0
      %3492 = vmatprep.subr.bf16.mxu0 0
      %3493 = vmatpush1.bf16.msra.mxu0 0
      %3494 = vmatprep.subr.bf16.mxu0 0
      %3495 = vmatpush1.bf16.msra.mxu0 0
      %3496 = vmatprep.subr.bf16.mxu0 0
      %3497 = vmatpush1.bf16.msra.mxu0 0
      %3498 = vmatprep.subr.bf16.mxu0 0
      %3499 = vmatpush1.bf16.msra.mxu0 0
      %3500 = vmatprep.subr.bf16.mxu0 0
      %3501 = vmatpush1.bf16.msra.mxu0 0
      %3502 = vmatprep.subr.bf16.mxu0 0
      %3503 = vmatpush1.bf16.msra.mxu0 0
      %3504 = vmatprep.mubr.bf16.mxu0 0
      %3505 = vmatmul.mubr.bf16.gmra.mrb[0].mxu0 %v3464
      %v3506 = vpop.f32.mrb[0].mxu0
      %v3507 = vadd.f32 0.0, %v3506
      %v3508 = vpop.f32.mrb[0].mxu0
      %v3509 = vadd.f32 0.0, %v3508
      %v3510 = vpop.f32.mrb[0].mxu0
      %v3511 = vadd.f32 0.0, %v3510
      %v3512 = vpop.f32.mrb[0].mxu0
      %v3513 = vadd.f32 0.0, %v3512
      %3514 = vdwg.mxu0
      %v3515 = vadd.f32 %v3400, %v3507
      %v3516 = vadd.f32 %v3401, %v3509
      %v3517 = vadd.f32 %v3402, %v3511
      %v3518 = vadd.f32 %v3403, %v3513
      %v3519 = vsel %vm849, %v3404, 0
      %v3520 = vsel %vm850, %v3405, 0
      %v3521 = vsel %vm849, %v3406, 0
      %v3522 = vsel %vm850, %v3407, 0
      %v3523 = vsel %vm849, %v3408, 0
      %v3524 = vsel %vm850, %v3409, 0
      %s3525 = scalar_lea.vmem %s2, 396
      %v3526 = vld [vmem:[%s3525] sm:$0xf]
      %v3527 = vld [vmem:[%s3525 + $0x4] sm:$0xf]
      %v3530 = vunpack.c.l.b16 %v3526
      %v3531 = vunpack.c.l.b16 %v3527
      %v3532 = vpack.c.b16 %v3531, %v3530
      %v3539 = vunpack.c.l.b16 %v3519
      %v3540 = vunpack.c.h.b16 %v3519
      %v3541 = vunpack.c.l.b16 %v3520
      %v3542 = vunpack.c.l.b16 %v3521
      %v3543 = vunpack.c.h.b16 %v3521
      %v3544 = vunpack.c.l.b16 %v3522
      %v3545 = vunpack.c.l.b16 %v3523
      %v3546 = vunpack.c.h.b16 %v3523
      %v3547 = vunpack.c.l.b16 %v3524
      %v3548 = vpack.c.b16 %v3542, %v3539
      %v3549 = vpack.c.b16 %v3543, %v3540
      %v3550 = vpack.c.b16 %v3544, %v3541
      %v3551 = vpack.c.b16 %v3545, %v3545
      %v3552 = vpack.c.b16 %v3546, %v3546
      %v3553 = vpack.c.b16 %v3547, %v3547
      %3554 = vrot.lane.b32.xlu0 %v3548, 113
      %v3555 = vpop.permute.xlu0 %3554
      %3556 = vrot.lane.b32.xlu0 %v3549, 113
      %v3557 = vpop.permute.xlu0 %3556
      %3558 = vrot.lane.b32.xlu0 %v3550, 113
      %v3559 = vpop.permute.xlu0 %3558
      %3560 = vrot.lane.b32.xlu0 %v3551, 113
      %v3561 = vpop.permute.xlu0 %3560
      %3562 = vrot.lane.b32.xlu0 %v3552, 113
      %v3563 = vpop.permute.xlu0 %3562
      %3564 = vrot.lane.b32.xlu0 %v3553, 113
      %v3565 = vpop.permute.xlu0 %3564
      %v3566 = vsel %vm508, %v3555, %v3557
      %v3567 = vsel %vm508, %v3557, %v3559
      %v3568 = vsel %vm508, %v3561, %v3563
      %v3569 = vsel %vm508, %v3563, %v3565
      %v3573 = vsel %vm2955, %v3532, 0
      %v3576 = vand.u32 %v3568, %v375
      %v3579 = vand.u32 %v3569, %v375
      %3581 = vmatprep.subr.bf16.mxu0 %v3567
      %3582 = vmatpush1.bf16.msra.mxu0 %v3566
      %3583 = vmatprep.subr.bf16.mxu0 %v3579
      %3584 = vmatpush1.bf16.msra.mxu0 %v3576
      %3585 = vmatprep.subr.bf16.mxu0 0
      %3586 = vmatpush1.bf16.msra.mxu0 0
      %3587 = vmatprep.subr.bf16.mxu0 0
      %3588 = vmatpush1.bf16.msra.mxu0 0
      %3589 = vmatprep.subr.bf16.mxu0 0
      %3590 = vmatpush1.bf16.msra.mxu0 0
      %3591 = vmatprep.subr.bf16.mxu0 0
      %3592 = vmatpush1.bf16.msra.mxu0 0
      %3593 = vmatprep.subr.bf16.mxu0 0
      %3594 = vmatpush1.bf16.msra.mxu0 0
      %3595 = vmatprep.subr.bf16.mxu0 0
      %3596 = vmatpush1.bf16.msra.mxu0 0
      %3597 = vmatprep.subr.bf16.mxu0 0
      %3598 = vmatpush1.bf16.msra.mxu0 0
      %3599 = vmatprep.subr.bf16.mxu0 0
      %3600 = vmatpush1.bf16.msra.mxu0 0
      %3601 = vmatprep.subr.bf16.mxu0 0
      %3602 = vmatpush1.bf16.msra.mxu0 0
      %3603 = vmatprep.subr.bf16.mxu0 0
      %3604 = vmatpush1.bf16.msra.mxu0 0
      %3605 = vmatprep.subr.bf16.mxu0 0
      %3606 = vmatpush1.bf16.msra.mxu0 0
      %3607 = vmatprep.subr.bf16.mxu0 0
      %3608 = vmatpush1.bf16.msra.mxu0 0
      %3609 = vmatprep.subr.bf16.mxu0 0
      %3610 = vmatpush1.bf16.msra.mxu0 0
      %3611 = vmatprep.subr.bf16.mxu0 0
      %3612 = vmatpush1.bf16.msra.mxu0 0
      %3613 = vmatprep.mubr.bf16.mxu0 0
      %3614 = vmatmul.mubr.bf16.gmra.mrb[0].mxu0 %v3573
      %v3615 = vpop.f32.mrb[0].mxu0
      %v3616 = vadd.f32 0.0, %v3615
      %v3617 = vpop.f32.mrb[0].mxu0
      %v3618 = vadd.f32 0.0, %v3617
      %v3619 = vpop.f32.mrb[0].mxu0
      %v3620 = vadd.f32 0.0, %v3619
      %v3621 = vpop.f32.mrb[0].mxu0
      %v3622 = vadd.f32 0.0, %v3621
      %3623 = vdwg.mxu0
      %v3624 = vadd.f32 %v3515, %v3616
      %v3625 = vadd.f32 %v3516, %v3618
      %v3626 = vadd.f32 %v3517, %v3620
      %v3627 = vadd.f32 %v3518, %v3622
      %s3628 = scalar_lea.vmem %s2, 408
      %v3629 = vld [vmem:[%s3628] sm:$0xf]
      %v3630 = vld [vmem:[%s3628 + $0x4] sm:$0xf]
      %v3633 = vunpack.c.l.b16 %v3629
      %v3634 = vunpack.c.l.b16 %v3630
      %v3635 = vpack.c.b16 %v3634, %v3633
      %v3642 = vunpack.c.l.b16 %v3404
      %v3643 = vunpack.c.h.b16 %v3404
      %v3644 = vunpack.c.l.b16 %v3405
      %v3645 = vunpack.c.l.b16 %v3406
      %v3646 = vunpack.c.h.b16 %v3406
      %v3647 = vunpack.c.l.b16 %v3407
      %v3648 = vunpack.c.l.b16 %v3408
      %v3649 = vunpack.c.h.b16 %v3408
      %v3650 = vunpack.c.l.b16 %v3409
      %v3651 = vpack.c.b16 %v3645, %v3642
      %v3652 = vpack.c.b16 %v3646, %v3643
      %v3653 = vpack.c.b16 %v3647, %v3644
      %v3654 = vpack.c.b16 %v3648, %v3648
      %v3655 = vpack.c.b16 %v3649, %v3649
      %v3656 = vpack.c.b16 %v3650, %v3650
      %3657 = vrot.lane.b32.xlu0 %v3651, 112
      %v3658 = vpop.permute.xlu0 %3657
      %3659 = vrot.lane.b32.xlu0 %v3652, 112
      %v3660 = vpop.permute.xlu0 %3659
      %3661 = vrot.lane.b32.xlu0 %v3653, 112
      %v3662 = vpop.permute.xlu0 %3661
      %3663 = vrot.lane.b32.xlu0 %v3654, 112
      %v3664 = vpop.permute.xlu0 %3663
      %3665 = vrot.lane.b32.xlu0 %v3655, 112
      %v3666 = vpop.permute.xlu0 %3665
      %3667 = vrot.lane.b32.xlu0 %v3656, 112
      %v3668 = vpop.permute.xlu0 %3667
      %v3669 = vsel %vm955, %v3658, %v3660
      %v3670 = vsel %vm955, %v3660, %v3662
      %v3671 = vsel %vm955, %v3664, %v3666
      %v3672 = vsel %vm955, %v3666, %v3668
      %v3676 = vsel %vm2955, %v3635, 0
      %v3679 = vand.u32 %v3671, %v375
      %v3682 = vand.u32 %v3672, %v375
      %3684 = vmatprep.subr.bf16.mxu0 %v3670
      %3685 = vmatpush1.bf16.msra.mxu0 %v3669
      %3686 = vmatprep.subr.bf16.mxu0 %v3682
      %3687 = vmatpush1.bf16.msra.mxu0 %v3679
      %3688 = vmatprep.subr.bf16.mxu0 0
      %3689 = vmatpush1.bf16.msra.mxu0 0
      %3690 = vmatprep.subr.bf16.mxu0 0
      %3691 = vmatpush1.bf16.msra.mxu0 0
      %3692 = vmatprep.subr.bf16.mxu0 0
      %3693 = vmatpush1.bf16.msra.mxu0 0
      %3694 = vmatprep.subr.bf16.mxu0 0
      %3695 = vmatpush1.bf16.msra.mxu0 0
      %3696 = vmatprep.subr.bf16.mxu0 0
      %3697 = vmatpush1.bf16.msra.mxu0 0
      %3698 = vmatprep.subr.bf16.mxu0 0
      %3699 = vmatpush1.bf16.msra.mxu0 0
      %3700 = vmatprep.subr.bf16.mxu0 0
      %3701 = vmatpush1.bf16.msra.mxu0 0
      %3702 = vmatprep.subr.bf16.mxu0 0
      %3703 = vmatpush1.bf16.msra.mxu0 0
      %3704 = vmatprep.subr.bf16.mxu0 0
      %3705 = vmatpush1.bf16.msra.mxu0 0
      %3706 = vmatprep.subr.bf16.mxu0 0
      %3707 = vmatpush1.bf16.msra.mxu0 0
      %3708 = vmatprep.subr.bf16.mxu0 0
      %3709 = vmatpush1.bf16.msra.mxu0 0
      %3710 = vmatprep.subr.bf16.mxu0 0
      %3711 = vmatpush1.bf16.msra.mxu0 0
      %3712 = vmatprep.subr.bf16.mxu0 0
      %3713 = vmatpush1.bf16.msra.mxu0 0
      %3714 = vmatprep.subr.bf16.mxu0 0
      %3715 = vmatpush1.bf16.msra.mxu0 0
      %3716 = vmatprep.mubr.bf16.mxu0 0
      %3717 = vmatmul.mubr.bf16.gmra.mrb[0].mxu0 %v3676
      %v3718 = vpop.f32.mrb[0].mxu0
      %v3719 = vadd.f32 0.0, %v3718
      %v3720 = vpop.f32.mrb[0].mxu0
      %v3721 = vadd.f32 0.0, %v3720
      %v3722 = vpop.f32.mrb[0].mxu0
      %v3723 = vadd.f32 0.0, %v3722
      %v3724 = vpop.f32.mrb[0].mxu0
      %v3725 = vadd.f32 0.0, %v3724
      %3726 = vdwg.mxu0
      %v3727 = vadd.f32 %v3624, %v3719
      %v3728 = vadd.f32 %v3625, %v3721
      %v3729 = vadd.f32 %v3626, %v3723
      %v3730 = vadd.f32 %v3627, %v3725
      %v3731 = vsel %vm1018, %v3404, 0
      %v3732 = vsel %vm1019, %v3405, 0
      %v3733 = vsel %vm1018, %v3406, 0
      %v3734 = vsel %vm1019, %v3407, 0
      %v3735 = vsel %vm1018, %v3408, 0
      %v3736 = vsel %vm1019, %v3409, 0
      %s3737 = scalar_lea.vmem %s2, 420
      %v3738 = vld [vmem:[%s3737] sm:$0xf]
      %v3739 = vld [vmem:[%s3737 + $0x4] sm:$0xf]
      %v3742 = vunpack.c.l.b16 %v3738
      %v3743 = vunpack.c.l.b16 %v3739
      %v3744 = vpack.c.b16 %v3743, %v3742
      %v3751 = vunpack.c.l.b16 %v3731
      %v3752 = vunpack.c.h.b16 %v3731
      %v3753 = vunpack.c.l.b16 %v3732
      %v3754 = vunpack.c.l.b16 %v3733
      %v3755 = vunpack.c.h.b16 %v3733
      %v3756 = vunpack.c.l.b16 %v3734
      %v3757 = vunpack.c.l.b16 %v3735
      %v3758 = vunpack.c.h.b16 %v3735
      %v3759 = vunpack.c.l.b16 %v3736
      %v3760 = vpack.c.b16 %v3754, %v3751
      %v3761 = vpack.c.b16 %v3755, %v3752
      %v3762 = vpack.c.b16 %v3756, %v3753
      %v3763 = vpack.c.b16 %v3757, %v3757
      %v3764 = vpack.c.b16 %v3758, %v3758
      %v3765 = vpack.c.b16 %v3759, %v3759
      %3766 = vrot.lane.b32.xlu0 %v3760, 111
      %v3767 = vpop.permute.xlu0 %3766
      %3768 = vrot.lane.b32.xlu0 %v3761, 111
      %v3769 = vpop.permute.xlu0 %3768
      %3770 = vrot.lane.b32.xlu0 %v3762, 111
      %v3771 = vpop.permute.xlu0 %3770
      %3772 = vrot.lane.b32.xlu0 %v3763, 111
      %v3773 = vpop.permute.xlu0 %3772
      %3774 = vrot.lane.b32.xlu0 %v3764, 111
      %v3775 = vpop.permute.xlu0 %3774
      %3776 = vrot.lane.b32.xlu0 %v3765, 111
      %v3777 = vpop.permute.xlu0 %3776
      %v3778 = vsel %vm335, %v3767, %v3769
      %v3779 = vsel %vm335, %v3769, %v3771
      %v3780 = vsel %vm335, %v3773, %v3775
      %v3781 = vsel %vm335, %v3775, %v3777
      %v3785 = vsel %vm2955, %v3744, 0
      %v3788 = vand.u32 %v3780, %v375
      %v3791 = vand.u32 %v3781, %v375
      %3793 = vmatprep.subr.bf16.mxu0 %v3779
      %3794 = vmatpush1.bf16.msra.mxu0 %v3778
      %3795 = vmatprep.subr.bf16.mxu0 %v3791
      %3796 = vmatpush1.bf16.msra.mxu0 %v3788
      %3797 = vmatprep.subr.bf16.mxu0 0
      %3798 = vmatpush1.bf16.msra.mxu0 0
      %3799 = vmatprep.subr.bf16.mxu0 0
      %3800 = vmatpush1.bf16.msra.mxu0 0
      %3801 = vmatprep.subr.bf16.mxu0 0
      %3802 = vmatpush1.bf16.msra.mxu0 0
      %3803 = vmatprep.subr.bf16.mxu0 0
      %3804 = vmatpush1.bf16.msra.mxu0 0
      %3805 = vmatprep.subr.bf16.mxu0 0
      %3806 = vmatpush1.bf16.msra.mxu0 0
      %3807 = vmatprep.subr.bf16.mxu0 0
      %3808 = vmatpush1.bf16.msra.mxu0 0
      %3809 = vmatprep.subr.bf16.mxu0 0
      %3810 = vmatpush1.bf16.msra.mxu0 0
      %3811 = vmatprep.subr.bf16.mxu0 0
      %3812 = vmatpush1.bf16.msra.mxu0 0
      %3813 = vmatprep.subr.bf16.mxu0 0
      %3814 = vmatpush1.bf16.msra.mxu0 0
      %3815 = vmatprep.subr.bf16.mxu0 0
      %3816 = vmatpush1.bf16.msra.mxu0 0
      %3817 = vmatprep.subr.bf16.mxu0 0
      %3818 = vmatpush1.bf16.msra.mxu0 0
      %3819 = vmatprep.subr.bf16.mxu0 0
      %3820 = vmatpush1.bf16.msra.mxu0 0
      %3821 = vmatprep.subr.bf16.mxu0 0
      %3822 = vmatpush1.bf16.msra.mxu0 0
      %3823 = vmatprep.subr.bf16.mxu0 0
      %3824 = vmatpush1.bf16.msra.mxu0 0
      %3825 = vmatprep.mubr.bf16.mxu0 0
      %3826 = vmatmul.mubr.bf16.gmra.mrb[0].mxu0 %v3785
      %v3827 = vpop.f32.mrb[0].mxu0
      %v3828 = vadd.f32 0.0, %v3827
      %v3829 = vpop.f32.mrb[0].mxu0
      %v3830 = vadd.f32 0.0, %v3829
      %v3831 = vpop.f32.mrb[0].mxu0
      %v3832 = vadd.f32 0.0, %v3831
      %v3833 = vpop.f32.mrb[0].mxu0
      %v3834 = vadd.f32 0.0, %v3833
      %3835 = vdwg.mxu0
      %v3836 = vadd.f32 %v3727, %v3828
      %v3837 = vadd.f32 %v3728, %v3830
      %v3838 = vadd.f32 %v3729, %v3832
      %v3839 = vadd.f32 %v3730, %v3834
      %v3840 = vld [vmem:[%s3] sm:$0xff]
      %v3841 = vld [vmem:[%s3 + $0x8] sm:$0xff]
      %3843 = vset.pattern.permute.xlu0 3
      %3844 = vperm.xlu0 %3843, %v3840
      %v3845 = vpop.permute.xlu0 %3844
      %3848 = vset.pattern.permute.xlu0 3
      %3849 = vperm.xlu0 %3848, %v3841
      %v3850 = vpop.permute.xlu0 %3849
      %v3852 = vadd.f32 %v3836, %v3845
      %v3853 = vadd.f32 %v3837, %v3845
      %v3854 = vadd.f32 %v3838, %v3850
      %v3855 = vadd.f32 %v3839, %v3850
      %v3856 = vmax.f32 %v3852, 0.0
      %v3857 = vmax.f32 %v3853, 0.0
      %v3858 = vmax.f32 %v3854, 0.0
      %v3859 = vmax.f32 %v3855, 0.0
      %v3860 = vpack.c.bf16 %v3858, %v3856
      %v3861 = vpack.c.bf16 %v3859, %v3857
      %v3864 = vunpack.c.l.b16 %v3860
      %v3865 = vunpack.c.l.b16 %v3861
      %v3866 = vunpack.c.h.b16 %v3860
      %v3867 = vunpack.c.h.b16 %v3861
      %v3868 = vpack.c.b16 %v3865, %v3864
      %v3869 = vpack.c.b16 %v3867, %v3866
      %3872 = vst [vmem:[#allocation2 + $0x4] sm:$0xff] %v3868
      %3873 = vst [vmem:[#allocation2 + $0x14] sm:$0xff] %v3869
      %v3874 = vld [vmem:[#allocation2] sm:$0xff]
      %v3875 = vld [vmem:[#allocation2 + $0x8] sm:$0xf]
      %v3876 = vld [vmem:[#allocation2 + $0x10] sm:$0xff]
      %v3877 = vld [vmem:[#allocation2 + $0x18] sm:$0xf]
      %v3878 = vsel %vm337, %v3874, 0
      %v3879 = vsel %vm338, %v3875, 0
      %v3880 = vsel %vm337, %v3876, 0
      %v3881 = vsel %vm338, %v3877, 0
      %s3882 = scalar_lea.vmem %s2, 432
      %v3883 = vld [vmem:[%s3882] sm:$0x3]
      %s3884 = scalar_lea.vmem %s2, 444
      %v3885 = vld [vmem:[%s3884] sm:$0x3]
      %v3890 = vunpack.c.l.b16 %v3874
      %v3891 = vunpack.c.h.b16 %v3874
      %v3892 = vunpack.c.l.b16 %v3875
      %v3893 = vunpack.c.l.b16 %v3876
      %v3894 = vunpack.c.h.b16 %v3876
      %v3895 = vunpack.c.l.b16 %v3877
      %v3896 = vpack.c.b16 %v3893, %v3890
      %v3897 = vpack.c.b16 %v3894, %v3891
      %v3898 = vpack.c.b16 %v3895, %v3892
      %3899 = vrot.lane.b32.xlu0 %v3896, 16
      %v3900 = vpop.permute.xlu0 %3899
      %3901 = vrot.lane.b32.xlu0 %v3897, 16
      %v3902 = vpop.permute.xlu0 %3901
      %3903 = vrot.lane.b32.xlu0 %v3898, 16
      %v3904 = vpop.permute.xlu0 %3903
      %v3905 = vsel %vm365, %v3900, %v3902
      %v3906 = vsel %vm365, %v3902, %v3904
      %v3910 = vsel %vm1178, %v3885, 0
      %3912 = vmatprep.subr.bf16.mxu0 %v3906
      %3913 = vmatpush1.bf16.msra.mxu0 %v3905
      %3914 = vmatprep.subr.bf16.mxu0 0
      %3915 = vmatpush1.bf16.msra.mxu0 0
      %3916 = vmatprep.subr.bf16.mxu0 0
      %3917 = vmatpush1.bf16.msra.mxu0 0
      %3918 = vmatprep.subr.bf16.mxu0 0
      %3919 = vmatpush1.bf16.msra.mxu0 0
      %3920 = vmatprep.subr.bf16.mxu0 0
      %3921 = vmatpush1.bf16.msra.mxu0 0
      %3922 = vmatprep.subr.bf16.mxu0 0
      %3923 = vmatpush1.bf16.msra.mxu0 0
      %3924 = vmatprep.subr.bf16.mxu0 0
      %3925 = vmatpush1.bf16.msra.mxu0 0
      %3926 = vmatprep.subr.bf16.mxu0 0
      %3927 = vmatpush1.bf16.msra.mxu0 0
      %3928 = vmatprep.subr.bf16.mxu0 0
      %3929 = vmatpush1.bf16.msra.mxu0 0
      %3930 = vmatprep.subr.bf16.mxu0 0
      %3931 = vmatpush1.bf16.msra.mxu0 0
      %3932 = vmatprep.subr.bf16.mxu0 0
      %3933 = vmatpush1.bf16.msra.mxu0 0
      %3934 = vmatprep.subr.bf16.mxu0 0
      %3935 = vmatpush1.bf16.msra.mxu0 0
      %3936 = vmatprep.subr.bf16.mxu0 0
      %3937 = vmatpush1.bf16.msra.mxu0 0
      %3938 = vmatprep.subr.bf16.mxu0 0
      %3939 = vmatpush1.bf16.msra.mxu0 0
      %3940 = vmatprep.subr.bf16.mxu0 0
      %3941 = vmatpush1.bf16.msra.mxu0 0
      %3942 = vmatprep.subr.bf16.mxu0 0
      %3943 = vmatpush1.bf16.msra.mxu0 0
      %3944 = vmatprep.mubr.bf16.mxu0 0
      %3945 = vmatmul.mubr.bf16.gmra.mrb[0].mxu0 %v3910
      %v3946 = vpop.f32.mrb[0].mxu0
      %v3947 = vadd.f32 0.0, %v3946
      %v3948 = vpop.f32.mrb[0].mxu0
      %v3949 = vadd.f32 0.0, %v3948
      %v3950 = vpop.f32.mrb[0].mxu0
      %v3951 = vpop.f32.mrb[0].mxu0
      %3952 = vdwg.mxu0
      %v3957 = vunpack.c.l.b16 %v3878
      %v3958 = vunpack.c.h.b16 %v3878
      %v3959 = vunpack.c.l.b16 %v3879
      %v3960 = vunpack.c.l.b16 %v3880
      %v3961 = vunpack.c.h.b16 %v3880
      %v3962 = vunpack.c.l.b16 %v3881
      %v3963 = vpack.c.b16 %v3960, %v3957
      %v3964 = vpack.c.b16 %v3961, %v3958
      %v3965 = vpack.c.b16 %v3962, %v3959
      %3966 = vrot.lane.b32.xlu0 %v3963, 17
      %v3967 = vpop.permute.xlu0 %3966
      %3968 = vrot.lane.b32.xlu0 %v3964, 17
      %v3969 = vpop.permute.xlu0 %3968
      %3970 = vrot.lane.b32.xlu0 %v3965, 17
      %v3971 = vpop.permute.xlu0 %3970
      %v3972 = vsel %vm444, %v3967, %v3969
      %v3973 = vsel %vm444, %v3969, %v3971
      %v3977 = vsel %vm1178, %v3883, 0
      %3979 = vmatprep.subr.bf16.mxu0 %v3973
      %3980 = vmatpush1.bf16.msra.mxu0 %v3972
      %3981 = vmatprep.subr.bf16.mxu0 0
      %3982 = vmatpush1.bf16.msra.mxu0 0
      %3983 = vmatprep.subr.bf16.mxu0 0
      %3984 = vmatpush1.bf16.msra.mxu0 0
      %3985 = vmatprep.subr.bf16.mxu0 0
      %3986 = vmatpush1.bf16.msra.mxu0 0
      %3987 = vmatprep.subr.bf16.mxu0 0
      %3988 = vmatpush1.bf16.msra.mxu0 0
      %3989 = vmatprep.subr.bf16.mxu0 0
      %3990 = vmatpush1.bf16.msra.mxu0 0
      %3991 = vmatprep.subr.bf16.mxu0 0
      %3992 = vmatpush1.bf16.msra.mxu0 0
      %3993 = vmatprep.subr.bf16.mxu0 0
      %3994 = vmatpush1.bf16.msra.mxu0 0
      %3995 = vmatprep.subr.bf16.mxu0 0
      %3996 = vmatpush1.bf16.msra.mxu0 0
      %3997 = vmatprep.subr.bf16.mxu0 0
      %3998 = vmatpush1.bf16.msra.mxu0 0
      %3999 = vmatprep.subr.bf16.mxu0 0
      %4000 = vmatpush1.bf16.msra.mxu0 0
      %4001 = vmatprep.subr.bf16.mxu0 0
      %4002 = vmatpush1.bf16.msra.mxu0 0
      %4003 = vmatprep.subr.bf16.mxu0 0
      %4004 = vmatpush1.bf16.msra.mxu0 0
      %4005 = vmatprep.subr.bf16.mxu0 0
      %4006 = vmatpush1.bf16.msra.mxu0 0
      %4007 = vmatprep.subr.bf16.mxu0 0
      %4008 = vmatpush1.bf16.msra.mxu0 0
      %4009 = vmatprep.subr.bf16.mxu0 0
      %4010 = vmatpush1.bf16.msra.mxu0 0
      %4011 = vmatprep.mubr.bf16.mxu0 0
      %4012 = vmatmul.mubr.bf16.gmra.mrb[0].mxu0 %v3977
      %v4013 = vpop.f32.mrb[0].mxu0
      %v4014 = vadd.f32 %v3947, %v4013
      %v4015 = vpop.f32.mrb[0].mxu0
      %v4016 = vadd.f32 %v3949, %v4015
      %v4017 = vpop.f32.mrb[0].mxu0
      %v4018 = vpop.f32.mrb[0].mxu0
      %4019 = vdwg.mxu0
      %v4020 = vsel %vm510, %v3874, 0
      %v4021 = vsel %vm511, %v3875, 0
      %v4022 = vsel %vm510, %v3876, 0
      %v4023 = vsel %vm511, %v3877, 0
      %s4024 = scalar_lea.vmem %s2, 456
      %v4025 = vld [vmem:[%s4024] sm:$0x3]
      %v4030 = vunpack.c.l.b16 %v4020
      %v4031 = vunpack.c.h.b16 %v4020
      %v4032 = vunpack.c.l.b16 %v4021
      %v4033 = vunpack.c.l.b16 %v4022
      %v4034 = vunpack.c.h.b16 %v4022
      %v4035 = vunpack.c.l.b16 %v4023
      %v4036 = vpack.c.b16 %v4033, %v4030
      %v4037 = vpack.c.b16 %v4034, %v4031
      %v4038 = vpack.c.b16 %v4035, %v4032
      %4039 = vrot.lane.b32.xlu0 %v4036, 15
      %v4040 = vpop.permute.xlu0 %4039
      %4041 = vrot.lane.b32.xlu0 %v4037, 15
      %v4042 = vpop.permute.xlu0 %4041
      %4043 = vrot.lane.b32.xlu0 %v4038, 15
      %v4044 = vpop.permute.xlu0 %4043
      %v4045 = vsel %vm536, %v4040, %v4042
      %v4046 = vsel %vm536, %v4042, %v4044
      %v4050 = vsel %vm1178, %v4025, 0
      %4052 = vmatprep.subr.bf16.mxu0 %v4046
      %4053 = vmatpush1.bf16.msra.mxu0 %v4045
      %4054 = vmatprep.subr.bf16.mxu0 0
      %4055 = vmatpush1.bf16.msra.mxu0 0
      %4056 = vmatprep.subr.bf16.mxu0 0
      %4057 = vmatpush1.bf16.msra.mxu0 0
      %4058 = vmatprep.subr.bf16.mxu0 0
      %4059 = vmatpush1.bf16.msra.mxu0 0
      %4060 = vmatprep.subr.bf16.mxu0 0
      %4061 = vmatpush1.bf16.msra.mxu0 0
      %4062 = vmatprep.subr.bf16.mxu0 0
      %4063 = vmatpush1.bf16.msra.mxu0 0
      %4064 = vmatprep.subr.bf16.mxu0 0
      %4065 = vmatpush1.bf16.msra.mxu0 0
      %4066 = vmatprep.subr.bf16.mxu0 0
      %4067 = vmatpush1.bf16.msra.mxu0 0
      %4068 = vmatprep.subr.bf16.mxu0 0
      %4069 = vmatpush1.bf16.msra.mxu0 0
      %4070 = vmatprep.subr.bf16.mxu0 0
      %4071 = vmatpush1.bf16.msra.mxu0 0
      %4072 = vmatprep.subr.bf16.mxu0 0
      %4073 = vmatpush1.bf16.msra.mxu0 0
      %4074 = vmatprep.subr.bf16.mxu0 0
      %4075 = vmatpush1.bf16.msra.mxu0 0
      %4076 = vmatprep.subr.bf16.mxu0 0
      %4077 = vmatpush1.bf16.msra.mxu0 0
      %4078 = vmatprep.subr.bf16.mxu0 0
      %4079 = vmatpush1.bf16.msra.mxu0 0
      %4080 = vmatprep.subr.bf16.mxu0 0
      %4081 = vmatpush1.bf16.msra.mxu0 0
      %4082 = vmatprep.subr.bf16.mxu0 0
      %4083 = vmatpush1.bf16.msra.mxu0 0
      %4084 = vmatprep.mubr.bf16.mxu0 0
      %4085 = vmatmul.mubr.bf16.gmra.mrb[0].mxu0 %v4050
      %v4086 = vpop.f32.mrb[0].mxu0
      %v4087 = vadd.f32 0.0, %v4086
      %v4088 = vpop.f32.mrb[0].mxu0
      %v4089 = vadd.f32 0.0, %v4088
      %v4090 = vpop.f32.mrb[0].mxu0
      %v4091 = vpop.f32.mrb[0].mxu0
      %4092 = vdwg.mxu0
      %v4093 = vadd.f32 %v4014, %v4087
      %v4094 = vadd.f32 %v4016, %v4089
      %v4095 = vsel %vm600, %v3874, 0
      %v4096 = vsel %vm601, %v3875, 0
      %v4097 = vsel %vm600, %v3876, 0
      %v4098 = vsel %vm601, %v3877, 0
      %s4099 = scalar_lea.vmem %s2, 468
      %v4100 = vld [vmem:[%s4099] sm:$0x3]
      %v4105 = vunpack.c.l.b16 %v4095
      %v4106 = vunpack.c.h.b16 %v4095
      %v4107 = vunpack.c.l.b16 %v4096
      %v4108 = vunpack.c.l.b16 %v4097
      %v4109 = vunpack.c.h.b16 %v4097
      %v4110 = vunpack.c.l.b16 %v4098
      %v4111 = vpack.c.b16 %v4108, %v4105
      %v4112 = vpack.c.b16 %v4109, %v4106
      %v4113 = vpack.c.b16 %v4110, %v4107
      %4114 = vrot.lane.b32.xlu0 %v4111, 1
      %v4115 = vpop.permute.xlu0 %4114
      %4116 = vrot.lane.b32.xlu0 %v4112, 1
      %v4117 = vpop.permute.xlu0 %4116
      %4118 = vrot.lane.b32.xlu0 %v4113, 1
      %v4119 = vpop.permute.xlu0 %4118
      %v4120 = vsel %vm626, %v4115, %v4117
      %v4121 = vsel %vm626, %v4117, %v4119
      %v4125 = vsel %vm1178, %v4100, 0
      %4127 = vmatprep.subr.bf16.mxu0 %v4121
      %4128 = vmatpush1.bf16.msra.mxu0 %v4120
      %4129 = vmatprep.subr.bf16.mxu0 0
      %4130 = vmatpush1.bf16.msra.mxu0 0
      %4131 = vmatprep.subr.bf16.mxu0 0
      %4132 = vmatpush1.bf16.msra.mxu0 0
      %4133 = vmatprep.subr.bf16.mxu0 0
      %4134 = vmatpush1.bf16.msra.mxu0 0
      %4135 = vmatprep.subr.bf16.mxu0 0
      %4136 = vmatpush1.bf16.msra.mxu0 0
      %4137 = vmatprep.subr.bf16.mxu0 0
      %4138 = vmatpush1.bf16.msra.mxu0 0
      %4139 = vmatprep.subr.bf16.mxu0 0
      %4140 = vmatpush1.bf16.msra.mxu0 0
      %4141 = vmatprep.subr.bf16.mxu0 0
      %4142 = vmatpush1.bf16.msra.mxu0 0
      %4143 = vmatprep.subr.bf16.mxu0 0
      %4144 = vmatpush1.bf16.msra.mxu0 0
      %4145 = vmatprep.subr.bf16.mxu0 0
      %4146 = vmatpush1.bf16.msra.mxu0 0
      %4147 = vmatprep.subr.bf16.mxu0 0
      %4148 = vmatpush1.bf16.msra.mxu0 0
      %4149 = vmatprep.subr.bf16.mxu0 0
      %4150 = vmatpush1.bf16.msra.mxu0 0
      %4151 = vmatprep.subr.bf16.mxu0 0
      %4152 = vmatpush1.bf16.msra.mxu0 0
      %4153 = vmatprep.subr.bf16.mxu0 0
      %4154 = vmatpush1.bf16.msra.mxu0 0
      %4155 = vmatprep.subr.bf16.mxu0 0
      %4156 = vmatpush1.bf16.msra.mxu0 0
      %4157 = vmatprep.subr.bf16.mxu0 0
      %4158 = vmatpush1.bf16.msra.mxu0 0
      %4159 = vmatprep.mubr.bf16.mxu0 0
      %4160 = vmatmul.mubr.bf16.gmra.mrb[0].mxu0 %v4125
      %v4161 = vpop.f32.mrb[0].mxu0
      %v4162 = vadd.f32 0.0, %v4161
      %v4163 = vpop.f32.mrb[0].mxu0
      %v4164 = vadd.f32 0.0, %v4163
      %v4165 = vpop.f32.mrb[0].mxu0
      %v4166 = vpop.f32.mrb[0].mxu0
      %4167 = vdwg.mxu0
      %v4168 = vadd.f32 %v4093, %v4162
      %v4169 = vadd.f32 %v4094, %v4164
      %v4170 = vld [vmem:[#allocation2 + $0x4] sm:$0xff]
      %v4171 = vld [vmem:[#allocation2 + $0x14] sm:$0xff]
      %s4172 = scalar_lea.vmem %s2, 480
      %v4173 = vld [vmem:[%s4172] sm:$0x3]
      %v4176 = vunpack.c.l.b16 %v4170
      %v4177 = vunpack.c.h.b16 %v4170
      %v4178 = vunpack.c.l.b16 %v4171
      %v4179 = vunpack.c.h.b16 %v4171
      %v4180 = vpack.c.b16 %v4178, %v4176
      %v4181 = vpack.c.b16 %v4179, %v4177
      %v4185 = vsel %vm1178, %v4173, 0
      %4187 = vmatprep.subr.bf16.mxu0 %v4181
      %4188 = vmatpush1.bf16.msra.mxu0 %v4180
      %4189 = vmatprep.subr.bf16.mxu0 0
      %4190 = vmatpush1.bf16.msra.mxu0 0
      %4191 = vmatprep.subr.bf16.mxu0 0
      %4192 = vmatpush1.bf16.msra.mxu0 0
      %4193 = vmatprep.subr.bf16.mxu0 0
      %4194 = vmatpush1.bf16.msra.mxu0 0
      %4195 = vmatprep.subr.bf16.mxu0 0
      %4196 = vmatpush1.bf16.msra.mxu0 0
      %4197 = vmatprep.subr.bf16.mxu0 0
      %4198 = vmatpush1.bf16.msra.mxu0 0
      %4199 = vmatprep.subr.bf16.mxu0 0
      %4200 = vmatpush1.bf16.msra.mxu0 0
      %4201 = vmatprep.subr.bf16.mxu0 0
      %4202 = vmatpush1.bf16.msra.mxu0 0
      %4203 = vmatprep.subr.bf16.mxu0 0
      %4204 = vmatpush1.bf16.msra.mxu0 0
      %4205 = vmatprep.subr.bf16.mxu0 0
      %4206 = vmatpush1.bf16.msra.mxu0 0
      %4207 = vmatprep.subr.bf16.mxu0 0
      %4208 = vmatpush1.bf16.msra.mxu0 0
      %4209 = vmatprep.subr.bf16.mxu0 0
      %4210 = vmatpush1.bf16.msra.mxu0 0
      %4211 = vmatprep.subr.bf16.mxu0 0
      %4212 = vmatpush1.bf16.msra.mxu0 0
      %4213 = vmatprep.subr.bf16.mxu0 0
      %4214 = vmatpush1.bf16.msra.mxu0 0
      %4215 = vmatprep.subr.bf16.mxu0 0
      %4216 = vmatpush1.bf16.msra.mxu0 0
      %4217 = vmatprep.subr.bf16.mxu0 0
      %4218 = vmatpush1.bf16.msra.mxu0 0
      %4219 = vmatprep.mubr.bf16.mxu0 0
      %4220 = vmatmul.mubr.bf16.gmra.mrb[0].mxu0 %v4185
      %v4221 = vpop.f32.mrb[0].mxu0
      %v4222 = vadd.f32 0.0, %v4221
      %v4223 = vpop.f32.mrb[0].mxu0
      %v4224 = vadd.f32 0.0, %v4223
      %v4225 = vpop.f32.mrb[0].mxu0
      %v4226 = vpop.f32.mrb[0].mxu0
      %4227 = vdwg.mxu0
      %v4228 = vadd.f32 %v4168, %v4222
      %v4229 = vadd.f32 %v4169, %v4224
      %v4230 = vld [vmem:[#allocation2 + $0x4] sm:$0xff]
      %v4231 = vld [vmem:[#allocation2 + $0xc] sm:$0xf]
      %v4232 = vld [vmem:[#allocation2 + $0x14] sm:$0xff]
      %v4233 = vld [vmem:[#allocation2 + $0x1c] sm:$0xf]
      %v4234 = vsel %vm761, %v4230, 0
      %v4235 = vsel %vm762, %v4231, 0
      %v4236 = vsel %vm761, %v4232, 0
      %v4237 = vsel %vm762, %v4233, 0
      %s4238 = scalar_lea.vmem %s2, 492
      %v4239 = vld [vmem:[%s4238] sm:$0x3]
      %v4244 = vunpack.c.l.b16 %v4234
      %v4245 = vunpack.c.h.b16 %v4234
      %v4246 = vunpack.c.l.b16 %v4235
      %v4247 = vunpack.c.l.b16 %v4236
      %v4248 = vunpack.c.h.b16 %v4236
      %v4249 = vunpack.c.l.b16 %v4237
      %v4250 = vpack.c.b16 %v4247, %v4244
      %v4251 = vpack.c.b16 %v4248, %v4245
      %v4252 = vpack.c.b16 %v4249, %v4246
      %4253 = vrot.lane.b32.xlu0 %v4250, 127
      %v4254 = vpop.permute.xlu0 %4253
      %4255 = vrot.lane.b32.xlu0 %v4251, 127
      %v4256 = vpop.permute.xlu0 %4255
      %4257 = vrot.lane.b32.xlu0 %v4252, 127
      %v4258 = vpop.permute.xlu0 %4257
      %v4259 = vsel %vm598, %v4254, %v4256
      %v4260 = vsel %vm598, %v4256, %v4258
      %v4264 = vsel %vm1178, %v4239, 0
      %4266 = vmatprep.subr.bf16.mxu0 %v4260
      %4267 = vmatpush1.bf16.msra.mxu0 %v4259
      %4268 = vmatprep.subr.bf16.mxu0 0
      %4269 = vmatpush1.bf16.msra.mxu0 0
      %4270 = vmatprep.subr.bf16.mxu0 0
      %4271 = vmatpush1.bf16.msra.mxu0 0
      %4272 = vmatprep.subr.bf16.mxu0 0
      %4273 = vmatpush1.bf16.msra.mxu0 0
      %4274 = vmatprep.subr.bf16.mxu0 0
      %4275 = vmatpush1.bf16.msra.mxu0 0
      %4276 = vmatprep.subr.bf16.mxu0 0
      %4277 = vmatpush1.bf16.msra.mxu0 0
      %4278 = vmatprep.subr.bf16.mxu0 0
      %4279 = vmatpush1.bf16.msra.mxu0 0
      %4280 = vmatprep.subr.bf16.mxu0 0
      %4281 = vmatpush1.bf16.msra.mxu0 0
      %4282 = vmatprep.subr.bf16.mxu0 0
      %4283 = vmatpush1.bf16.msra.mxu0 0
      %4284 = vmatprep.subr.bf16.mxu0 0
      %4285 = vmatpush1.bf16.msra.mxu0 0
      %4286 = vmatprep.subr.bf16.mxu0 0
      %4287 = vmatpush1.bf16.msra.mxu0 0
      %4288 = vmatprep.subr.bf16.mxu0 0
      %4289 = vmatpush1.bf16.msra.mxu0 0
      %4290 = vmatprep.subr.bf16.mxu0 0
      %4291 = vmatpush1.bf16.msra.mxu0 0
      %4292 = vmatprep.subr.bf16.mxu0 0
      %4293 = vmatpush1.bf16.msra.mxu0 0
      %4294 = vmatprep.subr.bf16.mxu0 0
      %4295 = vmatpush1.bf16.msra.mxu0 0
      %4296 = vmatprep.subr.bf16.mxu0 0
      %4297 = vmatpush1.bf16.msra.mxu0 0
      %4298 = vmatprep.mubr.bf16.mxu0 0
      %4299 = vmatmul.mubr.bf16.gmra.mrb[0].mxu0 %v4264
      %v4300 = vpop.f32.mrb[0].mxu0
      %v4301 = vadd.f32 0.0, %v4300
      %v4302 = vpop.f32.mrb[0].mxu0
      %v4303 = vadd.f32 0.0, %v4302
      %v4304 = vpop.f32.mrb[0].mxu0
      %v4305 = vpop.f32.mrb[0].mxu0
      %4306 = vdwg.mxu0
      %v4307 = vadd.f32 %v4228, %v4301
      %v4308 = vadd.f32 %v4229, %v4303
      %v4309 = vsel %vm849, %v4230, 0
      %v4310 = vsel %vm850, %v4231, 0
      %v4311 = vsel %vm849, %v4232, 0
      %v4312 = vsel %vm850, %v4233, 0
      %s4313 = scalar_lea.vmem %s2, 504
      %v4314 = vld [vmem:[%s4313] sm:$0x3]
      %v4319 = vunpack.c.l.b16 %v4309
      %v4320 = vunpack.c.h.b16 %v4309
      %v4321 = vunpack.c.l.b16 %v4310
      %v4322 = vunpack.c.l.b16 %v4311
      %v4323 = vunpack.c.h.b16 %v4311
      %v4324 = vunpack.c.l.b16 %v4312
      %v4325 = vpack.c.b16 %v4322, %v4319
      %v4326 = vpack.c.b16 %v4323, %v4320
      %v4327 = vpack.c.b16 %v4324, %v4321
      %4328 = vrot.lane.b32.xlu0 %v4325, 113
      %v4329 = vpop.permute.xlu0 %4328
      %4330 = vrot.lane.b32.xlu0 %v4326, 113
      %v4331 = vpop.permute.xlu0 %4330
      %4332 = vrot.lane.b32.xlu0 %v4327, 113
      %v4333 = vpop.permute.xlu0 %4332
      %v4334 = vsel %vm508, %v4329, %v4331
      %v4335 = vsel %vm508, %v4331, %v4333
      %v4339 = vsel %vm1178, %v4314, 0
      %4341 = vmatprep.subr.bf16.mxu0 %v4335
      %4342 = vmatpush1.bf16.msra.mxu0 %v4334
      %4343 = vmatprep.subr.bf16.mxu0 0
      %4344 = vmatpush1.bf16.msra.mxu0 0
      %4345 = vmatprep.subr.bf16.mxu0 0
      %4346 = vmatpush1.bf16.msra.mxu0 0
      %4347 = vmatprep.subr.bf16.mxu0 0
      %4348 = vmatpush1.bf16.msra.mxu0 0
      %4349 = vmatprep.subr.bf16.mxu0 0
      %4350 = vmatpush1.bf16.msra.mxu0 0
      %4351 = vmatprep.subr.bf16.mxu0 0
      %4352 = vmatpush1.bf16.msra.mxu0 0
      %4353 = vmatprep.subr.bf16.mxu0 0
      %4354 = vmatpush1.bf16.msra.mxu0 0
      %4355 = vmatprep.subr.bf16.mxu0 0
      %4356 = vmatpush1.bf16.msra.mxu0 0
      %4357 = vmatprep.subr.bf16.mxu0 0
      %4358 = vmatpush1.bf16.msra.mxu0 0
      %4359 = vmatprep.subr.bf16.mxu0 0
      %4360 = vmatpush1.bf16.msra.mxu0 0
      %4361 = vmatprep.subr.bf16.mxu0 0
      %4362 = vmatpush1.bf16.msra.mxu0 0
      %4363 = vmatprep.subr.bf16.mxu0 0
      %4364 = vmatpush1.bf16.msra.mxu0 0
      %4365 = vmatprep.subr.bf16.mxu0 0
      %4366 = vmatpush1.bf16.msra.mxu0 0
      %4367 = vmatprep.subr.bf16.mxu0 0
      %4368 = vmatpush1.bf16.msra.mxu0 0
      %4369 = vmatprep.subr.bf16.mxu0 0
      %4370 = vmatpush1.bf16.msra.mxu0 0
      %4371 = vmatprep.subr.bf16.mxu0 0
      %4372 = vmatpush1.bf16.msra.mxu0 0
      %4373 = vmatprep.mubr.bf16.mxu0 0
      %4374 = vmatmul.mubr.bf16.gmra.mrb[0].mxu0 %v4339
      %v4375 = vpop.f32.mrb[0].mxu0
      %v4376 = vadd.f32 0.0, %v4375
      %v4377 = vpop.f32.mrb[0].mxu0
      %v4378 = vadd.f32 0.0, %v4377
      %v4379 = vpop.f32.mrb[0].mxu0
      %v4380 = vpop.f32.mrb[0].mxu0
      %4381 = vdwg.mxu0
      %v4382 = vadd.f32 %v4307, %v4376
      %v4383 = vadd.f32 %v4308, %v4378
      %s4384 = scalar_lea.vmem %s2, 516
      %v4385 = vld [vmem:[%s4384] sm:$0x3]
      %v4390 = vunpack.c.l.b16 %v4230
      %v4391 = vunpack.c.h.b16 %v4230
      %v4392 = vunpack.c.l.b16 %v4231
      %v4393 = vunpack.c.l.b16 %v4232
      %v4394 = vunpack.c.h.b16 %v4232
      %v4395 = vunpack.c.l.b16 %v4233
      %v4396 = vpack.c.b16 %v4393, %v4390
      %v4397 = vpack.c.b16 %v4394, %v4391
      %v4398 = vpack.c.b16 %v4395, %v4392
      %4399 = vrot.lane.b32.xlu0 %v4396, 112
      %v4400 = vpop.permute.xlu0 %4399
      %4401 = vrot.lane.b32.xlu0 %v4397, 112
      %v4402 = vpop.permute.xlu0 %4401
      %4403 = vrot.lane.b32.xlu0 %v4398, 112
      %v4404 = vpop.permute.xlu0 %4403
      %v4405 = vsel %vm955, %v4400, %v4402
      %v4406 = vsel %vm955, %v4402, %v4404
      %v4410 = vsel %vm1178, %v4385, 0
      %4412 = vmatprep.subr.bf16.mxu0 %v4406
      %4413 = vmatpush1.bf16.msra.mxu0 %v4405
      %4414 = vmatprep.subr.bf16.mxu0 0
      %4415 = vmatpush1.bf16.msra.mxu0 0
      %4416 = vmatprep.subr.bf16.mxu0 0
      %4417 = vmatpush1.bf16.msra.mxu0 0
      %4418 = vmatprep.subr.bf16.mxu0 0
      %4419 = vmatpush1.bf16.msra.mxu0 0
      %4420 = vmatprep.subr.bf16.mxu0 0
      %4421 = vmatpush1.bf16.msra.mxu0 0
      %4422 = vmatprep.subr.bf16.mxu0 0
      %4423 = vmatpush1.bf16.msra.mxu0 0
      %4424 = vmatprep.subr.bf16.mxu0 0
      %4425 = vmatpush1.bf16.msra.mxu0 0
      %4426 = vmatprep.subr.bf16.mxu0 0
      %4427 = vmatpush1.bf16.msra.mxu0 0
      %4428 = vmatprep.subr.bf16.mxu0 0
      %4429 = vmatpush1.bf16.msra.mxu0 0
      %4430 = vmatprep.subr.bf16.mxu0 0
      %4431 = vmatpush1.bf16.msra.mxu0 0
      %4432 = vmatprep.subr.bf16.mxu0 0
      %4433 = vmatpush1.bf16.msra.mxu0 0
      %4434 = vmatprep.subr.bf16.mxu0 0
      %4435 = vmatpush1.bf16.msra.mxu0 0
      %4436 = vmatprep.subr.bf16.mxu0 0
      %4437 = vmatpush1.bf16.msra.mxu0 0
      %4438 = vmatprep.subr.bf16.mxu0 0
      %4439 = vmatpush1.bf16.msra.mxu0 0
      %4440 = vmatprep.subr.bf16.mxu0 0
      %4441 = vmatpush1.bf16.msra.mxu0 0
      %4442 = vmatprep.subr.bf16.mxu0 0
      %4443 = vmatpush1.bf16.msra.mxu0 0
      %4444 = vmatprep.mubr.bf16.mxu0 0
      %4445 = vmatmul.mubr.bf16.gmra.mrb[0].mxu0 %v4410
      %v4446 = vpop.f32.mrb[0].mxu0
      %v4447 = vadd.f32 0.0, %v4446
      %v4448 = vpop.f32.mrb[0].mxu0
      %v4449 = vadd.f32 0.0, %v4448
      %v4450 = vpop.f32.mrb[0].mxu0
      %v4451 = vpop.f32.mrb[0].mxu0
      %4452 = vdwg.mxu0
      %v4453 = vadd.f32 %v4382, %v4447
      %v4454 = vadd.f32 %v4383, %v4449
      %v4455 = vsel %vm1018, %v4230, 0
      %v4456 = vsel %vm1019, %v4231, 0
      %v4457 = vsel %vm1018, %v4232, 0
      %v4458 = vsel %vm1019, %v4233, 0
      %s4459 = scalar_lea.vmem %s2, 528
      %v4460 = vld [vmem:[%s4459] sm:$0x3]
      %v4465 = vunpack.c.l.b16 %v4455
      %v4466 = vunpack.c.h.b16 %v4455
      %v4467 = vunpack.c.l.b16 %v4456
      %v4468 = vunpack.c.l.b16 %v4457
      %v4469 = vunpack.c.h.b16 %v4457
      %v4470 = vunpack.c.l.b16 %v4458
      %v4471 = vpack.c.b16 %v4468, %v4465
      %v4472 = vpack.c.b16 %v4469, %v4466
      %v4473 = vpack.c.b16 %v4470, %v4467
      %4474 = vrot.lane.b32.xlu0 %v4471, 111
      %v4475 = vpop.permute.xlu0 %4474
      %4476 = vrot.lane.b32.xlu0 %v4472, 111
      %v4477 = vpop.permute.xlu0 %4476
      %4478 = vrot.lane.b32.xlu0 %v4473, 111
      %v4479 = vpop.permute.xlu0 %4478
      %v4480 = vsel %vm335, %v4475, %v4477
      %v4481 = vsel %vm335, %v4477, %v4479
      %v4485 = vsel %vm1178, %v4460, 0
      %4487 = vmatprep.subr.bf16.mxu0 %v4481
      %4488 = vmatpush1.bf16.msra.mxu0 %v4480
      %4489 = vmatprep.subr.bf16.mxu0 0
      %4490 = vmatpush1.bf16.msra.mxu0 0
      %4491 = vmatprep.subr.bf16.mxu0 0
      %4492 = vmatpush1.bf16.msra.mxu0 0
      %4493 = vmatprep.subr.bf16.mxu0 0
      %4494 = vmatpush1.bf16.msra.mxu0 0
      %4495 = vmatprep.subr.bf16.mxu0 0
      %4496 = vmatpush1.bf16.msra.mxu0 0
      %4497 = vmatprep.subr.bf16.mxu0 0
      %4498 = vmatpush1.bf16.msra.mxu0 0
      %4499 = vmatprep.subr.bf16.mxu0 0
      %4500 = vmatpush1.bf16.msra.mxu0 0
      %4501 = vmatprep.subr.bf16.mxu0 0
      %4502 = vmatpush1.bf16.msra.mxu0 0
      %4503 = vmatprep.subr.bf16.mxu0 0
      %4504 = vmatpush1.bf16.msra.mxu0 0
      %4505 = vmatprep.subr.bf16.mxu0 0
      %4506 = vmatpush1.bf16.msra.mxu0 0
      %4507 = vmatprep.subr.bf16.mxu0 0
      %4508 = vmatpush1.bf16.msra.mxu0 0
      %4509 = vmatprep.subr.bf16.mxu0 0
      %4510 = vmatpush1.bf16.msra.mxu0 0
      %4511 = vmatprep.subr.bf16.mxu0 0
      %4512 = vmatpush1.bf16.msra.mxu0 0
      %4513 = vmatprep.subr.bf16.mxu0 0
      %4514 = vmatpush1.bf16.msra.mxu0 0
      %4515 = vmatprep.subr.bf16.mxu0 0
      %4516 = vmatpush1.bf16.msra.mxu0 0
      %4517 = vmatprep.subr.bf16.mxu0 0
      %4518 = vmatpush1.bf16.msra.mxu0 0
      %4519 = vmatprep.mubr.bf16.mxu0 0
      %4520 = vmatmul.mubr.bf16.gmra.mrb[0].mxu0 %v4485
      %v4521 = vpop.f32.mrb[0].mxu0
      %v4522 = vadd.f32 0.0, %v4521
      %v4523 = vpop.f32.mrb[0].mxu0
      %v4524 = vadd.f32 0.0, %v4523
      %v4525 = vpop.f32.mrb[0].mxu0
      %v4526 = vpop.f32.mrb[0].mxu0
      %4527 = vdwg.mxu0
      %v4528 = vadd.f32 %v4453, %v4522
      %v4529 = vadd.f32 %v4454, %v4524
      %v4530 = vld [vmem:[%s3] sm:$0x7]
      %4532 = vset.pattern.permute.xlu0 4
      %4533 = vperm.xlu0 %4532, %v4530
      %v4534 = vpop.permute.xlu0 %4533
      %v4536 = vadd.f32 %v4528, %v4534
      %v4537 = vadd.f32 %v4529, %v4534
      %v4540 = vcombine.low %v4536, %v4537
      %4542 = vst [vmem:[%s252] sm:$0x77] %v4540
      %p4543 = scmp.lt.s32.totalorder %s17, 1
      %s4544 = scalar_select %p4543, %s17, 1
      %s4545 = smul.addr %s4544, 2
      %s4546 = smul.addr %s4545, 4
      %s4547 = scalar_lea.vmem %s4, %s4546
      %p4548 = scmp.lt.s32.totalorder %s17, 1
      %s4549 = scalar_select %p4548, %s17, 1
      %s4550 = smul.addr %s4549, 2
      %s4551 = smul.addr %s4550, 8
      %s4552 = scalar_lea.vmem %s5, %s4551
      // Predicated region
      $region37: #{model_sr_forward.1} parent=35 // pred_check
        %p4553 = pneg %p129
      $region38: #{model_sr_forward.1} parent=35 // pred_check_branch
        %4555 = sbr.rel (%p4553) target = $region40
      $region39: #{model_sr_forward.1} parent=35 // pred_region
        _
      $region40: #{model_sr_forward.1} parent=35 // pred_fallthru
        _
      // Predicated region
      $region41: #{model_sr_forward.1} parent=35 // pred_check
        %p4556 = pneg %p155
      $region42: #{model_sr_forward.1} parent=35 // pred_check_branch
        %4558 = sbr.rel (%p4556) target = $region44
      $region43: #{model_sr_forward.1} parent=35 // pred_region
        _
      $region44: #{model_sr_forward.1} parent=35 // pred_fallthru
        _
    $region36: #{model_sr_forward.1} parent=5 // pred_fallthru
      _
    %p4559 = scmp.le.s32.totalorder 2, %s12
    // Predicated region
    $region45: #{model_sr_forward.1} parent=5 // pred_check
      %p4560 = pneg %p4559
    $region46: #{model_sr_forward.1} parent=5 // pred_check_branch
      %4562 = sbr.rel (%p4560) target = $region48
    $region47: #{model_sr_forward.1} parent=5 // pred_region
      %s4563 = ssub.s32 %s12, 2
      // Predicated region
      $region49: #{model_sr_forward.1} parent=47 // pred_check
        %p4564 = pneg %p135
      $region50: #{model_sr_forward.1} parent=47 // pred_check_branch
        %4566 = sbr.rel (%p4564) target = $region52
      $region51: #{model_sr_forward.1} parent=47 // pred_region
        %p4567 = scmp.lt.s32.totalorder %s18, 1
        %s4568 = scalar_select %p4567, %s18, 1
        %s4569 = smul.addr %s4568, 2
        %s4570 = smul.addr %s4569, 4
        %s4571 = scalar_lea.vmem %s4, %s4570
      $region52: #{model_sr_forward.1} parent=47 // pred_fallthru
        _
      // Predicated region
      $region53: #{model_sr_forward.1} parent=47 // pred_check
        %p4572 = pneg %p161
      $region54: #{model_sr_forward.1} parent=47 // pred_check_branch
        %4574 = sbr.rel (%p4572) target = $region56
      $region55: #{model_sr_forward.1} parent=47 // pred_region
        %p4575 = scmp.lt.s32.totalorder %s18, 1
        %s4576 = scalar_select %p4575, %s18, 1
        %s4577 = smul.addr %s4576, 2
        %s4578 = smul.addr %s4577, 8
        %s4579 = scalar_lea.vmem %s5, %s4578
      $region56: #{model_sr_forward.1} parent=47 // pred_fallthru
        _
    $region48: #{model_sr_forward.1} parent=5 // pred_fallthru
      _
  $region6: #{model_sr_forward.1} parent=0 // loop_footer
    %s16 = sadd.s32 1, %s12
  $region7: #{model_sr_forward.1} parent=0 // loop_footer_branch
    %11 = sbr.rel target = $region3
  $region8: #{model_sr_forward.1} parent=0 // loop_exit
    _

</llo_original>
